<compile_context>
chip_gen: v7x
topology: tpu7x:2x2x1
jax: 0.10.0
libtpu: 0.0.40
codegen_flags: <defaults>
</compile_context>

<pallas_src>
import functools

import jax
import jax.numpy as jnp
from jax import lax
from jax.experimental import pallas as pl
from jax.experimental.pallas import tpu as pltpu


# ----------------------------------------------------------------------------
# Fused kernel: one grid step = one chunk of t_chunk timesteps.
#   x_ref   : (t_chunk*Bp, E)  time-major flattened embeddings (matmul dtype)
#   wih_ref : (E, 4H)          input->gates weights (transposed PyTorch W_ih)
#   whh_ref : (H, 4H)          hidden->gates weights (transposed PyTorch W_hh)
#   bias_ref: (1, 4H)          b_ih + b_hh, f32
#   out_ref : (Bp, H)          final hidden state (written on the last chunk)
#   h_scr, c_scr : (Bp, H) f32 VMEM scratch carried across chunks
#   pg_scr  : (t_chunk*Bp, 4H) f32 VMEM scratch for this chunk's pre-gates
# ----------------------------------------------------------------------------
def _lstm_fused_kernel(x_ref, wih_ref, whh_ref, bias_ref, out_ref,
                       h_scr, c_scr, pg_scr):
    chunk = pl.program_id(0)

    @pl.when(chunk == 0)
    def _init():
        h_scr[...] = jnp.zeros_like(h_scr)
        c_scr[...] = jnp.zeros_like(c_scr)

    Bp, H = h_scr.shape
    rows = x_ref.shape[0]
    t_chunk = rows // Bp

    # Invariant weight loads hoisted out of the timestep loop.
    wih = wih_ref[...]                        # (E, 4H)
    whh = whh_ref[...]                        # (H, 4H)
    mm_dtype = whh.dtype

    # Hoisted, chunk-wide input projection: one healthy-M MXU matmul instead
    # of one tiny matmul per timestep.  Result is parked in VMEM scratch so
    # it never round-trips to HBM and does not bloat vreg live ranges.
    pg_scr[...] = (
        jnp.dot(x_ref[...], wih, preferred_element_type=jnp.float32)
        + bias_ref[...]
    )

    h = h_scr[...]                            # (Bp, H) f32
    c = c_scr[...]
    # Static unroll: every slice offset below is a compile-time constant and
    # Bp is a multiple of 8, so all sublane slices are aligned loads.  The
    # LLO scheduler can overlap step t's EUP/VPU gate math with step t+1's
    # MXU push.
    for t in range(t_chunk):
        gx = pg_scr[t * Bp:(t + 1) * Bp, :]                       # (Bp, 4H)
        gates = gx + jnp.dot(h.astype(mm_dtype), whh,
                             preferred_element_type=jnp.float32)   # (Bp, 4H)
        # H is a multiple of 128 here, so these lane slices are free.
        i = jax.nn.sigmoid(gates[:, 0 * H:1 * H])
        f = jax.nn.sigmoid(gates[:, 1 * H:2 * H])
        g = jnp.tanh(gates[:, 2 * H:3 * H])
        o = jax.nn.sigmoid(gates[:, 3 * H:4 * H])
        c = f * c + i * g                      # f32 elementwise (v5e-friendly)
        h = o * jnp.tanh(c)

    h_scr[...] = h
    c_scr[...] = c

    @pl.when(chunk == pl.num_programs(0) - 1)
    def _finalize():
        out_ref[...] = h.astype(out_ref.dtype)


def _largest_divisor_at_most(n, cap):
    for c in range(min(n, cap), 0, -1):
        if n % c == 0:
            return c
    return 1


@functools.partial(jax.jit, static_argnames=("matmul_dtype", "t_chunk_cap"))
def text_encoder_forward(text, emb_weight, w_ih, w_hh, b_ih, b_hh,
                         *, matmul_dtype=jnp.bfloat16, t_chunk_cap=16):
    """text: (B, T) int token ids.  Returns (B, H) final LSTM hidden state."""
    B, T = text.shape
    E = emb_weight.shape[1]
    H = w_hh.shape[1]
    G = 4 * H

    if T == 0:  # degenerate edge case: PyTorch would error; return zero state.
        return jnp.zeros((B, H), jnp.float32)

    # Pad batch to a multiple of 8 so every per-timestep row group is
    # sublane-aligned.  Padded rows are independent (LSTM is per-row) and are
    # sliced off at the end.
    Bp = ((B + 7) // 8) * 8
    ids = text.astype(jnp.int32)
    if Bp != B:
        ids = jnp.pad(ids, ((0, Bp - B), (0, 0)))

    # Embedding gather directly in TIME-MAJOR flattened order (row = t*Bp + b):
    # one HBM pass, no (B, T, E) intermediate and no activation transpose.
    # TODO(synk): the gather itself stays in XLA (data-dependent HBM gather has
    # no clean rectangular BlockSpec equivalent).
    ids_tm = ids.T.reshape(-1)                                      # (T*Bp,)
    x_flat = jnp.take(emb_weight.astype(matmul_dtype), ids_tm, axis=0)  # (T*Bp, E)

    wih_t = w_ih.T.astype(matmul_dtype)                             # (E, 4H)
    whh_t = w_hh.T.astype(matmul_dtype)                             # (H, 4H)
    bias = (b_ih + b_hh).astype(jnp.float32).reshape(1, G)          # (1, 4H)

    t_chunk = _largest_divisor_at_most(T, t_chunk_cap)
    num_chunks = T // t_chunk
    rows = t_chunk * Bp                                             # mult. of 8

    out_pad = pl.pallas_call(
        _lstm_fused_kernel,
        out_shape=jax.ShapeDtypeStruct((Bp, H), jnp.float32),
        grid_spec=pltpu.PrefetchScalarGridSpec(
            num_scalar_prefetch=0,
            grid=(num_chunks,),
            in_specs=[
                pl.BlockSpec((rows, E), lambda c: (c, 0)),   # embeddings chunk
                pl.BlockSpec((E, G), lambda c: (0, 0)),      # W_ih^T (resident)
                pl.BlockSpec((H, G), lambda c: (0, 0)),      # W_hh^T (resident)
                pl.BlockSpec((1, G), lambda c: (0, 0)),      # bias   (resident)
            ],
            out_specs=pl.BlockSpec((Bp, H), lambda c: (0, 0)),
            scratch_shapes=[
                pltpu.VMEM((Bp, H), jnp.float32),        # h carry
                pltpu.VMEM((Bp, H), jnp.float32),        # c carry
                pltpu.VMEM((rows, G), jnp.float32),      # chunk pre-gates
            ],
        ),
        # The chunk axis is a true serial recurrence.  (If B were large, a
        # leading batch-tile axis marked "parallel" would let v7x's second
        # TensorCore run an independent batch slice.)
        compiler_params=pltpu.CompilerParams(
            dimension_semantics=("arbitrary",),
        ),
    )(x_flat, wih_t, whh_t, bias)
    return out_pad[:B]


# ----------------------------------------------------------------------------
# Pure-JAX reference reproducing nn.Embedding + nn.LSTM(batch_first).
# `matmul_dtype` lets us match the kernel's bf16-operand / f32-accumulate path.
# ----------------------------------------------------------------------------
def _reference_forward(text, emb_weight, w_ih, w_hh, b_ih, b_hh,
                       matmul_dtype=jnp.float32):
    B = text.shape[0]
    H = w_hh.shape[1]
    emb = emb_weight.astype(matmul_dtype)
    embedded = jnp.take(emb, text, axis=0)                 # (B, T, E)
    x_tm = jnp.transpose(embedded, (1, 0, 2))              # (T, B, E)
    wih_t = w_ih.T.astype(matmul_dtype)
    whh_t = w_hh.T.astype(matmul_dtype)
    bias = (b_ih + b_hh).astype(jnp.float32)

    def step(carry, x_t):
        h, c = carry
        gates = (jnp.dot(x_t, wih_t, preferred_element_type=jnp.float32)
                 + jnp.dot(h.astype(matmul_dtype), whh_t,
                           preferred_element_type=jnp.float32)
                 + bias)
        i = jax.nn.sigmoid(gates[:, 0 * H:1 * H])
        f = jax.nn.sigmoid(gates[:, 1 * H:2 * H])
        g = jnp.tanh(gates[:, 2 * H:3 * H])
        o = jax.nn.sigmoid(gates[:, 3 * H:4 * H])
        c_new = f * c + i * g
        h_new = o * jnp.tanh(c_new)
        return (h_new, c_new), None

    init = (jnp.zeros((B, H), jnp.float32), jnp.zeros((B, H), jnp.float32))
    (h_final, _), _ = lax.scan(step, init, x_tm)
    return h_final


if __name__ == "__main__":
    # Small shapes consistent with the module (E=100, H=256; vocab scaled down).
    vocab_size = 1000
    embedding_dim = 100
    hidden_dim = 256
    batch = 2
    seq_len = 8

    key = jax.random.PRNGKey(0)
    k_emb, k_wih, k_whh, k_bih, k_bhh, k_txt = jax.random.split(key, 6)

    emb_weight = jax.random.normal(k_emb, (vocab_size, embedding_dim),
                                   jnp.float32)
    bound = 1.0 / jnp.sqrt(hidden_dim)
    w_ih = jax.random.uniform(k_wih, (4 * hidden_dim, embedding_dim),
                              jnp.float32, -bound, bound)
    w_hh = jax.random.uniform(k_whh, (4 * hidden_dim, hidden_dim),
                              jnp.float32, -bound, bound)
    b_ih = jax.random.uniform(k_bih, (4 * hidden_dim,), jnp.float32,
                              -bound, bound)
    b_hh = jax.random.uniform(k_bhh, (4 * hidden_dim,), jnp.float32,
                              -bound, bound)
    text = jax.random.randint(k_txt, (batch, seq_len), 0, vocab_size,
                              jnp.int32)

    # Default (bf16 matmul operands, f32 accumulation / state).
    out_bf16 = text_encoder_forward(text, emb_weight, w_ih, w_hh, b_ih, b_hh)
    out_bf16 = jax.block_until_ready(out_bf16)
    assert out_bf16.shape == (batch, hidden_dim)

    ref_f32 = _reference_forward(text, emb_weight, w_ih, w_hh, b_ih, b_hh,
                                 matmul_dtype=jnp.float32)
    ref_bf16 = _reference_forward(text, emb_weight, w_ih, w_hh, b_ih, b_hh,
                                  matmul_dtype=jnp.bfloat16)
    # Implementation check against a precision-matched reference ...
    assert jnp.allclose(out_bf16, ref_bf16, atol=2e-3, rtol=2e-3), \
        "mismatch vs bf16-matched reference"
    # ... and semantic sanity against the full-f32 reference.
    assert jnp.allclose(out_bf16, ref_f32, atol=5e-2, rtol=5e-2), \
        "mismatch vs f32 reference (bf16 mode)"

    # Full-f32 mode should track the f32 reference tightly.
    out_f32 = text_encoder_forward(text, emb_weight, w_ih, w_hh, b_ih, b_hh,
                                   matmul_dtype=jnp.float32)
    out_f32 = jax.block_until_ready(out_f32)
    assert jnp.allclose(out_f32, ref_f32, atol=1e-3, rtol=1e-3), \
        "mismatch vs f32 reference (f32 mode)"

    print("KERNEL_OK")
</pallas_src>

<mosaic_0001>
module attributes {stable_mosaic.version = 11 : i64} {
  func.func @_lstm_fused_kernel(%arg0: i32, %arg1: memref<64x100xbf16, #tpu.memory_space<vmem>>, %arg2: memref<100x1024xbf16, #tpu.memory_space<vmem>>, %arg3: memref<256x1024xbf16, #tpu.memory_space<vmem>>, %arg4: memref<1x1024xf32, #tpu.memory_space<vmem>>, %arg5: memref<8x256xf32, #tpu.memory_space<vmem>>, %arg6: memref<8x256xf32, #tpu.memory_space<vmem>>, %arg7: memref<8x256xf32, #tpu.memory_space<vmem>>, %arg8: memref<64x1024xf32, #tpu.memory_space<vmem>>) attributes {dimension_semantics = [#tpu.dimension_semantics<arbitrary>], iteration_bounds = array<i64: 1>, scalar_prefetch = 0 : i64, scratch_operands = 3 : i64, tpu.core_type = #tpu.core_type<tc>, window_params = [{transform_indices = @transform_0, window_bounds = array<i64: 64, 100>}, {pipeline_mode = #tpu.pipeline_mode<synchronous>, transform_indices = @transform_1, window_bounds = array<i64: 100, 1024>}, {pipeline_mode = #tpu.pipeline_mode<synchronous>, transform_indices = @transform_2, window_bounds = array<i64: 256, 1024>}, {pipeline_mode = #tpu.pipeline_mode<synchronous>, transform_indices = @transform_3, window_bounds = array<i64: 1, 1024>}, {pipeline_mode = #tpu.pipeline_mode<synchronous>, transform_indices = @transform_4, window_bounds = array<i64: 8, 256>}]} {
    %c0_i32 = arith.constant 0 : i32
    %0 = arith.cmpi eq, %arg0, %c0_i32 : i32
    %1 = arith.extui %0 : i1 to i32
    %c0_i32_0 = arith.constant 0 : i32
    %2 = arith.cmpi ne, %1, %c0_i32_0 : i32
    scf.if %2 {
      %cst_61 = arith.constant 0.000000e+00 : f32
      %250 = vector.broadcast %cst_61 : f32 to vector<8x256xf32>
      %c0_62 = arith.constant 0 : index
      %c0_63 = arith.constant 0 : index
      %251 = vector.load %arg6[%c0_62, %c0_63] : memref<8x256xf32, #tpu.memory_space<vmem>>, vector<8x256xf32>
      tpu.vector_store %arg6[%c0_62, %c0_63], %250 {strides = array<i32>} : memref<8x256xf32, #tpu.memory_space<vmem>>, vector<8x256xf32>,
      %cst_64 = arith.constant 0.000000e+00 : f32
      %252 = vector.broadcast %cst_64 : f32 to vector<8x256xf32>
      %c0_65 = arith.constant 0 : index
      %c0_66 = arith.constant 0 : index
      %253 = vector.load %arg7[%c0_65, %c0_66] : memref<8x256xf32, #tpu.memory_space<vmem>>, vector<8x256xf32>
      tpu.vector_store %arg7[%c0_65, %c0_66], %252 {strides = array<i32>} : memref<8x256xf32, #tpu.memory_space<vmem>>, vector<8x256xf32>,
    } else {
    }
    %c0 = arith.constant 0 : index
    %c0_1 = arith.constant 0 : index
    %3 = vector.load %arg2[%c0, %c0_1] : memref<100x1024xbf16, #tpu.memory_space<vmem>>, vector<100x1024xbf16>
    %c0_2 = arith.constant 0 : index
    %c0_3 = arith.constant 0 : index
    %4 = vector.load %arg3[%c0_2, %c0_3] : memref<256x1024xbf16, #tpu.memory_space<vmem>>, vector<256x1024xbf16>
    %c0_4 = arith.constant 0 : index
    %c0_5 = arith.constant 0 : index
    %5 = vector.load %arg1[%c0_4, %c0_5] : memref<64x100xbf16, #tpu.memory_space<vmem>>, vector<64x100xbf16>
    %cst = arith.constant dense<0.000000e+00> : vector<64x1024xf32>
    %6 = tpu.matmul %5, %3, %cst {dimension_numbers = #tpu.dot_dimension_numbers<[1], [0], [0], [1], [0, 0, 1, 1], [], []>} : vector<64x100xbf16>, vector<100x1024xbf16>, vector<64x1024xf32> -> vector<64x1024xf32>
    %c0_6 = arith.constant 0 : index
    %c0_7 = arith.constant 0 : index
    %7 = vector.load %arg4[%c0_6, %c0_7] : memref<1x1024xf32, #tpu.memory_space<vmem>>, vector<1x1024xf32>
    %8 = vector.broadcast %7 : vector<1x1024xf32> to vector<64x1024xf32>
    %9 = arith.addf %6, %8 : vector<64x1024xf32>
    %c0_8 = arith.constant 0 : index
    %c0_9 = arith.constant 0 : index
    %10 = vector.load %arg8[%c0_8, %c0_9] : memref<64x1024xf32, #tpu.memory_space<vmem>>, vector<64x1024xf32>
    tpu.vector_store %arg8[%c0_8, %c0_9], %9 {strides = array<i32>} : memref<64x1024xf32, #tpu.memory_space<vmem>>, vector<64x1024xf32>,
    %c0_10 = arith.constant 0 : index
    %c0_11 = arith.constant 0 : index
    %11 = vector.load %arg6[%c0_10, %c0_11] : memref<8x256xf32, #tpu.memory_space<vmem>>, vector<8x256xf32>
    %c0_12 = arith.constant 0 : index
    %c0_13 = arith.constant 0 : index
    %12 = vector.load %arg7[%c0_12, %c0_13] : memref<8x256xf32, #tpu.memory_space<vmem>>, vector<8x256xf32>
    %c0_14 = arith.constant 0 : index
    %c0_15 = arith.constant 0 : index
    %13 = vector.load %arg8[%c0_14, %c0_15] : memref<64x1024xf32, #tpu.memory_space<vmem>>, vector<8x1024xf32>
    %14 = arith.truncf %11 : vector<8x256xf32> to vector<8x256xbf16>
    %cst_16 = arith.constant dense<0.000000e+00> : vector<8x1024xf32>
    %15 = tpu.matmul %14, %4, %cst_16 {dimension_numbers = #tpu.dot_dimension_numbers<[1], [0], [0], [1], [0, 0, 1, 1], [], []>} : vector<8x256xbf16>, vector<256x1024xbf16>, vector<8x1024xf32> -> vector<8x1024xf32>
    %16 = arith.addf %13, %15 : vector<8x1024xf32>
    %17 = vector.extract_strided_slice %16 {offsets = [0, 0], sizes = [8, 256], strides = [1, 1]} : vector<8x1024xf32> to vector<8x256xf32>
    %18 = arith.negf %17 : vector<8x256xf32>
    %19 = math.exp %18 : vector<8x256xf32>
    %cst_17 = arith.constant 1.000000e+00 : f32
    %20 = vector.broadcast %cst_17 : f32 to vector<8x256xf32>
    %21 = arith.addf %20, %19 : vector<8x256xf32>
    %22 = arith.divf %20, %21 : vector<8x256xf32>
    %23 = vector.extract_strided_slice %16 {offsets = [0, 256], sizes = [8, 256], strides = [1, 1]} : vector<8x1024xf32> to vector<8x256xf32>
    %24 = arith.negf %23 : vector<8x256xf32>
    %25 = math.exp %24 : vector<8x256xf32>
    %cst_18 = arith.constant 1.000000e+00 : f32
    %26 = vector.broadcast %cst_18 : f32 to vector<8x256xf32>
    %27 = arith.addf %26, %25 : vector<8x256xf32>
    %28 = arith.divf %26, %27 : vector<8x256xf32>
    %29 = vector.extract_strided_slice %16 {offsets = [0, 512], sizes = [8, 256], strides = [1, 1]} : vector<8x1024xf32> to vector<8x256xf32>
    %30 = math.tanh %29 : vector<8x256xf32>
    %31 = vector.extract_strided_slice %16 {offsets = [0, 768], sizes = [8, 256], strides = [1, 1]} : vector<8x1024xf32> to vector<8x256xf32>
    %32 = arith.negf %31 : vector<8x256xf32>
    %33 = math.exp %32 : vector<8x256xf32>
    %cst_19 = arith.constant 1.000000e+00 : f32
    %34 = vector.broadcast %cst_19 : f32 to vector<8x256xf32>
    %35 = arith.addf %34, %33 : vector<8x256xf32>
    %36 = arith.divf %34, %35 : vector<8x256xf32>
    %37 = arith.mulf %28, %12 : vector<8x256xf32>
    %38 = arith.mulf %22, %30 : vector<8x256xf32>
    %39 = arith.addf %37, %38 : vector<8x256xf32>
    %40 = math.tanh %39 : vector<8x256xf32>
    %41 = arith.mulf %36, %40 : vector<8x256xf32>
    %c8 = arith.constant 8 : index
    %c0_20 = arith.constant 0 : index
    %42 = vector.load %arg8[%c8, %c0_20] : memref<64x1024xf32, #tpu.memory_space<vmem>>, vector<8x1024xf32>
    %43 = arith.truncf %41 : vector<8x256xf32> to vector<8x256xbf16>
    %cst_21 = arith.constant dense<0.000000e+00> : vector<8x1024xf32>
    %44 = tpu.matmul %43, %4, %cst_21 {dimension_numbers = #tpu.dot_dimension_numbers<[1], [0], [0], [1], [0, 0, 1, 1], [], []>} : vector<8x256xbf16>, vector<256x1024xbf16>, vector<8x1024xf32> -> vector<8x1024xf32>
    %45 = arith.addf %42, %44 : vector<8x1024xf32>
    %46 = vector.extract_strided_slice %45 {offsets = [0, 0], sizes = [8, 256], strides = [1, 1]} : vector<8x1024xf32> to vector<8x256xf32>
    %47 = arith.negf %46 : vector<8x256xf32>
    %48 = math.exp %47 : vector<8x256xf32>
    %cst_22 = arith.constant 1.000000e+00 : f32
    %49 = vector.broadcast %cst_22 : f32 to vector<8x256xf32>
    %50 = arith.addf %49, %48 : vector<8x256xf32>
    %51 = arith.divf %49, %50 : vector<8x256xf32>
    %52 = vector.extract_strided_slice %45 {offsets = [0, 256], sizes = [8, 256], strides = [1, 1]} : vector<8x1024xf32> to vector<8x256xf32>
    %53 = arith.negf %52 : vector<8x256xf32>
    %54 = math.exp %53 : vector<8x256xf32>
    %cst_23 = arith.constant 1.000000e+00 : f32
    %55 = vector.broadcast %cst_23 : f32 to vector<8x256xf32>
    %56 = arith.addf %55, %54 : vector<8x256xf32>
    %57 = arith.divf %55, %56 : vector<8x256xf32>
    %58 = vector.extract_strided_slice %45 {offsets = [0, 512], sizes = [8, 256], strides = [1, 1]} : vector<8x1024xf32> to vector<8x256xf32>
    %59 = math.tanh %58 : vector<8x256xf32>
    %60 = vector.extract_strided_slice %45 {offsets = [0, 768], sizes = [8, 256], strides = [1, 1]} : vector<8x1024xf32> to vector<8x256xf32>
    %61 = arith.negf %60 : vector<8x256xf32>
    %62 = math.exp %61 : vector<8x256xf32>
    %cst_24 = arith.constant 1.000000e+00 : f32
    %63 = vector.broadcast %cst_24 : f32 to vector<8x256xf32>
    %64 = arith.addf %63, %62 : vector<8x256xf32>
    %65 = arith.divf %63, %64 : vector<8x256xf32>
    %66 = arith.mulf %57, %39 : vector<8x256xf32>
    %67 = arith.mulf %51, %59 : vector<8x256xf32>
    %68 = arith.addf %66, %67 : vector<8x256xf32>
    %69 = math.tanh %68 : vector<8x256xf32>
    %70 = arith.mulf %65, %69 : vector<8x256xf32>
    %c16 = arith.constant 16 : index
    %c0_25 = arith.constant 0 : index
    %71 = vector.load %arg8[%c16, %c0_25] : memref<64x1024xf32, #tpu.memory_space<vmem>>, vector<8x1024xf32>
    %72 = arith.truncf %70 : vector<8x256xf32> to vector<8x256xbf16>
    %cst_26 = arith.constant dense<0.000000e+00> : vector<8x1024xf32>
    %73 = tpu.matmul %72, %4, %cst_26 {dimension_numbers = #tpu.dot_dimension_numbers<[1], [0], [0], [1], [0, 0, 1, 1], [], []>} : vector<8x256xbf16>, vector<256x1024xbf16>, vector<8x1024xf32> -> vector<8x1024xf32>
    %74 = arith.addf %71, %73 : vector<8x1024xf32>
    %75 = vector.extract_strided_slice %74 {offsets = [0, 0], sizes = [8, 256], strides = [1, 1]} : vector<8x1024xf32> to vector<8x256xf32>
    %76 = arith.negf %75 : vector<8x256xf32>
    %77 = math.exp %76 : vector<8x256xf32>
    %cst_27 = arith.constant 1.000000e+00 : f32
    %78 = vector.broadcast %cst_27 : f32 to vector<8x256xf32>
    %79 = arith.addf %78, %77 : vector<8x256xf32>
    %80 = arith.divf %78, %79 : vector<8x256xf32>
    %81 = vector.extract_strided_slice %74 {offsets = [0, 256], sizes = [8, 256], strides = [1, 1]} : vector<8x1024xf32> to vector<8x256xf32>
    %82 = arith.negf %81 : vector<8x256xf32>
    %83 = math.exp %82 : vector<8x256xf32>
    %cst_28 = arith.constant 1.000000e+00 : f32
    %84 = vector.broadcast %cst_28 : f32 to vector<8x256xf32>
    %85 = arith.addf %84, %83 : vector<8x256xf32>
    %86 = arith.divf %84, %85 : vector<8x256xf32>
    %87 = vector.extract_strided_slice %74 {offsets = [0, 512], sizes = [8, 256], strides = [1, 1]} : vector<8x1024xf32> to vector<8x256xf32>
    %88 = math.tanh %87 : vector<8x256xf32>
    %89 = vector.extract_strided_slice %74 {offsets = [0, 768], sizes = [8, 256], strides = [1, 1]} : vector<8x1024xf32> to vector<8x256xf32>
    %90 = arith.negf %89 : vector<8x256xf32>
    %91 = math.exp %90 : vector<8x256xf32>
    %cst_29 = arith.constant 1.000000e+00 : f32
    %92 = vector.broadcast %cst_29 : f32 to vector<8x256xf32>
    %93 = arith.addf %92, %91 : vector<8x256xf32>
    %94 = arith.divf %92, %93 : vector<8x256xf32>
    %95 = arith.mulf %86, %68 : vector<8x256xf32>
    %96 = arith.mulf %80, %88 : vector<8x256xf32>
    %97 = arith.addf %95, %96 : vector<8x256xf32>
    %98 = math.tanh %97 : vector<8x256xf32>
    %99 = arith.mulf %94, %98 : vector<8x256xf32>
    %c24 = arith.constant 24 : index
    %c0_30 = arith.constant 0 : index
    %100 = vector.load %arg8[%c24, %c0_30] : memref<64x1024xf32, #tpu.memory_space<vmem>>, vector<8x1024xf32>
    %101 = arith.truncf %99 : vector<8x256xf32> to vector<8x256xbf16>
    %cst_31 = arith.constant dense<0.000000e+00> : vector<8x1024xf32>
    %102 = tpu.matmul %101, %4, %cst_31 {dimension_numbers = #tpu.dot_dimension_numbers<[1], [0], [0], [1], [0, 0, 1, 1], [], []>} : vector<8x256xbf16>, vector<256x1024xbf16>, vector<8x1024xf32> -> vector<8x1024xf32>
    %103 = arith.addf %100, %102 : vector<8x1024xf32>
    %104 = vector.extract_strided_slice %103 {offsets = [0, 0], sizes = [8, 256], strides = [1, 1]} : vector<8x1024xf32> to vector<8x256xf32>
    %105 = arith.negf %104 : vector<8x256xf32>
    %106 = math.exp %105 : vector<8x256xf32>
    %cst_32 = arith.constant 1.000000e+00 : f32
    %107 = vector.broadcast %cst_32 : f32 to vector<8x256xf32>
    %108 = arith.addf %107, %106 : vector<8x256xf32>
    %109 = arith.divf %107, %108 : vector<8x256xf32>
    %110 = vector.extract_strided_slice %103 {offsets = [0, 256], sizes = [8, 256], strides = [1, 1]} : vector<8x1024xf32> to vector<8x256xf32>
    %111 = arith.negf %110 : vector<8x256xf32>
    %112 = math.exp %111 : vector<8x256xf32>
    %cst_33 = arith.constant 1.000000e+00 : f32
    %113 = vector.broadcast %cst_33 : f32 to vector<8x256xf32>
    %114 = arith.addf %113, %112 : vector<8x256xf32>
    %115 = arith.divf %113, %114 : vector<8x256xf32>
    %116 = vector.extract_strided_slice %103 {offsets = [0, 512], sizes = [8, 256], strides = [1, 1]} : vector<8x1024xf32> to vector<8x256xf32>
    %117 = math.tanh %116 : vector<8x256xf32>
    %118 = vector.extract_strided_slice %103 {offsets = [0, 768], sizes = [8, 256], strides = [1, 1]} : vector<8x1024xf32> to vector<8x256xf32>
    %119 = arith.negf %118 : vector<8x256xf32>
    %120 = math.exp %119 : vector<8x256xf32>
    %cst_34 = arith.constant 1.000000e+00 : f32
    %121 = vector.broadcast %cst_34 : f32 to vector<8x256xf32>
    %122 = arith.addf %121, %120 : vector<8x256xf32>
    %123 = arith.divf %121, %122 : vector<8x256xf32>
    %124 = arith.mulf %115, %97 : vector<8x256xf32>
    %125 = arith.mulf %109, %117 : vector<8x256xf32>
    %126 = arith.addf %124, %125 : vector<8x256xf32>
    %127 = math.tanh %126 : vector<8x256xf32>
    %128 = arith.mulf %123, %127 : vector<8x256xf32>
    %c32 = arith.constant 32 : index
    %c0_35 = arith.constant 0 : index
    %129 = vector.load %arg8[%c32, %c0_35] : memref<64x1024xf32, #tpu.memory_space<vmem>>, vector<8x1024xf32>
    %130 = arith.truncf %128 : vector<8x256xf32> to vector<8x256xbf16>
    %cst_36 = arith.constant dense<0.000000e+00> : vector<8x1024xf32>
    %131 = tpu.matmul %130, %4, %cst_36 {dimension_numbers = #tpu.dot_dimension_numbers<[1], [0], [0], [1], [0, 0, 1, 1], [], []>} : vector<8x256xbf16>, vector<256x1024xbf16>, vector<8x1024xf32> -> vector<8x1024xf32>
    %132 = arith.addf %129, %131 : vector<8x1024xf32>
    %133 = vector.extract_strided_slice %132 {offsets = [0, 0], sizes = [8, 256], strides = [1, 1]} : vector<8x1024xf32> to vector<8x256xf32>
    %134 = arith.negf %133 : vector<8x256xf32>
    %135 = math.exp %134 : vector<8x256xf32>
    %cst_37 = arith.constant 1.000000e+00 : f32
    %136 = vector.broadcast %cst_37 : f32 to vector<8x256xf32>
    %137 = arith.addf %136, %135 : vector<8x256xf32>
    %138 = arith.divf %136, %137 : vector<8x256xf32>
    %139 = vector.extract_strided_slice %132 {offsets = [0, 256], sizes = [8, 256], strides = [1, 1]} : vector<8x1024xf32> to vector<8x256xf32>
    %140 = arith.negf %139 : vector<8x256xf32>
    %141 = math.exp %140 : vector<8x256xf32>
    %cst_38 = arith.constant 1.000000e+00 : f32
    %142 = vector.broadcast %cst_38 : f32 to vector<8x256xf32>
    %143 = arith.addf %142, %141 : vector<8x256xf32>
    %144 = arith.divf %142, %143 : vector<8x256xf32>
    %145 = vector.extract_strided_slice %132 {offsets = [0, 512], sizes = [8, 256], strides = [1, 1]} : vector<8x1024xf32> to vector<8x256xf32>
    %146 = math.tanh %145 : vector<8x256xf32>
    %147 = vector.extract_strided_slice %132 {offsets = [0, 768], sizes = [8, 256], strides = [1, 1]} : vector<8x1024xf32> to vector<8x256xf32>
    %148 = arith.negf %147 : vector<8x256xf32>
    %149 = math.exp %148 : vector<8x256xf32>
    %cst_39 = arith.constant 1.000000e+00 : f32
    %150 = vector.broadcast %cst_39 : f32 to vector<8x256xf32>
    %151 = arith.addf %150, %149 : vector<8x256xf32>
    %152 = arith.divf %150, %151 : vector<8x256xf32>
    %153 = arith.mulf %144, %126 : vector<8x256xf32>
    %154 = arith.mulf %138, %146 : vector<8x256xf32>
    %155 = arith.addf %153, %154 : vector<8x256xf32>
    %156 = math.tanh %155 : vector<8x256xf32>
    %157 = arith.mulf %152, %156 : vector<8x256xf32>
    %c40 = arith.constant 40 : index
    %c0_40 = arith.constant 0 : index
    %158 = vector.load %arg8[%c40, %c0_40] : memref<64x1024xf32, #tpu.memory_space<vmem>>, vector<8x1024xf32>
    %159 = arith.truncf %157 : vector<8x256xf32> to vector<8x256xbf16>
    %cst_41 = arith.constant dense<0.000000e+00> : vector<8x1024xf32>
    %160 = tpu.matmul %159, %4, %cst_41 {dimension_numbers = #tpu.dot_dimension_numbers<[1], [0], [0], [1], [0, 0, 1, 1], [], []>} : vector<8x256xbf16>, vector<256x1024xbf16>, vector<8x1024xf32> -> vector<8x1024xf32>
    %161 = arith.addf %158, %160 : vector<8x1024xf32>
    %162 = vector.extract_strided_slice %161 {offsets = [0, 0], sizes = [8, 256], strides = [1, 1]} : vector<8x1024xf32> to vector<8x256xf32>
    %163 = arith.negf %162 : vector<8x256xf32>
    %164 = math.exp %163 : vector<8x256xf32>
    %cst_42 = arith.constant 1.000000e+00 : f32
    %165 = vector.broadcast %cst_42 : f32 to vector<8x256xf32>
    %166 = arith.addf %165, %164 : vector<8x256xf32>
    %167 = arith.divf %165, %166 : vector<8x256xf32>
    %168 = vector.extract_strided_slice %161 {offsets = [0, 256], sizes = [8, 256], strides = [1, 1]} : vector<8x1024xf32> to vector<8x256xf32>
    %169 = arith.negf %168 : vector<8x256xf32>
    %170 = math.exp %169 : vector<8x256xf32>
    %cst_43 = arith.constant 1.000000e+00 : f32
    %171 = vector.broadcast %cst_43 : f32 to vector<8x256xf32>
    %172 = arith.addf %171, %170 : vector<8x256xf32>
    %173 = arith.divf %171, %172 : vector<8x256xf32>
    %174 = vector.extract_strided_slice %161 {offsets = [0, 512], sizes = [8, 256], strides = [1, 1]} : vector<8x1024xf32> to vector<8x256xf32>
    %175 = math.tanh %174 : vector<8x256xf32>
    %176 = vector.extract_strided_slice %161 {offsets = [0, 768], sizes = [8, 256], strides = [1, 1]} : vector<8x1024xf32> to vector<8x256xf32>
    %177 = arith.negf %176 : vector<8x256xf32>
    %178 = math.exp %177 : vector<8x256xf32>
    %cst_44 = arith.constant 1.000000e+00 : f32
    %179 = vector.broadcast %cst_44 : f32 to vector<8x256xf32>
    %180 = arith.addf %179, %178 : vector<8x256xf32>
    %181 = arith.divf %179, %180 : vector<8x256xf32>
    %182 = arith.mulf %173, %155 : vector<8x256xf32>
    %183 = arith.mulf %167, %175 : vector<8x256xf32>
    %184 = arith.addf %182, %183 : vector<8x256xf32>
    %185 = math.tanh %184 : vector<8x256xf32>
    %186 = arith.mulf %181, %185 : vector<8x256xf32>
    %c48 = arith.constant 48 : index
    %c0_45 = arith.constant 0 : index
    %187 = vector.load %arg8[%c48, %c0_45] : memref<64x1024xf32, #tpu.memory_space<vmem>>, vector<8x1024xf32>
    %188 = arith.truncf %186 : vector<8x256xf32> to vector<8x256xbf16>
    %cst_46 = arith.constant dense<0.000000e+00> : vector<8x1024xf32>
    %189 = tpu.matmul %188, %4, %cst_46 {dimension_numbers = #tpu.dot_dimension_numbers<[1], [0], [0], [1], [0, 0, 1, 1], [], []>} : vector<8x256xbf16>, vector<256x1024xbf16>, vector<8x1024xf32> -> vector<8x1024xf32>
    %190 = arith.addf %187, %189 : vector<8x1024xf32>
    %191 = vector.extract_strided_slice %190 {offsets = [0, 0], sizes = [8, 256], strides = [1, 1]} : vector<8x1024xf32> to vector<8x256xf32>
    %192 = arith.negf %191 : vector<8x256xf32>
    %193 = math.exp %192 : vector<8x256xf32>
    %cst_47 = arith.constant 1.000000e+00 : f32
    %194 = vector.broadcast %cst_47 : f32 to vector<8x256xf32>
    %195 = arith.addf %194, %193 : vector<8x256xf32>
    %196 = arith.divf %194, %195 : vector<8x256xf32>
    %197 = vector.extract_strided_slice %190 {offsets = [0, 256], sizes = [8, 256], strides = [1, 1]} : vector<8x1024xf32> to vector<8x256xf32>
    %198 = arith.negf %197 : vector<8x256xf32>
    %199 = math.exp %198 : vector<8x256xf32>
    %cst_48 = arith.constant 1.000000e+00 : f32
    %200 = vector.broadcast %cst_48 : f32 to vector<8x256xf32>
    %201 = arith.addf %200, %199 : vector<8x256xf32>
    %202 = arith.divf %200, %201 : vector<8x256xf32>
    %203 = vector.extract_strided_slice %190 {offsets = [0, 512], sizes = [8, 256], strides = [1, 1]} : vector<8x1024xf32> to vector<8x256xf32>
    %204 = math.tanh %203 : vector<8x256xf32>
    %205 = vector.extract_strided_slice %190 {offsets = [0, 768], sizes = [8, 256], strides = [1, 1]} : vector<8x1024xf32> to vector<8x256xf32>
    %206 = arith.negf %205 : vector<8x256xf32>
    %207 = math.exp %206 : vector<8x256xf32>
    %cst_49 = arith.constant 1.000000e+00 : f32
    %208 = vector.broadcast %cst_49 : f32 to vector<8x256xf32>
    %209 = arith.addf %208, %207 : vector<8x256xf32>
    %210 = arith.divf %208, %209 : vector<8x256xf32>
    %211 = arith.mulf %202, %184 : vector<8x256xf32>
    %212 = arith.mulf %196, %204 : vector<8x256xf32>
    %213 = arith.addf %211, %212 : vector<8x256xf32>
    %214 = math.tanh %213 : vector<8x256xf32>
    %215 = arith.mulf %210, %214 : vector<8x256xf32>
    %c56 = arith.constant 56 : index
    %c0_50 = arith.constant 0 : index
    %216 = vector.load %arg8[%c56, %c0_50] : memref<64x1024xf32, #tpu.memory_space<vmem>>, vector<8x1024xf32>
    %217 = arith.truncf %215 : vector<8x256xf32> to vector<8x256xbf16>
    %cst_51 = arith.constant dense<0.000000e+00> : vector<8x1024xf32>
    %218 = tpu.matmul %217, %4, %cst_51 {dimension_numbers = #tpu.dot_dimension_numbers<[1], [0], [0], [1], [0, 0, 1, 1], [], []>} : vector<8x256xbf16>, vector<256x1024xbf16>, vector<8x1024xf32> -> vector<8x1024xf32>
    %219 = arith.addf %216, %218 : vector<8x1024xf32>
    %220 = vector.extract_strided_slice %219 {offsets = [0, 0], sizes = [8, 256], strides = [1, 1]} : vector<8x1024xf32> to vector<8x256xf32>
    %221 = arith.negf %220 : vector<8x256xf32>
    %222 = math.exp %221 : vector<8x256xf32>
    %cst_52 = arith.constant 1.000000e+00 : f32
    %223 = vector.broadcast %cst_52 : f32 to vector<8x256xf32>
    %224 = arith.addf %223, %222 : vector<8x256xf32>
    %225 = arith.divf %223, %224 : vector<8x256xf32>
    %226 = vector.extract_strided_slice %219 {offsets = [0, 256], sizes = [8, 256], strides = [1, 1]} : vector<8x1024xf32> to vector<8x256xf32>
    %227 = arith.negf %226 : vector<8x256xf32>
    %228 = math.exp %227 : vector<8x256xf32>
    %cst_53 = arith.constant 1.000000e+00 : f32
    %229 = vector.broadcast %cst_53 : f32 to vector<8x256xf32>
    %230 = arith.addf %229, %228 : vector<8x256xf32>
    %231 = arith.divf %229, %230 : vector<8x256xf32>
    %232 = vector.extract_strided_slice %219 {offsets = [0, 512], sizes = [8, 256], strides = [1, 1]} : vector<8x1024xf32> to vector<8x256xf32>
    %233 = math.tanh %232 : vector<8x256xf32>
    %234 = vector.extract_strided_slice %219 {offsets = [0, 768], sizes = [8, 256], strides = [1, 1]} : vector<8x1024xf32> to vector<8x256xf32>
    %235 = arith.negf %234 : vector<8x256xf32>
    %236 = math.exp %235 : vector<8x256xf32>
    %cst_54 = arith.constant 1.000000e+00 : f32
    %237 = vector.broadcast %cst_54 : f32 to vector<8x256xf32>
    %238 = arith.addf %237, %236 : vector<8x256xf32>
    %239 = arith.divf %237, %238 : vector<8x256xf32>
    %240 = arith.mulf %231, %213 : vector<8x256xf32>
    %241 = arith.mulf %225, %233 : vector<8x256xf32>
    %242 = arith.addf %240, %241 : vector<8x256xf32>
    %243 = math.tanh %242 : vector<8x256xf32>
    %244 = arith.mulf %239, %243 : vector<8x256xf32>
    %c0_55 = arith.constant 0 : index
    %c0_56 = arith.constant 0 : index
    %245 = vector.load %arg6[%c0_55, %c0_56] : memref<8x256xf32, #tpu.memory_space<vmem>>, vector<8x256xf32>
    tpu.vector_store %arg6[%c0_55, %c0_56], %244 {strides = array<i32>} : memref<8x256xf32, #tpu.memory_space<vmem>>, vector<8x256xf32>,
    %c0_57 = arith.constant 0 : index
    %c0_58 = arith.constant 0 : index
    %246 = vector.load %arg7[%c0_57, %c0_58] : memref<8x256xf32, #tpu.memory_space<vmem>>, vector<8x256xf32>
    tpu.vector_store %arg7[%c0_57, %c0_58], %242 {strides = array<i32>} : memref<8x256xf32, #tpu.memory_space<vmem>>, vector<8x256xf32>,
    %c0_i32_59 = arith.constant 0 : i32
    %247 = arith.cmpi eq, %arg0, %c0_i32_59 : i32
    %248 = arith.extui %247 : i1 to i32
    %c0_i32_60 = arith.constant 0 : i32
    %249 = arith.cmpi ne, %248, %c0_i32_60 : i32
    scf.if %249 {
      %c0_61 = arith.constant 0 : index
      %c0_62 = arith.constant 0 : index
      %250 = vector.load %arg5[%c0_61, %c0_62] : memref<8x256xf32, #tpu.memory_space<vmem>>, vector<8x256xf32>
      tpu.vector_store %arg5[%c0_61, %c0_62], %244 {strides = array<i32>} : memref<8x256xf32, #tpu.memory_space<vmem>>, vector<8x256xf32>,
    } else {
    }
    return
  }
  func.func @transform_0(%arg0: i32) -> (i32, i32) {
    %c0_i32 = arith.constant 0 : i32
    %c0_i32_0 = arith.constant 0 : i32
    return %arg0, %c0_i32 : i32, i32
  }
  func.func @transform_1(%arg0: i32) -> (i32, i32) {
    %c0_i32 = arith.constant 0 : i32
    %c0_i32_0 = arith.constant 0 : i32
    %c0_i32_1 = arith.constant 0 : i32
    return %c0_i32, %c0_i32_0 : i32, i32
  }
  func.func @transform_2(%arg0: i32) -> (i32, i32) {
    %c0_i32 = arith.constant 0 : i32
    %c0_i32_0 = arith.constant 0 : i32
    %c0_i32_1 = arith.constant 0 : i32
    return %c0_i32, %c0_i32_0 : i32, i32
  }
  func.func @transform_3(%arg0: i32) -> (i32, i32) {
    %c0_i32 = arith.constant 0 : i32
    %c0_i32_0 = arith.constant 0 : i32
    %c0_i32_1 = arith.constant 0 : i32
    return %c0_i32, %c0_i32_0 : i32, i32
  }
  func.func @transform_4(%arg0: i32) -> (i32, i32) {
    %c0_i32 = arith.constant 0 : i32
    %c0_i32_0 = arith.constant 0 : i32
    %c0_i32_1 = arith.constant 0 : i32
    return %c0_i32, %c0_i32_0 : i32, i32
  }
}

</mosaic_0001>

<llo_original>
// kernel: text_encoder_forward.1
$region0: #{text_encoder_forward.1}
  #allocation0 [shape = 'u32[]', space=smem, size = 0x4, offset = 0x4, fixed_abs, tag = 'smem constant byte address 0x4 - core index']
  #allocation1 [shape = 'u32[144,128]{1,0:T(1,128)}', space=vmem, size = 0x12000, scoped, tag = 'internal scratch']
  #allocation2 [shape = 'f32[8,256]{1,0:T(8,128)}', space=vmem, size = 0x2000, scoped, tag = 'scratch operand']
  #allocation3 [shape = 'f32[8,256]{1,0:T(8,128)}', space=vmem, size = 0x2000, scoped, tag = 'scratch operand']
  #allocation4 [shape = 'f32[64,1024]{1,0:T(8,128)}', space=vmem, size = 0x40000, scoped, tag = 'scratch operand']
  %s0 = inlined_call_operand.vmem [shape: bf16[64,100], index: 0, kind: input, shape index: {}]
  %s1 = inlined_call_operand.vmem [shape: bf16[100,1024], index: 1, kind: input, shape index: {}]
  %s2 = inlined_call_operand.vmem [shape: bf16[256,1024], index: 2, kind: input, shape index: {}]
  %s3 = inlined_call_operand.vmem [shape: f32[1,1024], index: 3, kind: input, shape index: {}]
  %s4 = inlined_call_operand.vmem [shape: f32[8,256], index: 4, kind: output, shape index: {}]
  %s5 = sld [smem:[#allocation0]]
  $region34: #{text_encoder_forward.1} parent=0
    _
  %s7 = ssub.s32 1, %s5
  %s8 = scalar_select 0, %s7, %s5
  // Predicated region
  $region2: #{text_encoder_forward.1} parent=0 // pred_check
    _
  $region3: #{text_encoder_forward.1} parent=0 // pred_check_branch
    %10 = sbr.rel (0) target = $region5
  $region4: #{text_encoder_forward.1} parent=0 // pred_region
    _
  $region5: #{text_encoder_forward.1} parent=0 // pred_fallthru
    _
  // Predicated region
  $region6: #{text_encoder_forward.1} parent=0 // pred_check
    _
  $region7: #{text_encoder_forward.1} parent=0 // pred_check_branch
    %12 = sbr.rel (0) target = $region9
  $region8: #{text_encoder_forward.1} parent=0 // pred_region
    _
  $region9: #{text_encoder_forward.1} parent=0 // pred_fallthru
    _
  // Predicated region
  $region10: #{text_encoder_forward.1} parent=0 // pred_check
    _
  $region11: #{text_encoder_forward.1} parent=0 // pred_check_branch
    %14 = sbr.rel (0) target = $region13
  $region12: #{text_encoder_forward.1} parent=0 // pred_region
    _
  $region13: #{text_encoder_forward.1} parent=0 // pred_fallthru
    _
  // Predicated region
  $region14: #{text_encoder_forward.1} parent=0 // pred_check
    _
  $region15: #{text_encoder_forward.1} parent=0 // pred_check_branch
    %16 = sbr.rel (0) target = $region17
  $region16: #{text_encoder_forward.1} parent=0 // pred_region
    _
  $region17: #{text_encoder_forward.1} parent=0 // pred_fallthru
    _
  %p18 = scmp.eq.s32.totalorder 0, 0
  // Predicated region
  $region18: #{text_encoder_forward.1} parent=0 // pred_check
    %p19 = pneg %p18
  $region19: #{text_encoder_forward.1} parent=0 // pred_check_branch
    %21 = sbr.rel (%p19) target = $region21
  $region20: #{text_encoder_forward.1} parent=0 // pred_region
    %22 = vst [vmem:[#allocation2] sm:$0xff] 0.0
    %23 = vst [vmem:[#allocation2 + $0x8] sm:$0xff] 0.0
    %24 = vst [vmem:[#allocation3] sm:$0xff] 0.0
    %25 = vst [vmem:[#allocation3 + $0x8] sm:$0xff] 0.0
  $region21: #{text_encoder_forward.1} parent=0 // pred_fallthru
    _
  %v26 = vld [vmem:[%s1] sm:$0xff]
  %v27 = vld [vmem:[%s1 + $0x8] sm:$0xff]
  %v28 = vld [vmem:[%s1 + $0x10] sm:$0xff]
  %v29 = vld [vmem:[%s1 + $0x18] sm:$0xff]
  %v30 = vld [vmem:[%s1 + $0x20] sm:$0xff]
  %v31 = vld [vmem:[%s1 + $0x28] sm:$0xff]
  %v32 = vld [vmem:[%s1 + $0x30] sm:$0xff]
  %v33 = vld [vmem:[%s1 + $0x38] sm:$0xff]
  %v34 = vld [vmem:[%s1 + $0x40] sm:$0xff]
  %v35 = vld [vmem:[%s1 + $0x48] sm:$0xff]
  %v36 = vld [vmem:[%s1 + $0x50] sm:$0xff]
  %v37 = vld [vmem:[%s1 + $0x58] sm:$0xff]
  %v38 = vld [vmem:[%s1 + $0x60] sm:$0xff]
  %v39 = vld [vmem:[%s1 + $0x68] sm:$0xff]
  %v40 = vld [vmem:[%s1 + $0x70] sm:$0xff]
  %v41 = vld [vmem:[%s1 + $0x78] sm:$0xff]
  %v42 = vld [vmem:[%s1 + $0x80] sm:$0xff]
  %v43 = vld [vmem:[%s1 + $0x88] sm:$0xff]
  %v44 = vld [vmem:[%s1 + $0x90] sm:$0xff]
  %v45 = vld [vmem:[%s1 + $0x98] sm:$0xff]
  %v46 = vld [vmem:[%s1 + $0xa0] sm:$0xff]
  %v47 = vld [vmem:[%s1 + $0xa8] sm:$0xff]
  %v48 = vld [vmem:[%s1 + $0xb0] sm:$0xff]
  %v49 = vld [vmem:[%s1 + $0xb8] sm:$0xff]
  %v50 = vld [vmem:[%s1 + $0xc0] sm:$0xff]
  %v51 = vld [vmem:[%s1 + $0xc8] sm:$0xff]
  %v52 = vld [vmem:[%s1 + $0xd0] sm:$0xff]
  %v53 = vld [vmem:[%s1 + $0xd8] sm:$0xff]
  %v54 = vld [vmem:[%s1 + $0xe0] sm:$0xff]
  %v55 = vld [vmem:[%s1 + $0xe8] sm:$0xff]
  %v56 = vld [vmem:[%s1 + $0xf0] sm:$0xff]
  %v57 = vld [vmem:[%s1 + $0xf8] sm:$0xff]
  %v58 = vld [vmem:[%s1 + $0x100] sm:$0xff]
  %v59 = vld [vmem:[%s1 + $0x108] sm:$0xff]
  %v60 = vld [vmem:[%s1 + $0x110] sm:$0xff]
  %v61 = vld [vmem:[%s1 + $0x118] sm:$0xff]
  %v62 = vld [vmem:[%s1 + $0x120] sm:$0xff]
  %v63 = vld [vmem:[%s1 + $0x128] sm:$0xff]
  %v64 = vld [vmem:[%s1 + $0x130] sm:$0xff]
  %v65 = vld [vmem:[%s1 + $0x138] sm:$0xff]
  %v66 = vld [vmem:[%s1 + $0x140] sm:$0xff]
  %v67 = vld [vmem:[%s1 + $0x148] sm:$0xff]
  %v68 = vld [vmem:[%s1 + $0x150] sm:$0xff]
  %v69 = vld [vmem:[%s1 + $0x158] sm:$0xff]
  %v70 = vld [vmem:[%s1 + $0x160] sm:$0xff]
  %v71 = vld [vmem:[%s1 + $0x168] sm:$0xff]
  %v72 = vld [vmem:[%s1 + $0x170] sm:$0xff]
  %v73 = vld [vmem:[%s1 + $0x178] sm:$0xff]
  %v74 = vld [vmem:[%s1 + $0x180] sm:$0x33]
  %v75 = vld [vmem:[%s1 + $0x188] sm:$0x33]
  %v76 = vld [vmem:[%s1 + $0x190] sm:$0x33]
  %v77 = vld [vmem:[%s1 + $0x198] sm:$0x33]
  %v78 = vld [vmem:[%s2] sm:$0xff]
  %v79 = vld [vmem:[%s2 + $0x8] sm:$0xff]
  %v80 = vld [vmem:[%s2 + $0x10] sm:$0xff]
  %v81 = vld [vmem:[%s2 + $0x18] sm:$0xff]
  %v82 = vld [vmem:[%s2 + $0x20] sm:$0xff]
  %v83 = vld [vmem:[%s2 + $0x28] sm:$0xff]
  %v84 = vld [vmem:[%s2 + $0x30] sm:$0xff]
  %v85 = vld [vmem:[%s2 + $0x38] sm:$0xff]
  %v86 = vld [vmem:[%s2 + $0x40] sm:$0xff]
  %v87 = vld [vmem:[%s2 + $0x48] sm:$0xff]
  %v88 = vld [vmem:[%s2 + $0x50] sm:$0xff]
  %v89 = vld [vmem:[%s2 + $0x58] sm:$0xff]
  %v90 = vld [vmem:[%s2 + $0x60] sm:$0xff]
  %v91 = vld [vmem:[%s2 + $0x68] sm:$0xff]
  %v92 = vld [vmem:[%s2 + $0x70] sm:$0xff]
  %v93 = vld [vmem:[%s2 + $0x78] sm:$0xff]
  %v94 = vld [vmem:[%s2 + $0x80] sm:$0xff]
  %v95 = vld [vmem:[%s2 + $0x88] sm:$0xff]
  %v96 = vld [vmem:[%s2 + $0x90] sm:$0xff]
  %v97 = vld [vmem:[%s2 + $0x98] sm:$0xff]
  %v98 = vld [vmem:[%s2 + $0xa0] sm:$0xff]
  %v99 = vld [vmem:[%s2 + $0xa8] sm:$0xff]
  %v100 = vld [vmem:[%s2 + $0xb0] sm:$0xff]
  %v101 = vld [vmem:[%s2 + $0xb8] sm:$0xff]
  %v102 = vld [vmem:[%s2 + $0xc0] sm:$0xff]
  %v103 = vld [vmem:[%s2 + $0xc8] sm:$0xff]
  %v104 = vld [vmem:[%s2 + $0xd0] sm:$0xff]
  %v105 = vld [vmem:[%s2 + $0xd8] sm:$0xff]
  %v106 = vld [vmem:[%s2 + $0xe0] sm:$0xff]
  %v107 = vld [vmem:[%s2 + $0xe8] sm:$0xff]
  %v108 = vld [vmem:[%s2 + $0xf0] sm:$0xff]
  %v109 = vld [vmem:[%s2 + $0xf8] sm:$0xff]
  %v110 = vld [vmem:[%s2 + $0x100] sm:$0xff]
  %v111 = vld [vmem:[%s2 + $0x108] sm:$0xff]
  %v112 = vld [vmem:[%s2 + $0x110] sm:$0xff]
  %v113 = vld [vmem:[%s2 + $0x118] sm:$0xff]
  %v114 = vld [vmem:[%s2 + $0x120] sm:$0xff]
  %v115 = vld [vmem:[%s2 + $0x128] sm:$0xff]
  %v116 = vld [vmem:[%s2 + $0x130] sm:$0xff]
  %v117 = vld [vmem:[%s2 + $0x138] sm:$0xff]
  %v118 = vld [vmem:[%s2 + $0x140] sm:$0xff]
  %v119 = vld [vmem:[%s2 + $0x148] sm:$0xff]
  %v120 = vld [vmem:[%s2 + $0x150] sm:$0xff]
  %v121 = vld [vmem:[%s2 + $0x158] sm:$0xff]
  %v122 = vld [vmem:[%s2 + $0x160] sm:$0xff]
  %v123 = vld [vmem:[%s2 + $0x168] sm:$0xff]
  %v124 = vld [vmem:[%s2 + $0x170] sm:$0xff]
  %v125 = vld [vmem:[%s2 + $0x178] sm:$0xff]
  %v126 = vld [vmem:[%s2 + $0x180] sm:$0xff]
  %v127 = vld [vmem:[%s2 + $0x188] sm:$0xff]
  %v128 = vld [vmem:[%s2 + $0x190] sm:$0xff]
  %v129 = vld [vmem:[%s2 + $0x198] sm:$0xff]
  %v130 = vld [vmem:[%s2 + $0x1a0] sm:$0xff]
  %v131 = vld [vmem:[%s2 + $0x1a8] sm:$0xff]
  %v132 = vld [vmem:[%s2 + $0x1b0] sm:$0xff]
  %v133 = vld [vmem:[%s2 + $0x1b8] sm:$0xff]
  %v134 = vld [vmem:[%s2 + $0x1c0] sm:$0xff]
  %v135 = vld [vmem:[%s2 + $0x1c8] sm:$0xff]
  %v136 = vld [vmem:[%s2 + $0x1d0] sm:$0xff]
  %v137 = vld [vmem:[%s2 + $0x1d8] sm:$0xff]
  %v138 = vld [vmem:[%s2 + $0x1e0] sm:$0xff]
  %v139 = vld [vmem:[%s2 + $0x1e8] sm:$0xff]
  %v140 = vld [vmem:[%s2 + $0x1f0] sm:$0xff]
  %v141 = vld [vmem:[%s2 + $0x1f8] sm:$0xff]
  %v142 = vld [vmem:[%s2 + $0x200] sm:$0xff]
  %v143 = vld [vmem:[%s2 + $0x208] sm:$0xff]
  %v144 = vld [vmem:[%s2 + $0x210] sm:$0xff]
  %v145 = vld [vmem:[%s2 + $0x218] sm:$0xff]
  %v146 = vld [vmem:[%s2 + $0x220] sm:$0xff]
  %v147 = vld [vmem:[%s2 + $0x228] sm:$0xff]
  %v148 = vld [vmem:[%s2 + $0x230] sm:$0xff]
  %v149 = vld [vmem:[%s2 + $0x238] sm:$0xff]
  %v150 = vld [vmem:[%s2 + $0x240] sm:$0xff]
  %v151 = vld [vmem:[%s2 + $0x248] sm:$0xff]
  %v152 = vld [vmem:[%s2 + $0x250] sm:$0xff]
  %v153 = vld [vmem:[%s2 + $0x258] sm:$0xff]
  %v154 = vld [vmem:[%s2 + $0x260] sm:$0xff]
  %v155 = vld [vmem:[%s2 + $0x268] sm:$0xff]
  %v156 = vld [vmem:[%s2 + $0x270] sm:$0xff]
  %v157 = vld [vmem:[%s2 + $0x278] sm:$0xff]
  %v158 = vld [vmem:[%s2 + $0x280] sm:$0xff]
  %v159 = vld [vmem:[%s2 + $0x288] sm:$0xff]
  %v160 = vld [vmem:[%s2 + $0x290] sm:$0xff]
  %v161 = vld [vmem:[%s2 + $0x298] sm:$0xff]
  %v162 = vld [vmem:[%s2 + $0x2a0] sm:$0xff]
  %v163 = vld [vmem:[%s2 + $0x2a8] sm:$0xff]
  %v164 = vld [vmem:[%s2 + $0x2b0] sm:$0xff]
  %v165 = vld [vmem:[%s2 + $0x2b8] sm:$0xff]
  %v166 = vld [vmem:[%s2 + $0x2c0] sm:$0xff]
  %v167 = vld [vmem:[%s2 + $0x2c8] sm:$0xff]
  %v168 = vld [vmem:[%s2 + $0x2d0] sm:$0xff]
  %v169 = vld [vmem:[%s2 + $0x2d8] sm:$0xff]
  %v170 = vld [vmem:[%s2 + $0x2e0] sm:$0xff]
  %v171 = vld [vmem:[%s2 + $0x2e8] sm:$0xff]
  %v172 = vld [vmem:[%s2 + $0x2f0] sm:$0xff]
  %v173 = vld [vmem:[%s2 + $0x2f8] sm:$0xff]
  %v174 = vld [vmem:[%s2 + $0x300] sm:$0xff]
  %v175 = vld [vmem:[%s2 + $0x308] sm:$0xff]
  %v176 = vld [vmem:[%s2 + $0x310] sm:$0xff]
  %v177 = vld [vmem:[%s2 + $0x318] sm:$0xff]
  %v178 = vld [vmem:[%s2 + $0x320] sm:$0xff]
  %v179 = vld [vmem:[%s2 + $0x328] sm:$0xff]
  %v180 = vld [vmem:[%s2 + $0x330] sm:$0xff]
  %v181 = vld [vmem:[%s2 + $0x338] sm:$0xff]
  %v182 = vld [vmem:[%s2 + $0x340] sm:$0xff]
  %v183 = vld [vmem:[%s2 + $0x348] sm:$0xff]
  %v184 = vld [vmem:[%s2 + $0x350] sm:$0xff]
  %v185 = vld [vmem:[%s2 + $0x358] sm:$0xff]
  %v186 = vld [vmem:[%s2 + $0x360] sm:$0xff]
  %v187 = vld [vmem:[%s2 + $0x368] sm:$0xff]
  %v188 = vld [vmem:[%s2 + $0x370] sm:$0xff]
  %v189 = vld [vmem:[%s2 + $0x378] sm:$0xff]
  %v190 = vld [vmem:[%s2 + $0x380] sm:$0xff]
  %v191 = vld [vmem:[%s2 + $0x388] sm:$0xff]
  %v192 = vld [vmem:[%s2 + $0x390] sm:$0xff]
  %v193 = vld [vmem:[%s2 + $0x398] sm:$0xff]
  %v194 = vld [vmem:[%s2 + $0x3a0] sm:$0xff]
  %v195 = vld [vmem:[%s2 + $0x3a8] sm:$0xff]
  %v196 = vld [vmem:[%s2 + $0x3b0] sm:$0xff]
  %v197 = vld [vmem:[%s2 + $0x3b8] sm:$0xff]
  %v198 = vld [vmem:[%s2 + $0x3c0] sm:$0xff]
  %v199 = vld [vmem:[%s2 + $0x3c8] sm:$0xff]
  %v200 = vld [vmem:[%s2 + $0x3d0] sm:$0xff]
  %v201 = vld [vmem:[%s2 + $0x3d8] sm:$0xff]
  %v202 = vld [vmem:[%s2 + $0x3e0] sm:$0xff]
  %v203 = vld [vmem:[%s2 + $0x3e8] sm:$0xff]
  %v204 = vld [vmem:[%s2 + $0x3f0] sm:$0xff]
  %v205 = vld [vmem:[%s2 + $0x3f8] sm:$0xff]
  %v206 = vld [vmem:[%s0] sm:$0xf]
  %v207 = vld [vmem:[%s0 + $0x4] sm:$0xf]
  %v208 = vld [vmem:[%s0 + $0x8] sm:$0xf]
  %v209 = vld [vmem:[%s0 + $0xc] sm:$0xf]
  %v210 = vld [vmem:[%s0 + $0x10] sm:$0xf]
  %v211 = vld [vmem:[%s0 + $0x14] sm:$0xf]
  %v212 = vld [vmem:[%s0 + $0x18] sm:$0xf]
  %v213 = vld [vmem:[%s0 + $0x1c] sm:$0xf]
  %v214 = vld [vmem:[%s3] sm:$0xff]
  %v216 = vlaneseq
  %v217 = vshrl.u32 %v216, 7
  %v218 = vsub.s32 0, %v217
  %v219 = vrot.slane %v214, %v218
  %v220 = vlaneseq
  %v221 = vshrl.u32 %v220, 7
  %v222 = vsub.s32 1, %v221
  %v223 = vrot.slane %v214, %v222
  %v224 = vlaneseq
  %v225 = vshrl.u32 %v224, 7
  %v226 = vsub.s32 2, %v225
  %v227 = vrot.slane %v214, %v226
  %v228 = vlaneseq
  %v229 = vshrl.u32 %v228, 7
  %v230 = vsub.s32 3, %v229
  %v231 = vrot.slane %v214, %v230
  %v232 = vlaneseq
  %v233 = vshrl.u32 %v232, 7
  %v234 = vsub.s32 4, %v233
  %v235 = vrot.slane %v214, %v234
  %v236 = vlaneseq
  %v237 = vshrl.u32 %v236, 7
  %v238 = vsub.s32 5, %v237
  %v239 = vrot.slane %v214, %v238
  %v240 = vlaneseq
  %v241 = vshrl.u32 %v240, 7
  %v242 = vsub.s32 6, %v241
  %v243 = vrot.slane %v214, %v242
  %v244 = vlaneseq
  %v245 = vshrl.u32 %v244, 7
  %v246 = vsub.s32 7, %v245
  %v247 = vrot.slane %v214, %v246
  %v264 = vunpack.c.l.b16 %v206
  %v265 = vunpack.c.l.b16 %v207
  %v266 = vunpack.c.l.b16 %v208
  %v267 = vunpack.c.l.b16 %v209
  %v268 = vunpack.c.l.b16 %v210
  %v269 = vunpack.c.l.b16 %v211
  %v270 = vunpack.c.l.b16 %v212
  %v271 = vunpack.c.l.b16 %v213
  %v272 = vpack.c.b16 %v265, %v264
  %v273 = vpack.c.b16 %v267, %v266
  %v274 = vpack.c.b16 %v269, %v268
  %v275 = vpack.c.b16 %v271, %v270
  %v328 = vunpack.c.l.b16 %v26
  %v329 = vunpack.c.h.b16 %v26
  %v330 = vunpack.c.l.b16 %v27
  %v331 = vunpack.c.h.b16 %v27
  %v332 = vunpack.c.l.b16 %v28
  %v333 = vunpack.c.h.b16 %v28
  %v334 = vunpack.c.l.b16 %v29
  %v335 = vunpack.c.h.b16 %v29
  %v336 = vunpack.c.l.b16 %v30
  %v337 = vunpack.c.h.b16 %v30
  %v338 = vunpack.c.l.b16 %v31
  %v339 = vunpack.c.h.b16 %v31
  %v340 = vunpack.c.l.b16 %v32
  %v341 = vunpack.c.h.b16 %v32
  %v342 = vunpack.c.l.b16 %v33
  %v343 = vunpack.c.h.b16 %v33
  %v344 = vunpack.c.l.b16 %v34
  %v345 = vunpack.c.h.b16 %v34
  %v346 = vunpack.c.l.b16 %v35
  %v347 = vunpack.c.h.b16 %v35
  %v348 = vunpack.c.l.b16 %v36
  %v349 = vunpack.c.h.b16 %v36
  %v350 = vunpack.c.l.b16 %v37
  %v351 = vunpack.c.h.b16 %v37
  %v352 = vunpack.c.l.b16 %v38
  %v353 = vunpack.c.h.b16 %v38
  %v354 = vunpack.c.l.b16 %v39
  %v355 = vunpack.c.h.b16 %v39
  %v356 = vunpack.c.l.b16 %v40
  %v357 = vunpack.c.h.b16 %v40
  %v358 = vunpack.c.l.b16 %v41
  %v359 = vunpack.c.h.b16 %v41
  %v360 = vunpack.c.l.b16 %v42
  %v361 = vunpack.c.h.b16 %v42
  %v362 = vunpack.c.l.b16 %v43
  %v363 = vunpack.c.h.b16 %v43
  %v364 = vunpack.c.l.b16 %v44
  %v365 = vunpack.c.h.b16 %v44
  %v366 = vunpack.c.l.b16 %v45
  %v367 = vunpack.c.h.b16 %v45
  %v368 = vunpack.c.l.b16 %v46
  %v369 = vunpack.c.h.b16 %v46
  %v370 = vunpack.c.l.b16 %v47
  %v371 = vunpack.c.h.b16 %v47
  %v372 = vunpack.c.l.b16 %v48
  %v373 = vunpack.c.h.b16 %v48
  %v374 = vunpack.c.l.b16 %v49
  %v375 = vunpack.c.h.b16 %v49
  %v376 = vunpack.c.l.b16 %v50
  %v377 = vunpack.c.h.b16 %v50
  %v378 = vunpack.c.l.b16 %v51
  %v379 = vunpack.c.h.b16 %v51
  %v380 = vunpack.c.l.b16 %v52
  %v381 = vunpack.c.h.b16 %v52
  %v382 = vunpack.c.l.b16 %v53
  %v383 = vunpack.c.h.b16 %v53
  %v384 = vunpack.c.l.b16 %v54
  %v385 = vunpack.c.h.b16 %v54
  %v386 = vunpack.c.l.b16 %v55
  %v387 = vunpack.c.h.b16 %v55
  %v388 = vunpack.c.l.b16 %v56
  %v389 = vunpack.c.h.b16 %v56
  %v390 = vunpack.c.l.b16 %v57
  %v391 = vunpack.c.h.b16 %v57
  %v392 = vunpack.c.l.b16 %v58
  %v393 = vunpack.c.h.b16 %v58
  %v394 = vunpack.c.l.b16 %v59
  %v395 = vunpack.c.h.b16 %v59
  %v396 = vunpack.c.l.b16 %v60
  %v397 = vunpack.c.h.b16 %v60
  %v398 = vunpack.c.l.b16 %v61
  %v399 = vunpack.c.h.b16 %v61
  %v400 = vunpack.c.l.b16 %v62
  %v401 = vunpack.c.h.b16 %v62
  %v402 = vunpack.c.l.b16 %v63
  %v403 = vunpack.c.h.b16 %v63
  %v404 = vunpack.c.l.b16 %v64
  %v405 = vunpack.c.h.b16 %v64
  %v406 = vunpack.c.l.b16 %v65
  %v407 = vunpack.c.h.b16 %v65
  %v408 = vunpack.c.l.b16 %v66
  %v409 = vunpack.c.h.b16 %v66
  %v410 = vunpack.c.l.b16 %v67
  %v411 = vunpack.c.h.b16 %v67
  %v412 = vunpack.c.l.b16 %v68
  %v413 = vunpack.c.h.b16 %v68
  %v414 = vunpack.c.l.b16 %v69
  %v415 = vunpack.c.h.b16 %v69
  %v416 = vunpack.c.l.b16 %v70
  %v417 = vunpack.c.h.b16 %v70
  %v418 = vunpack.c.l.b16 %v71
  %v419 = vunpack.c.h.b16 %v71
  %v420 = vunpack.c.l.b16 %v72
  %v421 = vunpack.c.h.b16 %v72
  %v422 = vunpack.c.l.b16 %v73
  %v423 = vunpack.c.h.b16 %v73
  %v424 = vunpack.c.l.b16 %v74
  %v425 = vunpack.c.h.b16 %v74
  %v426 = vunpack.c.l.b16 %v75
  %v427 = vunpack.c.h.b16 %v75
  %v428 = vunpack.c.l.b16 %v76
  %v429 = vunpack.c.h.b16 %v76
  %v430 = vunpack.c.l.b16 %v77
  %v431 = vunpack.c.h.b16 %v77
  %v432 = vpack.c.b16 %v336, %v328
  %v433 = vpack.c.b16 %v337, %v329
  %v434 = vpack.c.b16 %v338, %v330
  %v435 = vpack.c.b16 %v339, %v331
  %v436 = vpack.c.b16 %v340, %v332
  %v437 = vpack.c.b16 %v341, %v333
  %v438 = vpack.c.b16 %v342, %v334
  %v439 = vpack.c.b16 %v343, %v335
  %v440 = vpack.c.b16 %v352, %v344
  %v441 = vpack.c.b16 %v353, %v345
  %v442 = vpack.c.b16 %v354, %v346
  %v443 = vpack.c.b16 %v355, %v347
  %v444 = vpack.c.b16 %v356, %v348
  %v445 = vpack.c.b16 %v357, %v349
  %v446 = vpack.c.b16 %v358, %v350
  %v447 = vpack.c.b16 %v359, %v351
  %v448 = vpack.c.b16 %v368, %v360
  %v449 = vpack.c.b16 %v369, %v361
  %v450 = vpack.c.b16 %v370, %v362
  %v451 = vpack.c.b16 %v371, %v363
  %v452 = vpack.c.b16 %v372, %v364
  %v453 = vpack.c.b16 %v373, %v365
  %v454 = vpack.c.b16 %v374, %v366
  %v455 = vpack.c.b16 %v375, %v367
  %v456 = vpack.c.b16 %v384, %v376
  %v457 = vpack.c.b16 %v385, %v377
  %v458 = vpack.c.b16 %v386, %v378
  %v459 = vpack.c.b16 %v387, %v379
  %v460 = vpack.c.b16 %v388, %v380
  %v461 = vpack.c.b16 %v389, %v381
  %v462 = vpack.c.b16 %v390, %v382
  %v463 = vpack.c.b16 %v391, %v383
  %v464 = vpack.c.b16 %v400, %v392
  %v465 = vpack.c.b16 %v401, %v393
  %v466 = vpack.c.b16 %v402, %v394
  %v467 = vpack.c.b16 %v403, %v395
  %v468 = vpack.c.b16 %v404, %v396
  %v469 = vpack.c.b16 %v405, %v397
  %v470 = vpack.c.b16 %v406, %v398
  %v471 = vpack.c.b16 %v407, %v399
  %v472 = vpack.c.b16 %v416, %v408
  %v473 = vpack.c.b16 %v417, %v409
  %v474 = vpack.c.b16 %v418, %v410
  %v475 = vpack.c.b16 %v419, %v411
  %v476 = vpack.c.b16 %v420, %v412
  %v477 = vpack.c.b16 %v421, %v413
  %v478 = vpack.c.b16 %v422, %v414
  %v479 = vpack.c.b16 %v423, %v415
  %v480 = vpack.c.b16 %v424, %v424
  %v481 = vpack.c.b16 %v425, %v425
  %v482 = vpack.c.b16 %v426, %v426
  %v483 = vpack.c.b16 %v427, %v427
  %v484 = vpack.c.b16 %v428, %v428
  %v485 = vpack.c.b16 %v429, %v429
  %v486 = vpack.c.b16 %v430, %v430
  %v487 = vpack.c.b16 %v431, %v431
  %vm536 = vcmask 818176
  %v538 = vsel %vm536, %v272, 0
  %v541 = vsel %vm536, %v273, 0
  %v544 = vsel %vm536, %v274, 0
  %v547 = vsel %vm536, %v275, 0
  %vm549 = vcmask 1041408
  %v551 = vsel %vm549, %v480, 0
  %v554 = vsel %vm549, %v481, 0
  %v557 = vsel %vm549, %v482, 0
  %v560 = vsel %vm549, %v483, 0
  %v563 = vsel %vm549, %v484, 0
  %v566 = vsel %vm549, %v485, 0
  %v569 = vsel %vm549, %v486, 0
  %v572 = vsel %vm549, %v487, 0
  %574 = vmatprep.subr.bf16.mxu0 %v433
  %575 = vmatpush1.bf16.msra.mxu0 %v432
  %576 = vmatprep.subr.bf16.mxu0 %v441
  %577 = vmatpush1.bf16.msra.mxu0 %v440
  %578 = vmatprep.subr.bf16.mxu0 %v449
  %579 = vmatpush1.bf16.msra.mxu0 %v448
  %580 = vmatprep.subr.bf16.mxu0 %v457
  %581 = vmatpush1.bf16.msra.mxu0 %v456
  %582 = vmatprep.subr.bf16.mxu0 %v465
  %583 = vmatpush1.bf16.msra.mxu0 %v464
  %584 = vmatprep.subr.bf16.mxu0 %v473
  %585 = vmatpush1.bf16.msra.mxu0 %v472
  %586 = vmatprep.subr.bf16.mxu0 %v554
  %587 = vmatpush1.bf16.msra.mxu0 %v551
  %588 = vmatprep.subr.bf16.mxu0 0
  %589 = vmatpush1.bf16.msra.mxu0 0
  %590 = vmatprep.subr.bf16.mxu0 0
  %591 = vmatpush1.bf16.msra.mxu0 0
  %592 = vmatprep.subr.bf16.mxu0 0
  %593 = vmatpush1.bf16.msra.mxu0 0
  %594 = vmatprep.subr.bf16.mxu0 0
  %595 = vmatpush1.bf16.msra.mxu0 0
  %596 = vmatprep.subr.bf16.mxu0 0
  %597 = vmatpush1.bf16.msra.mxu0 0
  %598 = vmatprep.subr.bf16.mxu0 0
  %599 = vmatpush1.bf16.msra.mxu0 0
  %600 = vmatprep.subr.bf16.mxu0 0
  %601 = vmatpush1.bf16.msra.mxu0 0
  %602 = vmatprep.subr.bf16.mxu0 0
  %603 = vmatpush1.bf16.msra.mxu0 0
  %604 = vmatprep.subr.bf16.mxu0 0
  %605 = vmatpush1.bf16.msra.mxu0 0
  %606 = vmatprep.mubr.bf16.mxu0 0
  %607 = vmatmul.mubr.bf16.gmra.mrb[0].mxu0 %v538
  %v608 = vpop.f32.mrb[0].mxu0
  %v609 = vadd.f32 %v219, %v608
  %v610 = vpop.f32.mrb[0].mxu0
  %v611 = vadd.f32 %v223, %v610
  %v612 = vpop.f32.mrb[0].mxu0
  %v613 = vadd.f32 %v219, %v612
  %v614 = vpop.f32.mrb[0].mxu0
  %v615 = vadd.f32 %v223, %v614
  %616 = vmatprep.mubr.bf16.mxu0 0
  %617 = vmatmul.mubr.bf16.gmra.mrb[0].mxu0 %v541
  %v618 = vpop.f32.mrb[0].mxu0
  %v619 = vadd.f32 %v219, %v618
  %v620 = vpop.f32.mrb[0].mxu0
  %v621 = vadd.f32 %v223, %v620
  %v622 = vpop.f32.mrb[0].mxu0
  %v623 = vadd.f32 %v219, %v622
  %v624 = vpop.f32.mrb[0].mxu0
  %v625 = vadd.f32 %v223, %v624
  %626 = vmatprep.mubr.bf16.mxu0 0
  %627 = vmatmul.mubr.bf16.gmra.mrb[0].mxu0 %v544
  %v628 = vpop.f32.mrb[0].mxu0
  %v629 = vadd.f32 %v219, %v628
  %v630 = vpop.f32.mrb[0].mxu0
  %v631 = vadd.f32 %v223, %v630
  %v632 = vpop.f32.mrb[0].mxu0
  %v633 = vadd.f32 %v219, %v632
  %v634 = vpop.f32.mrb[0].mxu0
  %v635 = vadd.f32 %v223, %v634
  %636 = vmatprep.mubr.bf16.mxu0 0
  %637 = vmatmul.mubr.bf16.gmra.mrb[0].mxu0 %v547
  %v638 = vpop.f32.mrb[0].mxu0
  %v639 = vadd.f32 %v219, %v638
  %v640 = vpop.f32.mrb[0].mxu0
  %v641 = vadd.f32 %v223, %v640
  %v642 = vpop.f32.mrb[0].mxu0
  %v643 = vadd.f32 %v219, %v642
  %v644 = vpop.f32.mrb[0].mxu0
  %v645 = vadd.f32 %v223, %v644
  %646 = vdwg.mxu0
  %647 = vmatprep.subr.bf16.mxu0 %v435
  %648 = vmatpush1.bf16.msra.mxu0 %v434
  %649 = vmatprep.subr.bf16.mxu0 %v443
  %650 = vmatpush1.bf16.msra.mxu0 %v442
  %651 = vmatprep.subr.bf16.mxu0 %v451
  %652 = vmatpush1.bf16.msra.mxu0 %v450
  %653 = vmatprep.subr.bf16.mxu0 %v459
  %654 = vmatpush1.bf16.msra.mxu0 %v458
  %655 = vmatprep.subr.bf16.mxu0 %v467
  %656 = vmatpush1.bf16.msra.mxu0 %v466
  %657 = vmatprep.subr.bf16.mxu0 %v475
  %658 = vmatpush1.bf16.msra.mxu0 %v474
  %659 = vmatprep.subr.bf16.mxu0 %v560
  %660 = vmatpush1.bf16.msra.mxu0 %v557
  %661 = vmatprep.subr.bf16.mxu0 0
  %662 = vmatpush1.bf16.msra.mxu0 0
  %663 = vmatprep.subr.bf16.mxu0 0
  %664 = vmatpush1.bf16.msra.mxu0 0
  %665 = vmatprep.subr.bf16.mxu0 0
  %666 = vmatpush1.bf16.msra.mxu0 0
  %667 = vmatprep.subr.bf16.mxu0 0
  %668 = vmatpush1.bf16.msra.mxu0 0
  %669 = vmatprep.subr.bf16.mxu0 0
  %670 = vmatpush1.bf16.msra.mxu0 0
  %671 = vmatprep.subr.bf16.mxu0 0
  %672 = vmatpush1.bf16.msra.mxu0 0
  %673 = vmatprep.subr.bf16.mxu0 0
  %674 = vmatpush1.bf16.msra.mxu0 0
  %675 = vmatprep.subr.bf16.mxu0 0
  %676 = vmatpush1.bf16.msra.mxu0 0
  %677 = vmatprep.subr.bf16.mxu0 0
  %678 = vmatpush1.bf16.msra.mxu0 0
  %679 = vmatprep.mubr.bf16.mxu0 0
  %680 = vmatmul.mubr.bf16.gmra.mrb[0].mxu0 %v538
  %v681 = vpop.f32.mrb[0].mxu0
  %v682 = vadd.f32 %v227, %v681
  %v683 = vpop.f32.mrb[0].mxu0
  %v684 = vadd.f32 %v231, %v683
  %v685 = vpop.f32.mrb[0].mxu0
  %v686 = vadd.f32 %v227, %v685
  %v687 = vpop.f32.mrb[0].mxu0
  %v688 = vadd.f32 %v231, %v687
  %689 = vmatprep.mubr.bf16.mxu0 0
  %690 = vmatmul.mubr.bf16.gmra.mrb[0].mxu0 %v541
  %v691 = vpop.f32.mrb[0].mxu0
  %v692 = vadd.f32 %v227, %v691
  %v693 = vpop.f32.mrb[0].mxu0
  %v694 = vadd.f32 %v231, %v693
  %v695 = vpop.f32.mrb[0].mxu0
  %v696 = vadd.f32 %v227, %v695
  %v697 = vpop.f32.mrb[0].mxu0
  %v698 = vadd.f32 %v231, %v697
  %699 = vmatprep.mubr.bf16.mxu0 0
  %700 = vmatmul.mubr.bf16.gmra.mrb[0].mxu0 %v544
  %v701 = vpop.f32.mrb[0].mxu0
  %v702 = vadd.f32 %v227, %v701
  %v703 = vpop.f32.mrb[0].mxu0
  %v704 = vadd.f32 %v231, %v703
  %v705 = vpop.f32.mrb[0].mxu0
  %v706 = vadd.f32 %v227, %v705
  %v707 = vpop.f32.mrb[0].mxu0
  %v708 = vadd.f32 %v231, %v707
  %709 = vmatprep.mubr.bf16.mxu0 0
  %710 = vmatmul.mubr.bf16.gmra.mrb[0].mxu0 %v547
  %v711 = vpop.f32.mrb[0].mxu0
  %v712 = vadd.f32 %v227, %v711
  %v713 = vpop.f32.mrb[0].mxu0
  %v714 = vadd.f32 %v231, %v713
  %v715 = vpop.f32.mrb[0].mxu0
  %v716 = vadd.f32 %v227, %v715
  %v717 = vpop.f32.mrb[0].mxu0
  %v718 = vadd.f32 %v231, %v717
  %719 = vdwg.mxu0
  %720 = vmatprep.subr.bf16.mxu0 %v437
  %721 = vmatpush1.bf16.msra.mxu0 %v436
  %722 = vmatprep.subr.bf16.mxu0 %v445
  %723 = vmatpush1.bf16.msra.mxu0 %v444
  %724 = vmatprep.subr.bf16.mxu0 %v453
  %725 = vmatpush1.bf16.msra.mxu0 %v452
  %726 = vmatprep.subr.bf16.mxu0 %v461
  %727 = vmatpush1.bf16.msra.mxu0 %v460
  %728 = vmatprep.subr.bf16.mxu0 %v469
  %729 = vmatpush1.bf16.msra.mxu0 %v468
  %730 = vmatprep.subr.bf16.mxu0 %v477
  %731 = vmatpush1.bf16.msra.mxu0 %v476
  %732 = vmatprep.subr.bf16.mxu0 %v566
  %733 = vmatpush1.bf16.msra.mxu0 %v563
  %734 = vmatprep.subr.bf16.mxu0 0
  %735 = vmatpush1.bf16.msra.mxu0 0
  %736 = vmatprep.subr.bf16.mxu0 0
  %737 = vmatpush1.bf16.msra.mxu0 0
  %738 = vmatprep.subr.bf16.mxu0 0
  %739 = vmatpush1.bf16.msra.mxu0 0
  %740 = vmatprep.subr.bf16.mxu0 0
  %741 = vmatpush1.bf16.msra.mxu0 0
  %742 = vmatprep.subr.bf16.mxu0 0
  %743 = vmatpush1.bf16.msra.mxu0 0
  %744 = vmatprep.subr.bf16.mxu0 0
  %745 = vmatpush1.bf16.msra.mxu0 0
  %746 = vmatprep.subr.bf16.mxu0 0
  %747 = vmatpush1.bf16.msra.mxu0 0
  %748 = vmatprep.subr.bf16.mxu0 0
  %749 = vmatpush1.bf16.msra.mxu0 0
  %750 = vmatprep.subr.bf16.mxu0 0
  %751 = vmatpush1.bf16.msra.mxu0 0
  %752 = vmatprep.mubr.bf16.mxu0 0
  %753 = vmatmul.mubr.bf16.gmra.mrb[0].mxu0 %v538
  %v754 = vpop.f32.mrb[0].mxu0
  %v755 = vadd.f32 %v235, %v754
  %v756 = vpop.f32.mrb[0].mxu0
  %v757 = vadd.f32 %v239, %v756
  %v758 = vpop.f32.mrb[0].mxu0
  %v759 = vadd.f32 %v235, %v758
  %v760 = vpop.f32.mrb[0].mxu0
  %v761 = vadd.f32 %v239, %v760
  %762 = vmatprep.mubr.bf16.mxu0 0
  %763 = vmatmul.mubr.bf16.gmra.mrb[0].mxu0 %v541
  %v764 = vpop.f32.mrb[0].mxu0
  %v765 = vadd.f32 %v235, %v764
  %v766 = vpop.f32.mrb[0].mxu0
  %v767 = vadd.f32 %v239, %v766
  %v768 = vpop.f32.mrb[0].mxu0
  %v769 = vadd.f32 %v235, %v768
  %v770 = vpop.f32.mrb[0].mxu0
  %v771 = vadd.f32 %v239, %v770
  %772 = vmatprep.mubr.bf16.mxu0 0
  %773 = vmatmul.mubr.bf16.gmra.mrb[0].mxu0 %v544
  %v774 = vpop.f32.mrb[0].mxu0
  %v775 = vadd.f32 %v235, %v774
  %v776 = vpop.f32.mrb[0].mxu0
  %v777 = vadd.f32 %v239, %v776
  %v778 = vpop.f32.mrb[0].mxu0
  %v779 = vadd.f32 %v235, %v778
  %v780 = vpop.f32.mrb[0].mxu0
  %v781 = vadd.f32 %v239, %v780
  %782 = vmatprep.mubr.bf16.mxu0 0
  %783 = vmatmul.mubr.bf16.gmra.mrb[0].mxu0 %v547
  %v784 = vpop.f32.mrb[0].mxu0
  %v785 = vadd.f32 %v235, %v784
  %v786 = vpop.f32.mrb[0].mxu0
  %v787 = vadd.f32 %v239, %v786
  %v788 = vpop.f32.mrb[0].mxu0
  %v789 = vadd.f32 %v235, %v788
  %v790 = vpop.f32.mrb[0].mxu0
  %v791 = vadd.f32 %v239, %v790
  %792 = vdwg.mxu0
  %793 = vmatprep.subr.bf16.mxu0 %v439
  %794 = vmatpush1.bf16.msra.mxu0 %v438
  %795 = vmatprep.subr.bf16.mxu0 %v447
  %796 = vmatpush1.bf16.msra.mxu0 %v446
  %797 = vmatprep.subr.bf16.mxu0 %v455
  %798 = vmatpush1.bf16.msra.mxu0 %v454
  %799 = vmatprep.subr.bf16.mxu0 %v463
  %800 = vmatpush1.bf16.msra.mxu0 %v462
  %801 = vmatprep.subr.bf16.mxu0 %v471
  %802 = vmatpush1.bf16.msra.mxu0 %v470
  %803 = vmatprep.subr.bf16.mxu0 %v479
  %804 = vmatpush1.bf16.msra.mxu0 %v478
  %805 = vmatprep.subr.bf16.mxu0 %v572
  %806 = vmatpush1.bf16.msra.mxu0 %v569
  %807 = vmatprep.subr.bf16.mxu0 0
  %808 = vmatpush1.bf16.msra.mxu0 0
  %809 = vmatprep.subr.bf16.mxu0 0
  %810 = vmatpush1.bf16.msra.mxu0 0
  %811 = vmatprep.subr.bf16.mxu0 0
  %812 = vmatpush1.bf16.msra.mxu0 0
  %813 = vmatprep.subr.bf16.mxu0 0
  %814 = vmatpush1.bf16.msra.mxu0 0
  %815 = vmatprep.subr.bf16.mxu0 0
  %816 = vmatpush1.bf16.msra.mxu0 0
  %817 = vmatprep.subr.bf16.mxu0 0
  %818 = vmatpush1.bf16.msra.mxu0 0
  %819 = vmatprep.subr.bf16.mxu0 0
  %820 = vmatpush1.bf16.msra.mxu0 0
  %821 = vmatprep.subr.bf16.mxu0 0
  %822 = vmatpush1.bf16.msra.mxu0 0
  %823 = vmatprep.subr.bf16.mxu0 0
  %824 = vmatpush1.bf16.msra.mxu0 0
  %825 = vmatprep.mubr.bf16.mxu0 0
  %826 = vmatmul.mubr.bf16.gmra.mrb[0].mxu0 %v538
  %v827 = vpop.f32.mrb[0].mxu0
  %v828 = vadd.f32 %v243, %v827
  %v829 = vpop.f32.mrb[0].mxu0
  %v830 = vadd.f32 %v247, %v829
  %v831 = vpop.f32.mrb[0].mxu0
  %v832 = vadd.f32 %v243, %v831
  %v833 = vpop.f32.mrb[0].mxu0
  %v834 = vadd.f32 %v247, %v833
  %835 = vmatprep.mubr.bf16.mxu0 0
  %836 = vmatmul.mubr.bf16.gmra.mrb[0].mxu0 %v541
  %v837 = vpop.f32.mrb[0].mxu0
  %v838 = vadd.f32 %v243, %v837
  %v839 = vpop.f32.mrb[0].mxu0
  %v840 = vadd.f32 %v247, %v839
  %v841 = vpop.f32.mrb[0].mxu0
  %v842 = vadd.f32 %v243, %v841
  %v843 = vpop.f32.mrb[0].mxu0
  %v844 = vadd.f32 %v247, %v843
  %845 = vmatprep.mubr.bf16.mxu0 0
  %846 = vmatmul.mubr.bf16.gmra.mrb[0].mxu0 %v544
  %v847 = vpop.f32.mrb[0].mxu0
  %v848 = vadd.f32 %v243, %v847
  %v849 = vpop.f32.mrb[0].mxu0
  %v850 = vadd.f32 %v247, %v849
  %v851 = vpop.f32.mrb[0].mxu0
  %v852 = vadd.f32 %v243, %v851
  %v853 = vpop.f32.mrb[0].mxu0
  %v854 = vadd.f32 %v247, %v853
  %855 = vmatprep.mubr.bf16.mxu0 0
  %856 = vmatmul.mubr.bf16.gmra.mrb[0].mxu0 %v547
  %v857 = vpop.f32.mrb[0].mxu0
  %v858 = vadd.f32 %v243, %v857
  %v859 = vpop.f32.mrb[0].mxu0
  %v860 = vadd.f32 %v247, %v859
  %v861 = vpop.f32.mrb[0].mxu0
  %v862 = vadd.f32 %v243, %v861
  %v863 = vpop.f32.mrb[0].mxu0
  %v864 = vadd.f32 %v247, %v863
  %865 = vdwg.mxu0
  %866 = vst [vmem:[#allocation4] sm:$0xff] %v609
  %867 = vst [vmem:[#allocation4 + $0x8] sm:$0xff] %v611
  %868 = vst [vmem:[#allocation4 + $0x10] sm:$0xff] %v682
  %869 = vst [vmem:[#allocation4 + $0x18] sm:$0xff] %v684
  %870 = vst [vmem:[#allocation4 + $0x20] sm:$0xff] %v755
  %871 = vst [vmem:[#allocation4 + $0x28] sm:$0xff] %v757
  %872 = vst [vmem:[#allocation4 + $0x30] sm:$0xff] %v828
  %873 = vst [vmem:[#allocation4 + $0x38] sm:$0xff] %v830
  %874 = vst [vmem:[#allocation4 + $0x40] sm:$0xff] %v613
  %875 = vst [vmem:[#allocation4 + $0x48] sm:$0xff] %v615
  %876 = vst [vmem:[#allocation4 + $0x50] sm:$0xff] %v686
  %877 = vst [vmem:[#allocation4 + $0x58] sm:$0xff] %v688
  %878 = vst [vmem:[#allocation4 + $0x60] sm:$0xff] %v759
  %879 = vst [vmem:[#allocation4 + $0x68] sm:$0xff] %v761
  %880 = vst [vmem:[#allocation4 + $0x70] sm:$0xff] %v832
  %881 = vst [vmem:[#allocation4 + $0x78] sm:$0xff] %v834
  %882 = vst [vmem:[#allocation4 + $0x80] sm:$0xff] %v619
  %883 = vst [vmem:[#allocation4 + $0x88] sm:$0xff] %v621
  %884 = vst [vmem:[#allocation4 + $0x90] sm:$0xff] %v692
  %885 = vst [vmem:[#allocation4 + $0x98] sm:$0xff] %v694
  %886 = vst [vmem:[#allocation4 + $0xa0] sm:$0xff] %v765
  %887 = vst [vmem:[#allocation4 + $0xa8] sm:$0xff] %v767
  %888 = vst [vmem:[#allocation4 + $0xb0] sm:$0xff] %v838
  %889 = vst [vmem:[#allocation4 + $0xb8] sm:$0xff] %v840
  %890 = vst [vmem:[#allocation4 + $0xc0] sm:$0xff] %v623
  %891 = vst [vmem:[#allocation4 + $0xc8] sm:$0xff] %v625
  %892 = vst [vmem:[#allocation4 + $0xd0] sm:$0xff] %v696
  %893 = vst [vmem:[#allocation4 + $0xd8] sm:$0xff] %v698
  %894 = vst [vmem:[#allocation4 + $0xe0] sm:$0xff] %v769
  %895 = vst [vmem:[#allocation4 + $0xe8] sm:$0xff] %v771
  %896 = vst [vmem:[#allocation4 + $0xf0] sm:$0xff] %v842
  %897 = vst [vmem:[#allocation4 + $0xf8] sm:$0xff] %v844
  %898 = vst [vmem:[#allocation4 + $0x100] sm:$0xff] %v629
  %899 = vst [vmem:[#allocation4 + $0x108] sm:$0xff] %v631
  %900 = vst [vmem:[#allocation4 + $0x110] sm:$0xff] %v702
  %901 = vst [vmem:[#allocation4 + $0x118] sm:$0xff] %v704
  %902 = vst [vmem:[#allocation4 + $0x120] sm:$0xff] %v775
  %903 = vst [vmem:[#allocation4 + $0x128] sm:$0xff] %v777
  %904 = vst [vmem:[#allocation4 + $0x130] sm:$0xff] %v848
  %905 = vst [vmem:[#allocation4 + $0x138] sm:$0xff] %v850
  %906 = vst [vmem:[#allocation4 + $0x140] sm:$0xff] %v633
  %907 = vst [vmem:[#allocation4 + $0x148] sm:$0xff] %v635
  %908 = vst [vmem:[#allocation4 + $0x150] sm:$0xff] %v706
  %909 = vst [vmem:[#allocation4 + $0x158] sm:$0xff] %v708
  %910 = vst [vmem:[#allocation4 + $0x160] sm:$0xff] %v779
  %911 = vst [vmem:[#allocation4 + $0x168] sm:$0xff] %v781
  %912 = vst [vmem:[#allocation4 + $0x170] sm:$0xff] %v852
  %913 = vst [vmem:[#allocation4 + $0x178] sm:$0xff] %v854
  %914 = vst [vmem:[#allocation4 + $0x180] sm:$0xff] %v639
  %915 = vst [vmem:[#allocation4 + $0x188] sm:$0xff] %v641
  %916 = vst [vmem:[#allocation4 + $0x190] sm:$0xff] %v712
  %917 = vst [vmem:[#allocation4 + $0x198] sm:$0xff] %v714
  %918 = vst [vmem:[#allocation4 + $0x1a0] sm:$0xff] %v785
  %919 = vst [vmem:[#allocation4 + $0x1a8] sm:$0xff] %v787
  %920 = vst [vmem:[#allocation4 + $0x1b0] sm:$0xff] %v858
  %921 = vst [vmem:[#allocation4 + $0x1b8] sm:$0xff] %v860
  %922 = vst [vmem:[#allocation4 + $0x1c0] sm:$0xff] %v643
  %923 = vst [vmem:[#allocation4 + $0x1c8] sm:$0xff] %v645
  %924 = vst [vmem:[#allocation4 + $0x1d0] sm:$0xff] %v716
  %925 = vst [vmem:[#allocation4 + $0x1d8] sm:$0xff] %v718
  %926 = vst [vmem:[#allocation4 + $0x1e0] sm:$0xff] %v789
  %927 = vst [vmem:[#allocation4 + $0x1e8] sm:$0xff] %v791
  %928 = vst [vmem:[#allocation4 + $0x1f0] sm:$0xff] %v862
  %929 = vst [vmem:[#allocation4 + $0x1f8] sm:$0xff] %v864
  %v930 = vld [vmem:[#allocation2] sm:$0xff]
  %v931 = vld [vmem:[#allocation2 + $0x8] sm:$0xff]
  %v932 = vld [vmem:[#allocation3] sm:$0xff]
  %v933 = vld [vmem:[#allocation3 + $0x8] sm:$0xff]
  %v934 = vld [vmem:[#allocation4] sm:$0xff]
  %v935 = vld [vmem:[#allocation4 + $0x8] sm:$0xff]
  %v936 = vld [vmem:[#allocation4 + $0x10] sm:$0xff]
  %v937 = vld [vmem:[#allocation4 + $0x18] sm:$0xff]
  %v938 = vld [vmem:[#allocation4 + $0x20] sm:$0xff]
  %v939 = vld [vmem:[#allocation4 + $0x28] sm:$0xff]
  %v940 = vld [vmem:[#allocation4 + $0x30] sm:$0xff]
  %v941 = vld [vmem:[#allocation4 + $0x38] sm:$0xff]
  %v942 = vpack.c.bf16 %v930, %v930
  %v943 = vpack.c.bf16 %v931, %v931
  %v1072 = vunpack.c.l.b16 %v78
  %v1073 = vunpack.c.h.b16 %v78
  %v1074 = vunpack.c.l.b16 %v79
  %v1075 = vunpack.c.h.b16 %v79
  %v1076 = vunpack.c.l.b16 %v80
  %v1077 = vunpack.c.h.b16 %v80
  %v1078 = vunpack.c.l.b16 %v81
  %v1079 = vunpack.c.h.b16 %v81
  %v1080 = vunpack.c.l.b16 %v82
  %v1081 = vunpack.c.h.b16 %v82
  %v1082 = vunpack.c.l.b16 %v83
  %v1083 = vunpack.c.h.b16 %v83
  %v1084 = vunpack.c.l.b16 %v84
  %v1085 = vunpack.c.h.b16 %v84
  %v1086 = vunpack.c.l.b16 %v85
  %v1087 = vunpack.c.h.b16 %v85
  %v1088 = vunpack.c.l.b16 %v86
  %v1089 = vunpack.c.h.b16 %v86
  %v1090 = vunpack.c.l.b16 %v87
  %v1091 = vunpack.c.h.b16 %v87
  %v1092 = vunpack.c.l.b16 %v88
  %v1093 = vunpack.c.h.b16 %v88
  %v1094 = vunpack.c.l.b16 %v89
  %v1095 = vunpack.c.h.b16 %v89
  %v1096 = vunpack.c.l.b16 %v90
  %v1097 = vunpack.c.h.b16 %v90
  %v1098 = vunpack.c.l.b16 %v91
  %v1099 = vunpack.c.h.b16 %v91
  %v1100 = vunpack.c.l.b16 %v92
  %v1101 = vunpack.c.h.b16 %v92
  %v1102 = vunpack.c.l.b16 %v93
  %v1103 = vunpack.c.h.b16 %v93
  %v1104 = vunpack.c.l.b16 %v94
  %v1105 = vunpack.c.h.b16 %v94
  %v1106 = vunpack.c.l.b16 %v95
  %v1107 = vunpack.c.h.b16 %v95
  %v1108 = vunpack.c.l.b16 %v96
  %v1109 = vunpack.c.h.b16 %v96
  %v1110 = vunpack.c.l.b16 %v97
  %v1111 = vunpack.c.h.b16 %v97
  %v1112 = vunpack.c.l.b16 %v98
  %v1113 = vunpack.c.h.b16 %v98
  %v1114 = vunpack.c.l.b16 %v99
  %v1115 = vunpack.c.h.b16 %v99
  %v1116 = vunpack.c.l.b16 %v100
  %v1117 = vunpack.c.h.b16 %v100
  %v1118 = vunpack.c.l.b16 %v101
  %v1119 = vunpack.c.h.b16 %v101
  %v1120 = vunpack.c.l.b16 %v102
  %v1121 = vunpack.c.h.b16 %v102
  %v1122 = vunpack.c.l.b16 %v103
  %v1123 = vunpack.c.h.b16 %v103
  %v1124 = vunpack.c.l.b16 %v104
  %v1125 = vunpack.c.h.b16 %v104
  %v1126 = vunpack.c.l.b16 %v105
  %v1127 = vunpack.c.h.b16 %v105
  %v1128 = vunpack.c.l.b16 %v106
  %v1129 = vunpack.c.h.b16 %v106
  %v1130 = vunpack.c.l.b16 %v107
  %v1131 = vunpack.c.h.b16 %v107
  %v1132 = vunpack.c.l.b16 %v108
  %v1133 = vunpack.c.h.b16 %v108
  %v1134 = vunpack.c.l.b16 %v109
  %v1135 = vunpack.c.h.b16 %v109
  %v1136 = vunpack.c.l.b16 %v110
  %v1137 = vunpack.c.h.b16 %v110
  %v1138 = vunpack.c.l.b16 %v111
  %v1139 = vunpack.c.h.b16 %v111
  %v1140 = vunpack.c.l.b16 %v112
  %v1141 = vunpack.c.h.b16 %v112
  %v1142 = vunpack.c.l.b16 %v113
  %v1143 = vunpack.c.h.b16 %v113
  %v1144 = vunpack.c.l.b16 %v114
  %v1145 = vunpack.c.h.b16 %v114
  %v1146 = vunpack.c.l.b16 %v115
  %v1147 = vunpack.c.h.b16 %v115
  %v1148 = vunpack.c.l.b16 %v116
  %v1149 = vunpack.c.h.b16 %v116
  %v1150 = vunpack.c.l.b16 %v117
  %v1151 = vunpack.c.h.b16 %v117
  %v1152 = vunpack.c.l.b16 %v118
  %v1153 = vunpack.c.h.b16 %v118
  %v1154 = vunpack.c.l.b16 %v119
  %v1155 = vunpack.c.h.b16 %v119
  %v1156 = vunpack.c.l.b16 %v120
  %v1157 = vunpack.c.h.b16 %v120
  %v1158 = vunpack.c.l.b16 %v121
  %v1159 = vunpack.c.h.b16 %v121
  %v1160 = vunpack.c.l.b16 %v122
  %v1161 = vunpack.c.h.b16 %v122
  %v1162 = vunpack.c.l.b16 %v123
  %v1163 = vunpack.c.h.b16 %v123
  %v1164 = vunpack.c.l.b16 %v124
  %v1165 = vunpack.c.h.b16 %v124
  %v1166 = vunpack.c.l.b16 %v125
  %v1167 = vunpack.c.h.b16 %v125
  %v1168 = vunpack.c.l.b16 %v126
  %v1169 = vunpack.c.h.b16 %v126
  %v1170 = vunpack.c.l.b16 %v127
  %v1171 = vunpack.c.h.b16 %v127
  %v1172 = vunpack.c.l.b16 %v128
  %v1173 = vunpack.c.h.b16 %v128
  %v1174 = vunpack.c.l.b16 %v129
  %v1175 = vunpack.c.h.b16 %v129
  %v1176 = vunpack.c.l.b16 %v130
  %v1177 = vunpack.c.h.b16 %v130
  %v1178 = vunpack.c.l.b16 %v131
  %v1179 = vunpack.c.h.b16 %v131
  %v1180 = vunpack.c.l.b16 %v132
  %v1181 = vunpack.c.h.b16 %v132
  %v1182 = vunpack.c.l.b16 %v133
  %v1183 = vunpack.c.h.b16 %v133
  %v1184 = vunpack.c.l.b16 %v134
  %v1185 = vunpack.c.h.b16 %v134
  %v1186 = vunpack.c.l.b16 %v135
  %v1187 = vunpack.c.h.b16 %v135
  %v1188 = vunpack.c.l.b16 %v136
  %v1189 = vunpack.c.h.b16 %v136
  %v1190 = vunpack.c.l.b16 %v137
  %v1191 = vunpack.c.h.b16 %v137
  %v1192 = vunpack.c.l.b16 %v138
  %v1193 = vunpack.c.h.b16 %v138
  %v1194 = vunpack.c.l.b16 %v139
  %v1195 = vunpack.c.h.b16 %v139
  %v1196 = vunpack.c.l.b16 %v140
  %v1197 = vunpack.c.h.b16 %v140
  %v1198 = vunpack.c.l.b16 %v141
  %v1199 = vunpack.c.h.b16 %v141
  %v1200 = vunpack.c.l.b16 %v142
  %v1201 = vunpack.c.h.b16 %v142
  %v1202 = vunpack.c.l.b16 %v143
  %v1203 = vunpack.c.h.b16 %v143
  %v1204 = vunpack.c.l.b16 %v144
  %v1205 = vunpack.c.h.b16 %v144
  %v1206 = vunpack.c.l.b16 %v145
  %v1207 = vunpack.c.h.b16 %v145
  %v1208 = vunpack.c.l.b16 %v146
  %v1209 = vunpack.c.h.b16 %v146
  %v1210 = vunpack.c.l.b16 %v147
  %v1211 = vunpack.c.h.b16 %v147
  %v1212 = vunpack.c.l.b16 %v148
  %v1213 = vunpack.c.h.b16 %v148
  %v1214 = vunpack.c.l.b16 %v149
  %v1215 = vunpack.c.h.b16 %v149
  %v1216 = vunpack.c.l.b16 %v150
  %v1217 = vunpack.c.h.b16 %v150
  %v1218 = vunpack.c.l.b16 %v151
  %v1219 = vunpack.c.h.b16 %v151
  %v1220 = vunpack.c.l.b16 %v152
  %v1221 = vunpack.c.h.b16 %v152
  %v1222 = vunpack.c.l.b16 %v153
  %v1223 = vunpack.c.h.b16 %v153
  %v1224 = vunpack.c.l.b16 %v154
  %v1225 = vunpack.c.h.b16 %v154
  %v1226 = vunpack.c.l.b16 %v155
  %v1227 = vunpack.c.h.b16 %v155
  %v1228 = vunpack.c.l.b16 %v156
  %v1229 = vunpack.c.h.b16 %v156
  %v1230 = vunpack.c.l.b16 %v157
  %v1231 = vunpack.c.h.b16 %v157
  %v1232 = vunpack.c.l.b16 %v158
  %v1233 = vunpack.c.h.b16 %v158
  %v1234 = vunpack.c.l.b16 %v159
  %v1235 = vunpack.c.h.b16 %v159
  %v1236 = vunpack.c.l.b16 %v160
  %v1237 = vunpack.c.h.b16 %v160
  %v1238 = vunpack.c.l.b16 %v161
  %v1239 = vunpack.c.h.b16 %v161
  %v1240 = vunpack.c.l.b16 %v162
  %v1241 = vunpack.c.h.b16 %v162
  %v1242 = vunpack.c.l.b16 %v163
  %v1243 = vunpack.c.h.b16 %v163
  %v1244 = vunpack.c.l.b16 %v164
  %v1245 = vunpack.c.h.b16 %v164
  %v1246 = vunpack.c.l.b16 %v165
  %v1247 = vunpack.c.h.b16 %v165
  %v1248 = vunpack.c.l.b16 %v166
  %v1249 = vunpack.c.h.b16 %v166
  %v1250 = vunpack.c.l.b16 %v167
  %v1251 = vunpack.c.h.b16 %v167
  %v1252 = vunpack.c.l.b16 %v168
  %v1253 = vunpack.c.h.b16 %v168
  %v1254 = vunpack.c.l.b16 %v169
  %v1255 = vunpack.c.h.b16 %v169
  %v1256 = vunpack.c.l.b16 %v170
  %v1257 = vunpack.c.h.b16 %v170
  %v1258 = vunpack.c.l.b16 %v171
  %v1259 = vunpack.c.h.b16 %v171
  %v1260 = vunpack.c.l.b16 %v172
  %v1261 = vunpack.c.h.b16 %v172
  %v1262 = vunpack.c.l.b16 %v173
  %v1263 = vunpack.c.h.b16 %v173
  %v1264 = vunpack.c.l.b16 %v174
  %v1265 = vunpack.c.h.b16 %v174
  %v1266 = vunpack.c.l.b16 %v175
  %v1267 = vunpack.c.h.b16 %v175
  %v1268 = vunpack.c.l.b16 %v176
  %v1269 = vunpack.c.h.b16 %v176
  %v1270 = vunpack.c.l.b16 %v177
  %v1271 = vunpack.c.h.b16 %v177
  %v1272 = vunpack.c.l.b16 %v178
  %v1273 = vunpack.c.h.b16 %v178
  %v1274 = vunpack.c.l.b16 %v179
  %v1275 = vunpack.c.h.b16 %v179
  %v1276 = vunpack.c.l.b16 %v180
  %v1277 = vunpack.c.h.b16 %v180
  %v1278 = vunpack.c.l.b16 %v181
  %v1279 = vunpack.c.h.b16 %v181
  %v1280 = vunpack.c.l.b16 %v182
  %v1281 = vunpack.c.h.b16 %v182
  %v1282 = vunpack.c.l.b16 %v183
  %v1283 = vunpack.c.h.b16 %v183
  %v1284 = vunpack.c.l.b16 %v184
  %v1285 = vunpack.c.h.b16 %v184
  %v1286 = vunpack.c.l.b16 %v185
  %v1287 = vunpack.c.h.b16 %v185
  %v1288 = vunpack.c.l.b16 %v186
  %v1289 = vunpack.c.h.b16 %v186
  %v1290 = vunpack.c.l.b16 %v187
  %v1291 = vunpack.c.h.b16 %v187
  %v1292 = vunpack.c.l.b16 %v188
  %v1293 = vunpack.c.h.b16 %v188
  %v1294 = vunpack.c.l.b16 %v189
  %v1295 = vunpack.c.h.b16 %v189
  %v1296 = vunpack.c.l.b16 %v190
  %v1297 = vunpack.c.h.b16 %v190
  %v1298 = vunpack.c.l.b16 %v191
  %v1299 = vunpack.c.h.b16 %v191
  %v1300 = vunpack.c.l.b16 %v192
  %v1301 = vunpack.c.h.b16 %v192
  %v1302 = vunpack.c.l.b16 %v193
  %v1303 = vunpack.c.h.b16 %v193
  %v1304 = vunpack.c.l.b16 %v194
  %v1305 = vunpack.c.h.b16 %v194
  %v1306 = vunpack.c.l.b16 %v195
  %v1307 = vunpack.c.h.b16 %v195
  %v1308 = vunpack.c.l.b16 %v196
  %v1309 = vunpack.c.h.b16 %v196
  %v1310 = vunpack.c.l.b16 %v197
  %v1311 = vunpack.c.h.b16 %v197
  %v1312 = vunpack.c.l.b16 %v198
  %v1313 = vunpack.c.h.b16 %v198
  %v1314 = vunpack.c.l.b16 %v199
  %v1315 = vunpack.c.h.b16 %v199
  %v1316 = vunpack.c.l.b16 %v200
  %v1317 = vunpack.c.h.b16 %v200
  %v1318 = vunpack.c.l.b16 %v201
  %v1319 = vunpack.c.h.b16 %v201
  %v1320 = vunpack.c.l.b16 %v202
  %v1321 = vunpack.c.h.b16 %v202
  %v1322 = vunpack.c.l.b16 %v203
  %v1323 = vunpack.c.h.b16 %v203
  %v1324 = vunpack.c.l.b16 %v204
  %v1325 = vunpack.c.h.b16 %v204
  %v1326 = vunpack.c.l.b16 %v205
  %v1327 = vunpack.c.h.b16 %v205
  %v1328 = vpack.c.b16 %v1080, %v1072
  %v1329 = vpack.c.b16 %v1081, %v1073
  %v1330 = vpack.c.b16 %v1082, %v1074
  %v1331 = vpack.c.b16 %v1083, %v1075
  %v1332 = vpack.c.b16 %v1084, %v1076
  %v1333 = vpack.c.b16 %v1085, %v1077
  %v1334 = vpack.c.b16 %v1086, %v1078
  %v1335 = vpack.c.b16 %v1087, %v1079
  %v1336 = vpack.c.b16 %v1096, %v1088
  %v1337 = vpack.c.b16 %v1097, %v1089
  %v1338 = vpack.c.b16 %v1098, %v1090
  %v1339 = vpack.c.b16 %v1099, %v1091
  %v1340 = vpack.c.b16 %v1100, %v1092
  %v1341 = vpack.c.b16 %v1101, %v1093
  %v1342 = vpack.c.b16 %v1102, %v1094
  %v1343 = vpack.c.b16 %v1103, %v1095
  %v1344 = vpack.c.b16 %v1112, %v1104
  %v1345 = vpack.c.b16 %v1113, %v1105
  %v1346 = vpack.c.b16 %v1114, %v1106
  %v1347 = vpack.c.b16 %v1115, %v1107
  %v1348 = vpack.c.b16 %v1116, %v1108
  %v1349 = vpack.c.b16 %v1117, %v1109
  %v1350 = vpack.c.b16 %v1118, %v1110
  %v1351 = vpack.c.b16 %v1119, %v1111
  %v1352 = vpack.c.b16 %v1128, %v1120
  %v1353 = vpack.c.b16 %v1129, %v1121
  %v1354 = vpack.c.b16 %v1130, %v1122
  %v1355 = vpack.c.b16 %v1131, %v1123
  %v1356 = vpack.c.b16 %v1132, %v1124
  %v1357 = vpack.c.b16 %v1133, %v1125
  %v1358 = vpack.c.b16 %v1134, %v1126
  %v1359 = vpack.c.b16 %v1135, %v1127
  %v1360 = vpack.c.b16 %v1144, %v1136
  %v1361 = vpack.c.b16 %v1145, %v1137
  %v1362 = vpack.c.b16 %v1146, %v1138
  %v1363 = vpack.c.b16 %v1147, %v1139
  %v1364 = vpack.c.b16 %v1148, %v1140
  %v1365 = vpack.c.b16 %v1149, %v1141
  %v1366 = vpack.c.b16 %v1150, %v1142
  %v1367 = vpack.c.b16 %v1151, %v1143
  %v1368 = vpack.c.b16 %v1160, %v1152
  %v1369 = vpack.c.b16 %v1161, %v1153
  %v1370 = vpack.c.b16 %v1162, %v1154
  %v1371 = vpack.c.b16 %v1163, %v1155
  %v1372 = vpack.c.b16 %v1164, %v1156
  %v1373 = vpack.c.b16 %v1165, %v1157
  %v1374 = vpack.c.b16 %v1166, %v1158
  %v1375 = vpack.c.b16 %v1167, %v1159
  %v1376 = vpack.c.b16 %v1176, %v1168
  %v1377 = vpack.c.b16 %v1177, %v1169
  %v1378 = vpack.c.b16 %v1178, %v1170
  %v1379 = vpack.c.b16 %v1179, %v1171
  %v1380 = vpack.c.b16 %v1180, %v1172
  %v1381 = vpack.c.b16 %v1181, %v1173
  %v1382 = vpack.c.b16 %v1182, %v1174
  %v1383 = vpack.c.b16 %v1183, %v1175
  %v1384 = vpack.c.b16 %v1192, %v1184
  %v1385 = vpack.c.b16 %v1193, %v1185
  %v1386 = vpack.c.b16 %v1194, %v1186
  %v1387 = vpack.c.b16 %v1195, %v1187
  %v1388 = vpack.c.b16 %v1196, %v1188
  %v1389 = vpack.c.b16 %v1197, %v1189
  %v1390 = vpack.c.b16 %v1198, %v1190
  %v1391 = vpack.c.b16 %v1199, %v1191
  %v1392 = vpack.c.b16 %v1208, %v1200
  %v1393 = vpack.c.b16 %v1209, %v1201
  %v1394 = vpack.c.b16 %v1210, %v1202
  %v1395 = vpack.c.b16 %v1211, %v1203
  %v1396 = vpack.c.b16 %v1212, %v1204
  %v1397 = vpack.c.b16 %v1213, %v1205
  %v1398 = vpack.c.b16 %v1214, %v1206
  %v1399 = vpack.c.b16 %v1215, %v1207
  %v1400 = vpack.c.b16 %v1224, %v1216
  %v1401 = vpack.c.b16 %v1225, %v1217
  %v1402 = vpack.c.b16 %v1226, %v1218
  %v1403 = vpack.c.b16 %v1227, %v1219
  %v1404 = vpack.c.b16 %v1228, %v1220
  %v1405 = vpack.c.b16 %v1229, %v1221
  %v1406 = vpack.c.b16 %v1230, %v1222
  %v1407 = vpack.c.b16 %v1231, %v1223
  %v1408 = vpack.c.b16 %v1240, %v1232
  %v1409 = vpack.c.b16 %v1241, %v1233
  %v1410 = vpack.c.b16 %v1242, %v1234
  %v1411 = vpack.c.b16 %v1243, %v1235
  %v1412 = vpack.c.b16 %v1244, %v1236
  %v1413 = vpack.c.b16 %v1245, %v1237
  %v1414 = vpack.c.b16 %v1246, %v1238
  %v1415 = vpack.c.b16 %v1247, %v1239
  %v1416 = vpack.c.b16 %v1256, %v1248
  %v1417 = vpack.c.b16 %v1257, %v1249
  %v1418 = vpack.c.b16 %v1258, %v1250
  %v1419 = vpack.c.b16 %v1259, %v1251
  %v1420 = vpack.c.b16 %v1260, %v1252
  %v1421 = vpack.c.b16 %v1261, %v1253
  %v1422 = vpack.c.b16 %v1262, %v1254
  %v1423 = vpack.c.b16 %v1263, %v1255
  %v1424 = vpack.c.b16 %v1272, %v1264
  %v1425 = vpack.c.b16 %v1273, %v1265
  %v1426 = vpack.c.b16 %v1274, %v1266
  %v1427 = vpack.c.b16 %v1275, %v1267
  %v1428 = vpack.c.b16 %v1276, %v1268
  %v1429 = vpack.c.b16 %v1277, %v1269
  %v1430 = vpack.c.b16 %v1278, %v1270
  %v1431 = vpack.c.b16 %v1279, %v1271
  %v1432 = vpack.c.b16 %v1288, %v1280
  %v1433 = vpack.c.b16 %v1289, %v1281
  %v1434 = vpack.c.b16 %v1290, %v1282
  %v1435 = vpack.c.b16 %v1291, %v1283
  %v1436 = vpack.c.b16 %v1292, %v1284
  %v1437 = vpack.c.b16 %v1293, %v1285
  %v1438 = vpack.c.b16 %v1294, %v1286
  %v1439 = vpack.c.b16 %v1295, %v1287
  %v1440 = vpack.c.b16 %v1304, %v1296
  %v1441 = vpack.c.b16 %v1305, %v1297
  %v1442 = vpack.c.b16 %v1306, %v1298
  %v1443 = vpack.c.b16 %v1307, %v1299
  %v1444 = vpack.c.b16 %v1308, %v1300
  %v1445 = vpack.c.b16 %v1309, %v1301
  %v1446 = vpack.c.b16 %v1310, %v1302
  %v1447 = vpack.c.b16 %v1311, %v1303
  %v1448 = vpack.c.b16 %v1320, %v1312
  %v1449 = vpack.c.b16 %v1321, %v1313
  %v1450 = vpack.c.b16 %v1322, %v1314
  %v1451 = vpack.c.b16 %v1323, %v1315
  %v1452 = vpack.c.b16 %v1324, %v1316
  %v1453 = vpack.c.b16 %v1325, %v1317
  %v1454 = vpack.c.b16 %v1326, %v1318
  %v1455 = vpack.c.b16 %v1327, %v1319
  %1584 = vmatprep.subr.bf16.mxu0 %v1329
  %1585 = vmatpush1.bf16.msra.mxu0 %v1328
  %1586 = vmatprep.subr.bf16.mxu0 %v1337
  %1587 = vmatpush1.bf16.msra.mxu0 %v1336
  %1588 = vmatprep.subr.bf16.mxu0 %v1345
  %1589 = vmatpush1.bf16.msra.mxu0 %v1344
  %1590 = vmatprep.subr.bf16.mxu0 %v1353
  %1591 = vmatpush1.bf16.msra.mxu0 %v1352
  %1592 = vmatprep.subr.bf16.mxu0 %v1361
  %1593 = vmatpush1.bf16.msra.mxu0 %v1360
  %1594 = vmatprep.subr.bf16.mxu0 %v1369
  %1595 = vmatpush1.bf16.msra.mxu0 %v1368
  %1596 = vmatprep.subr.bf16.mxu0 %v1377
  %1597 = vmatpush1.bf16.msra.mxu0 %v1376
  %1598 = vmatprep.subr.bf16.mxu0 %v1385
  %1599 = vmatpush1.bf16.msra.mxu0 %v1384
  %1600 = vmatprep.subr.bf16.mxu0 %v1393
  %1601 = vmatpush1.bf16.msra.mxu0 %v1392
  %1602 = vmatprep.subr.bf16.mxu0 %v1401
  %1603 = vmatpush1.bf16.msra.mxu0 %v1400
  %1604 = vmatprep.subr.bf16.mxu0 %v1409
  %1605 = vmatpush1.bf16.msra.mxu0 %v1408
  %1606 = vmatprep.subr.bf16.mxu0 %v1417
  %1607 = vmatpush1.bf16.msra.mxu0 %v1416
  %1608 = vmatprep.subr.bf16.mxu0 %v1425
  %1609 = vmatpush1.bf16.msra.mxu0 %v1424
  %1610 = vmatprep.subr.bf16.mxu0 %v1433
  %1611 = vmatpush1.bf16.msra.mxu0 %v1432
  %1612 = vmatprep.subr.bf16.mxu0 %v1441
  %1613 = vmatpush1.bf16.msra.mxu0 %v1440
  %1614 = vmatprep.subr.bf16.mxu0 %v1449
  %1615 = vmatpush1.bf16.msra.mxu0 %v1448
  %1616 = vmatprep.mubr.bf16.mxu0 %v943
  %1617 = vmatmul.mubr.bf16.gmra.mrb[0].mxu0 %v942
  %v1618 = vpop.f32.mrb[0].mxu0
  %v1619 = vadd.f32 0.0, %v1618
  %v1620 = vpop.f32.mrb[0].mxu0
  %v1621 = vadd.f32 0.0, %v1620
  %v1622 = vpop.f32.mrb[0].mxu0
  %v1623 = vpop.f32.mrb[0].mxu0
  %1624 = vdwg.mxu0
  %1625 = vmatprep.subr.bf16.mxu0 %v1331
  %1626 = vmatpush1.bf16.msra.mxu0 %v1330
  %1627 = vmatprep.subr.bf16.mxu0 %v1339
  %1628 = vmatpush1.bf16.msra.mxu0 %v1338
  %1629 = vmatprep.subr.bf16.mxu0 %v1347
  %1630 = vmatpush1.bf16.msra.mxu0 %v1346
  %1631 = vmatprep.subr.bf16.mxu0 %v1355
  %1632 = vmatpush1.bf16.msra.mxu0 %v1354
  %1633 = vmatprep.subr.bf16.mxu0 %v1363
  %1634 = vmatpush1.bf16.msra.mxu0 %v1362
  %1635 = vmatprep.subr.bf16.mxu0 %v1371
  %1636 = vmatpush1.bf16.msra.mxu0 %v1370
  %1637 = vmatprep.subr.bf16.mxu0 %v1379
  %1638 = vmatpush1.bf16.msra.mxu0 %v1378
  %1639 = vmatprep.subr.bf16.mxu0 %v1387
  %1640 = vmatpush1.bf16.msra.mxu0 %v1386
  %1641 = vmatprep.subr.bf16.mxu0 %v1395
  %1642 = vmatpush1.bf16.msra.mxu0 %v1394
  %1643 = vmatprep.subr.bf16.mxu0 %v1403
  %1644 = vmatpush1.bf16.msra.mxu0 %v1402
  %1645 = vmatprep.subr.bf16.mxu0 %v1411
  %1646 = vmatpush1.bf16.msra.mxu0 %v1410
  %1647 = vmatprep.subr.bf16.mxu0 %v1419
  %1648 = vmatpush1.bf16.msra.mxu0 %v1418
  %1649 = vmatprep.subr.bf16.mxu0 %v1427
  %1650 = vmatpush1.bf16.msra.mxu0 %v1426
  %1651 = vmatprep.subr.bf16.mxu0 %v1435
  %1652 = vmatpush1.bf16.msra.mxu0 %v1434
  %1653 = vmatprep.subr.bf16.mxu0 %v1443
  %1654 = vmatpush1.bf16.msra.mxu0 %v1442
  %1655 = vmatprep.subr.bf16.mxu0 %v1451
  %1656 = vmatpush1.bf16.msra.mxu0 %v1450
  %1657 = vmatprep.mubr.bf16.mxu0 %v943
  %1658 = vmatmul.mubr.bf16.gmra.mrb[0].mxu0 %v942
  %v1659 = vpop.f32.mrb[0].mxu0
  %v1660 = vadd.f32 0.0, %v1659
  %v1661 = vpop.f32.mrb[0].mxu0
  %v1662 = vadd.f32 0.0, %v1661
  %v1663 = vpop.f32.mrb[0].mxu0
  %v1664 = vpop.f32.mrb[0].mxu0
  %1665 = vdwg.mxu0
  %1666 = vmatprep.subr.bf16.mxu0 %v1333
  %1667 = vmatpush1.bf16.msra.mxu0 %v1332
  %1668 = vmatprep.subr.bf16.mxu0 %v1341
  %1669 = vmatpush1.bf16.msra.mxu0 %v1340
  %1670 = vmatprep.subr.bf16.mxu0 %v1349
  %1671 = vmatpush1.bf16.msra.mxu0 %v1348
  %1672 = vmatprep.subr.bf16.mxu0 %v1357
  %1673 = vmatpush1.bf16.msra.mxu0 %v1356
  %1674 = vmatprep.subr.bf16.mxu0 %v1365
  %1675 = vmatpush1.bf16.msra.mxu0 %v1364
  %1676 = vmatprep.subr.bf16.mxu0 %v1373
  %1677 = vmatpush1.bf16.msra.mxu0 %v1372
  %1678 = vmatprep.subr.bf16.mxu0 %v1381
  %1679 = vmatpush1.bf16.msra.mxu0 %v1380
  %1680 = vmatprep.subr.bf16.mxu0 %v1389
  %1681 = vmatpush1.bf16.msra.mxu0 %v1388
  %1682 = vmatprep.subr.bf16.mxu0 %v1397
  %1683 = vmatpush1.bf16.msra.mxu0 %v1396
  %1684 = vmatprep.subr.bf16.mxu0 %v1405
  %1685 = vmatpush1.bf16.msra.mxu0 %v1404
  %1686 = vmatprep.subr.bf16.mxu0 %v1413
  %1687 = vmatpush1.bf16.msra.mxu0 %v1412
  %1688 = vmatprep.subr.bf16.mxu0 %v1421
  %1689 = vmatpush1.bf16.msra.mxu0 %v1420
  %1690 = vmatprep.subr.bf16.mxu0 %v1429
  %1691 = vmatpush1.bf16.msra.mxu0 %v1428
  %1692 = vmatprep.subr.bf16.mxu0 %v1437
  %1693 = vmatpush1.bf16.msra.mxu0 %v1436
  %1694 = vmatprep.subr.bf16.mxu0 %v1445
  %1695 = vmatpush1.bf16.msra.mxu0 %v1444
  %1696 = vmatprep.subr.bf16.mxu0 %v1453
  %1697 = vmatpush1.bf16.msra.mxu0 %v1452
  %1698 = vmatprep.mubr.bf16.mxu0 %v943
  %1699 = vmatmul.mubr.bf16.gmra.mrb[0].mxu0 %v942
  %v1700 = vpop.f32.mrb[0].mxu0
  %v1701 = vadd.f32 0.0, %v1700
  %v1702 = vpop.f32.mrb[0].mxu0
  %v1703 = vadd.f32 0.0, %v1702
  %v1704 = vpop.f32.mrb[0].mxu0
  %v1705 = vpop.f32.mrb[0].mxu0
  %1706 = vdwg.mxu0
  %1707 = vmatprep.subr.bf16.mxu0 %v1335
  %1708 = vmatpush1.bf16.msra.mxu0 %v1334
  %1709 = vmatprep.subr.bf16.mxu0 %v1343
  %1710 = vmatpush1.bf16.msra.mxu0 %v1342
  %1711 = vmatprep.subr.bf16.mxu0 %v1351
  %1712 = vmatpush1.bf16.msra.mxu0 %v1350
  %1713 = vmatprep.subr.bf16.mxu0 %v1359
  %1714 = vmatpush1.bf16.msra.mxu0 %v1358
  %1715 = vmatprep.subr.bf16.mxu0 %v1367
  %1716 = vmatpush1.bf16.msra.mxu0 %v1366
  %1717 = vmatprep.subr.bf16.mxu0 %v1375
  %1718 = vmatpush1.bf16.msra.mxu0 %v1374
  %1719 = vmatprep.subr.bf16.mxu0 %v1383
  %1720 = vmatpush1.bf16.msra.mxu0 %v1382
  %1721 = vmatprep.subr.bf16.mxu0 %v1391
  %1722 = vmatpush1.bf16.msra.mxu0 %v1390
  %1723 = vmatprep.subr.bf16.mxu0 %v1399
  %1724 = vmatpush1.bf16.msra.mxu0 %v1398
  %1725 = vmatprep.subr.bf16.mxu0 %v1407
  %1726 = vmatpush1.bf16.msra.mxu0 %v1406
  %1727 = vmatprep.subr.bf16.mxu0 %v1415
  %1728 = vmatpush1.bf16.msra.mxu0 %v1414
  %1729 = vmatprep.subr.bf16.mxu0 %v1423
  %1730 = vmatpush1.bf16.msra.mxu0 %v1422
  %1731 = vmatprep.subr.bf16.mxu0 %v1431
  %1732 = vmatpush1.bf16.msra.mxu0 %v1430
  %1733 = vmatprep.subr.bf16.mxu0 %v1439
  %1734 = vmatpush1.bf16.msra.mxu0 %v1438
  %1735 = vmatprep.subr.bf16.mxu0 %v1447
  %1736 = vmatpush1.bf16.msra.mxu0 %v1446
  %1737 = vmatprep.subr.bf16.mxu0 %v1455
  %1738 = vmatpush1.bf16.msra.mxu0 %v1454
  %1739 = vmatprep.mubr.bf16.mxu0 %v943
  %1740 = vmatmul.mubr.bf16.gmra.mrb[0].mxu0 %v942
  %v1741 = vpop.f32.mrb[0].mxu0
  %v1742 = vadd.f32 0.0, %v1741
  %v1743 = vpop.f32.mrb[0].mxu0
  %v1744 = vadd.f32 0.0, %v1743
  %v1745 = vpop.f32.mrb[0].mxu0
  %v1746 = vpop.f32.mrb[0].mxu0
  %1747 = vdwg.mxu0
  %v1748 = vadd.f32 %v934, %v1619
  %v1749 = vadd.f32 %v935, %v1621
  %v1750 = vadd.f32 %v936, %v1660
  %v1751 = vadd.f32 %v937, %v1662
  %v1752 = vadd.f32 %v938, %v1701
  %v1753 = vadd.f32 %v939, %v1703
  %v1754 = vadd.f32 %v940, %v1742
  %v1755 = vadd.f32 %v941, %v1744
  %v1756 = vxor.u32 %v1748, 2147483648
  %v1757 = vxor.u32 %v1749, 2147483648
  %v1758 = vmul.f32 %v1756, 1.442695
  %v1759 = vpow.pop %v1758
  %v1760 = vmul.f32 %v1757, 1.442695
  %v1761 = vpow.pop %v1760
  %v1762 = vadd.f32 %v1759, 1.0
  %v1763 = vadd.f32 %v1761, 1.0
  %v1764 = vrcp.pop %v1762
  %v1765 = vmul.f32 1.0, %v1764
  %v1766 = vrcp.pop %v1763
  %v1767 = vmul.f32 1.0, %v1766
  %v1768 = vxor.u32 %v1750, 2147483648
  %v1769 = vxor.u32 %v1751, 2147483648
  %v1770 = vmul.f32 %v1768, 1.442695
  %v1771 = vpow.pop %v1770
  %v1772 = vmul.f32 %v1769, 1.442695
  %v1773 = vpow.pop %v1772
  %v1774 = vadd.f32 %v1771, 1.0
  %v1775 = vadd.f32 %v1773, 1.0
  %v1776 = vrcp.pop %v1774
  %v1777 = vmul.f32 1.0, %v1776
  %v1778 = vrcp.pop %v1775
  %v1779 = vmul.f32 1.0, %v1778
  %v1780 = vtanh.pop %v1752
  %v1781 = vtanh.pop %v1753
  %v1782 = vxor.u32 %v1754, 2147483648
  %v1783 = vxor.u32 %v1755, 2147483648
  %v1784 = vmul.f32 %v1782, 1.442695
  %v1785 = vpow.pop %v1784
  %v1786 = vmul.f32 %v1783, 1.442695
  %v1787 = vpow.pop %v1786
  %v1788 = vadd.f32 %v1785, 1.0
  %v1789 = vadd.f32 %v1787, 1.0
  %v1790 = vrcp.pop %v1788
  %v1791 = vmul.f32 1.0, %v1790
  %v1792 = vrcp.pop %v1789
  %v1793 = vmul.f32 1.0, %v1792
  %v1794 = vmul.f32 %v1777, %v932
  %v1795 = vmul.f32 %v1779, %v933
  %v1796 = vmul.f32 %v1765, %v1780
  %v1797 = vmul.f32 %v1767, %v1781
  %v1798 = vadd.f32 %v1794, %v1796
  %v1799 = vadd.f32 %v1795, %v1797
  %v1800 = vtanh.pop %v1798
  %v1801 = vtanh.pop %v1799
  %v1802 = vmul.f32 %v1791, %v1800
  %v1803 = vmul.f32 %v1793, %v1801
  %v1804 = vld [vmem:[#allocation4 + $0x40] sm:$0xff]
  %v1805 = vld [vmem:[#allocation4 + $0x48] sm:$0xff]
  %v1806 = vld [vmem:[#allocation4 + $0x50] sm:$0xff]
  %v1807 = vld [vmem:[#allocation4 + $0x58] sm:$0xff]
  %v1808 = vld [vmem:[#allocation4 + $0x60] sm:$0xff]
  %v1809 = vld [vmem:[#allocation4 + $0x68] sm:$0xff]
  %v1810 = vld [vmem:[#allocation4 + $0x70] sm:$0xff]
  %v1811 = vld [vmem:[#allocation4 + $0x78] sm:$0xff]
  %v1812 = vpack.c.bf16 %v1802, %v1802
  %v1813 = vpack.c.bf16 %v1803, %v1803
  %1814 = vmatprep.subr.bf16.mxu0 %v1329
  %1815 = vmatpush1.bf16.msra.mxu0 %v1328
  %1816 = vmatprep.subr.bf16.mxu0 %v1337
  %1817 = vmatpush1.bf16.msra.mxu0 %v1336
  %1818 = vmatprep.subr.bf16.mxu0 %v1345
  %1819 = vmatpush1.bf16.msra.mxu0 %v1344
  %1820 = vmatprep.subr.bf16.mxu0 %v1353
  %1821 = vmatpush1.bf16.msra.mxu0 %v1352
  %1822 = vmatprep.subr.bf16.mxu0 %v1361
  %1823 = vmatpush1.bf16.msra.mxu0 %v1360
  %1824 = vmatprep.subr.bf16.mxu0 %v1369
  %1825 = vmatpush1.bf16.msra.mxu0 %v1368
  %1826 = vmatprep.subr.bf16.mxu0 %v1377
  %1827 = vmatpush1.bf16.msra.mxu0 %v1376
  %1828 = vmatprep.subr.bf16.mxu0 %v1385
  %1829 = vmatpush1.bf16.msra.mxu0 %v1384
  %1830 = vmatprep.subr.bf16.mxu0 %v1393
  %1831 = vmatpush1.bf16.msra.mxu0 %v1392
  %1832 = vmatprep.subr.bf16.mxu0 %v1401
  %1833 = vmatpush1.bf16.msra.mxu0 %v1400
  %1834 = vmatprep.subr.bf16.mxu0 %v1409
  %1835 = vmatpush1.bf16.msra.mxu0 %v1408
  %1836 = vmatprep.subr.bf16.mxu0 %v1417
  %1837 = vmatpush1.bf16.msra.mxu0 %v1416
  %1838 = vmatprep.subr.bf16.mxu0 %v1425
  %1839 = vmatpush1.bf16.msra.mxu0 %v1424
  %1840 = vmatprep.subr.bf16.mxu0 %v1433
  %1841 = vmatpush1.bf16.msra.mxu0 %v1432
  %1842 = vmatprep.subr.bf16.mxu0 %v1441
  %1843 = vmatpush1.bf16.msra.mxu0 %v1440
  %1844 = vmatprep.subr.bf16.mxu0 %v1449
  %1845 = vmatpush1.bf16.msra.mxu0 %v1448
  %1846 = vmatprep.mubr.bf16.mxu0 %v1813
  %1847 = vmatmul.mubr.bf16.gmra.mrb[0].mxu0 %v1812
  %v1848 = vpop.f32.mrb[0].mxu0
  %v1849 = vadd.f32 0.0, %v1848
  %v1850 = vpop.f32.mrb[0].mxu0
  %v1851 = vadd.f32 0.0, %v1850
  %v1852 = vpop.f32.mrb[0].mxu0
  %v1853 = vpop.f32.mrb[0].mxu0
  %1854 = vdwg.mxu0
  %1855 = vmatprep.subr.bf16.mxu0 %v1331
  %1856 = vmatpush1.bf16.msra.mxu0 %v1330
  %1857 = vmatprep.subr.bf16.mxu0 %v1339
  %1858 = vmatpush1.bf16.msra.mxu0 %v1338
  %1859 = vmatprep.subr.bf16.mxu0 %v1347
  %1860 = vmatpush1.bf16.msra.mxu0 %v1346
  %1861 = vmatprep.subr.bf16.mxu0 %v1355
  %1862 = vmatpush1.bf16.msra.mxu0 %v1354
  %1863 = vmatprep.subr.bf16.mxu0 %v1363
  %1864 = vmatpush1.bf16.msra.mxu0 %v1362
  %1865 = vmatprep.subr.bf16.mxu0 %v1371
  %1866 = vmatpush1.bf16.msra.mxu0 %v1370
  %1867 = vmatprep.subr.bf16.mxu0 %v1379
  %1868 = vmatpush1.bf16.msra.mxu0 %v1378
  %1869 = vmatprep.subr.bf16.mxu0 %v1387
  %1870 = vmatpush1.bf16.msra.mxu0 %v1386
  %1871 = vmatprep.subr.bf16.mxu0 %v1395
  %1872 = vmatpush1.bf16.msra.mxu0 %v1394
  %1873 = vmatprep.subr.bf16.mxu0 %v1403
  %1874 = vmatpush1.bf16.msra.mxu0 %v1402
  %1875 = vmatprep.subr.bf16.mxu0 %v1411
  %1876 = vmatpush1.bf16.msra.mxu0 %v1410
  %1877 = vmatprep.subr.bf16.mxu0 %v1419
  %1878 = vmatpush1.bf16.msra.mxu0 %v1418
  %1879 = vmatprep.subr.bf16.mxu0 %v1427
  %1880 = vmatpush1.bf16.msra.mxu0 %v1426
  %1881 = vmatprep.subr.bf16.mxu0 %v1435
  %1882 = vmatpush1.bf16.msra.mxu0 %v1434
  %1883 = vmatprep.subr.bf16.mxu0 %v1443
  %1884 = vmatpush1.bf16.msra.mxu0 %v1442
  %1885 = vmatprep.subr.bf16.mxu0 %v1451
  %1886 = vmatpush1.bf16.msra.mxu0 %v1450
  %1887 = vmatprep.mubr.bf16.mxu0 %v1813
  %1888 = vmatmul.mubr.bf16.gmra.mrb[0].mxu0 %v1812
  %v1889 = vpop.f32.mrb[0].mxu0
  %v1890 = vadd.f32 0.0, %v1889
  %v1891 = vpop.f32.mrb[0].mxu0
  %v1892 = vadd.f32 0.0, %v1891
  %v1893 = vpop.f32.mrb[0].mxu0
  %v1894 = vpop.f32.mrb[0].mxu0
  %1895 = vdwg.mxu0
  %1896 = vmatprep.subr.bf16.mxu0 %v1333
  %1897 = vmatpush1.bf16.msra.mxu0 %v1332
  %1898 = vmatprep.subr.bf16.mxu0 %v1341
  %1899 = vmatpush1.bf16.msra.mxu0 %v1340
  %1900 = vmatprep.subr.bf16.mxu0 %v1349
  %1901 = vmatpush1.bf16.msra.mxu0 %v1348
  %1902 = vmatprep.subr.bf16.mxu0 %v1357
  %1903 = vmatpush1.bf16.msra.mxu0 %v1356
  %1904 = vmatprep.subr.bf16.mxu0 %v1365
  %1905 = vmatpush1.bf16.msra.mxu0 %v1364
  %1906 = vmatprep.subr.bf16.mxu0 %v1373
  %1907 = vmatpush1.bf16.msra.mxu0 %v1372
  %1908 = vmatprep.subr.bf16.mxu0 %v1381
  %1909 = vmatpush1.bf16.msra.mxu0 %v1380
  %1910 = vmatprep.subr.bf16.mxu0 %v1389
  %1911 = vmatpush1.bf16.msra.mxu0 %v1388
  %1912 = vmatprep.subr.bf16.mxu0 %v1397
  %1913 = vmatpush1.bf16.msra.mxu0 %v1396
  %1914 = vmatprep.subr.bf16.mxu0 %v1405
  %1915 = vmatpush1.bf16.msra.mxu0 %v1404
  %1916 = vmatprep.subr.bf16.mxu0 %v1413
  %1917 = vmatpush1.bf16.msra.mxu0 %v1412
  %1918 = vmatprep.subr.bf16.mxu0 %v1421
  %1919 = vmatpush1.bf16.msra.mxu0 %v1420
  %1920 = vmatprep.subr.bf16.mxu0 %v1429
  %1921 = vmatpush1.bf16.msra.mxu0 %v1428
  %1922 = vmatprep.subr.bf16.mxu0 %v1437
  %1923 = vmatpush1.bf16.msra.mxu0 %v1436
  %1924 = vmatprep.subr.bf16.mxu0 %v1445
  %1925 = vmatpush1.bf16.msra.mxu0 %v1444
  %1926 = vmatprep.subr.bf16.mxu0 %v1453
  %1927 = vmatpush1.bf16.msra.mxu0 %v1452
  %1928 = vmatprep.mubr.bf16.mxu0 %v1813
  %1929 = vmatmul.mubr.bf16.gmra.mrb[0].mxu0 %v1812
  %v1930 = vpop.f32.mrb[0].mxu0
  %v1931 = vadd.f32 0.0, %v1930
  %v1932 = vpop.f32.mrb[0].mxu0
  %v1933 = vadd.f32 0.0, %v1932
  %v1934 = vpop.f32.mrb[0].mxu0
  %v1935 = vpop.f32.mrb[0].mxu0
  %1936 = vdwg.mxu0
  %1937 = vmatprep.subr.bf16.mxu0 %v1335
  %1938 = vmatpush1.bf16.msra.mxu0 %v1334
  %1939 = vmatprep.subr.bf16.mxu0 %v1343
  %1940 = vmatpush1.bf16.msra.mxu0 %v1342
  %1941 = vmatprep.subr.bf16.mxu0 %v1351
  %1942 = vmatpush1.bf16.msra.mxu0 %v1350
  %1943 = vmatprep.subr.bf16.mxu0 %v1359
  %1944 = vmatpush1.bf16.msra.mxu0 %v1358
  %1945 = vmatprep.subr.bf16.mxu0 %v1367
  %1946 = vmatpush1.bf16.msra.mxu0 %v1366
  %1947 = vmatprep.subr.bf16.mxu0 %v1375
  %1948 = vmatpush1.bf16.msra.mxu0 %v1374
  %1949 = vmatprep.subr.bf16.mxu0 %v1383
  %1950 = vmatpush1.bf16.msra.mxu0 %v1382
  %1951 = vmatprep.subr.bf16.mxu0 %v1391
  %1952 = vmatpush1.bf16.msra.mxu0 %v1390
  %1953 = vmatprep.subr.bf16.mxu0 %v1399
  %1954 = vmatpush1.bf16.msra.mxu0 %v1398
  %1955 = vmatprep.subr.bf16.mxu0 %v1407
  %1956 = vmatpush1.bf16.msra.mxu0 %v1406
  %1957 = vmatprep.subr.bf16.mxu0 %v1415
  %1958 = vmatpush1.bf16.msra.mxu0 %v1414
  %1959 = vmatprep.subr.bf16.mxu0 %v1423
  %1960 = vmatpush1.bf16.msra.mxu0 %v1422
  %1961 = vmatprep.subr.bf16.mxu0 %v1431
  %1962 = vmatpush1.bf16.msra.mxu0 %v1430
  %1963 = vmatprep.subr.bf16.mxu0 %v1439
  %1964 = vmatpush1.bf16.msra.mxu0 %v1438
  %1965 = vmatprep.subr.bf16.mxu0 %v1447
  %1966 = vmatpush1.bf16.msra.mxu0 %v1446
  %1967 = vmatprep.subr.bf16.mxu0 %v1455
  %1968 = vmatpush1.bf16.msra.mxu0 %v1454
  %1969 = vmatprep.mubr.bf16.mxu0 %v1813
  %1970 = vmatmul.mubr.bf16.gmra.mrb[0].mxu0 %v1812
  %v1971 = vpop.f32.mrb[0].mxu0
  %v1972 = vadd.f32 0.0, %v1971
  %v1973 = vpop.f32.mrb[0].mxu0
  %v1974 = vadd.f32 0.0, %v1973
  %v1975 = vpop.f32.mrb[0].mxu0
  %v1976 = vpop.f32.mrb[0].mxu0
  %1977 = vdwg.mxu0
  %v1978 = vadd.f32 %v1804, %v1849
  %v1979 = vadd.f32 %v1805, %v1851
  %v1980 = vadd.f32 %v1806, %v1890
  %v1981 = vadd.f32 %v1807, %v1892
  %v1982 = vadd.f32 %v1808, %v1931
  %v1983 = vadd.f32 %v1809, %v1933
  %v1984 = vadd.f32 %v1810, %v1972
  %v1985 = vadd.f32 %v1811, %v1974
  %v1986 = vxor.u32 %v1978, 2147483648
  %v1987 = vxor.u32 %v1979, 2147483648
  %v1988 = vmul.f32 %v1986, 1.442695
  %v1989 = vpow.pop %v1988
  %v1990 = vmul.f32 %v1987, 1.442695
  %v1991 = vpow.pop %v1990
  %v1992 = vadd.f32 %v1989, 1.0
  %v1993 = vadd.f32 %v1991, 1.0
  %v1994 = vrcp.pop %v1992
  %v1995 = vmul.f32 1.0, %v1994
  %v1996 = vrcp.pop %v1993
  %v1997 = vmul.f32 1.0, %v1996
  %v1998 = vxor.u32 %v1980, 2147483648
  %v1999 = vxor.u32 %v1981, 2147483648
  %v2000 = vmul.f32 %v1998, 1.442695
  %v2001 = vpow.pop %v2000
  %v2002 = vmul.f32 %v1999, 1.442695
  %v2003 = vpow.pop %v2002
  %v2004 = vadd.f32 %v2001, 1.0
  %v2005 = vadd.f32 %v2003, 1.0
  %v2006 = vrcp.pop %v2004
  %v2007 = vmul.f32 1.0, %v2006
  %v2008 = vrcp.pop %v2005
  %v2009 = vmul.f32 1.0, %v2008
  %v2010 = vtanh.pop %v1982
  %v2011 = vtanh.pop %v1983
  %v2012 = vxor.u32 %v1984, 2147483648
  %v2013 = vxor.u32 %v1985, 2147483648
  %v2014 = vmul.f32 %v2012, 1.442695
  %v2015 = vpow.pop %v2014
  %v2016 = vmul.f32 %v2013, 1.442695
  %v2017 = vpow.pop %v2016
  %v2018 = vadd.f32 %v2015, 1.0
  %v2019 = vadd.f32 %v2017, 1.0
  %v2020 = vrcp.pop %v2018
  %v2021 = vmul.f32 1.0, %v2020
  %v2022 = vrcp.pop %v2019
  %v2023 = vmul.f32 1.0, %v2022
  %v2024 = vmul.f32 %v2007, %v1798
  %v2025 = vmul.f32 %v2009, %v1799
  %v2026 = vmul.f32 %v1995, %v2010
  %v2027 = vmul.f32 %v1997, %v2011
  %v2028 = vadd.f32 %v2024, %v2026
  %v2029 = vadd.f32 %v2025, %v2027
  %v2030 = vtanh.pop %v2028
  %v2031 = vtanh.pop %v2029
  %v2032 = vmul.f32 %v2021, %v2030
  %v2033 = vmul.f32 %v2023, %v2031
  %v2034 = vld [vmem:[#allocation4 + $0x80] sm:$0xff]
  %v2035 = vld [vmem:[#allocation4 + $0x88] sm:$0xff]
  %v2036 = vld [vmem:[#allocation4 + $0x90] sm:$0xff]
  %v2037 = vld [vmem:[#allocation4 + $0x98] sm:$0xff]
  %v2038 = vld [vmem:[#allocation4 + $0xa0] sm:$0xff]
  %v2039 = vld [vmem:[#allocation4 + $0xa8] sm:$0xff]
  %v2040 = vld [vmem:[#allocation4 + $0xb0] sm:$0xff]
  %v2041 = vld [vmem:[#allocation4 + $0xb8] sm:$0xff]
  %v2042 = vpack.c.bf16 %v2032, %v2032
  %v2043 = vpack.c.bf16 %v2033, %v2033
  %2044 = vmatprep.subr.bf16.mxu0 %v1329
  %2045 = vmatpush1.bf16.msra.mxu0 %v1328
  %2046 = vmatprep.subr.bf16.mxu0 %v1337
  %2047 = vmatpush1.bf16.msra.mxu0 %v1336
  %2048 = vmatprep.subr.bf16.mxu0 %v1345
  %2049 = vmatpush1.bf16.msra.mxu0 %v1344
  %2050 = vmatprep.subr.bf16.mxu0 %v1353
  %2051 = vmatpush1.bf16.msra.mxu0 %v1352
  %2052 = vmatprep.subr.bf16.mxu0 %v1361
  %2053 = vmatpush1.bf16.msra.mxu0 %v1360
  %2054 = vmatprep.subr.bf16.mxu0 %v1369
  %2055 = vmatpush1.bf16.msra.mxu0 %v1368
  %2056 = vmatprep.subr.bf16.mxu0 %v1377
  %2057 = vmatpush1.bf16.msra.mxu0 %v1376
  %2058 = vmatprep.subr.bf16.mxu0 %v1385
  %2059 = vmatpush1.bf16.msra.mxu0 %v1384
  %2060 = vmatprep.subr.bf16.mxu0 %v1393
  %2061 = vmatpush1.bf16.msra.mxu0 %v1392
  %2062 = vmatprep.subr.bf16.mxu0 %v1401
  %2063 = vmatpush1.bf16.msra.mxu0 %v1400
  %2064 = vmatprep.subr.bf16.mxu0 %v1409
  %2065 = vmatpush1.bf16.msra.mxu0 %v1408
  %2066 = vmatprep.subr.bf16.mxu0 %v1417
  %2067 = vmatpush1.bf16.msra.mxu0 %v1416
  %2068 = vmatprep.subr.bf16.mxu0 %v1425
  %2069 = vmatpush1.bf16.msra.mxu0 %v1424
  %2070 = vmatprep.subr.bf16.mxu0 %v1433
  %2071 = vmatpush1.bf16.msra.mxu0 %v1432
  %2072 = vmatprep.subr.bf16.mxu0 %v1441
  %2073 = vmatpush1.bf16.msra.mxu0 %v1440
  %2074 = vmatprep.subr.bf16.mxu0 %v1449
  %2075 = vmatpush1.bf16.msra.mxu0 %v1448
  %2076 = vmatprep.mubr.bf16.mxu0 %v2043
  %2077 = vmatmul.mubr.bf16.gmra.mrb[0].mxu0 %v2042
  %v2078 = vpop.f32.mrb[0].mxu0
  %v2079 = vadd.f32 0.0, %v2078
  %v2080 = vpop.f32.mrb[0].mxu0
  %v2081 = vadd.f32 0.0, %v2080
  %v2082 = vpop.f32.mrb[0].mxu0
  %v2083 = vpop.f32.mrb[0].mxu0
  %2084 = vdwg.mxu0
  %2085 = vmatprep.subr.bf16.mxu0 %v1331
  %2086 = vmatpush1.bf16.msra.mxu0 %v1330
  %2087 = vmatprep.subr.bf16.mxu0 %v1339
  %2088 = vmatpush1.bf16.msra.mxu0 %v1338
  %2089 = vmatprep.subr.bf16.mxu0 %v1347
  %2090 = vmatpush1.bf16.msra.mxu0 %v1346
  %2091 = vmatprep.subr.bf16.mxu0 %v1355
  %2092 = vmatpush1.bf16.msra.mxu0 %v1354
  %2093 = vmatprep.subr.bf16.mxu0 %v1363
  %2094 = vmatpush1.bf16.msra.mxu0 %v1362
  %2095 = vmatprep.subr.bf16.mxu0 %v1371
  %2096 = vmatpush1.bf16.msra.mxu0 %v1370
  %2097 = vmatprep.subr.bf16.mxu0 %v1379
  %2098 = vmatpush1.bf16.msra.mxu0 %v1378
  %2099 = vmatprep.subr.bf16.mxu0 %v1387
  %2100 = vmatpush1.bf16.msra.mxu0 %v1386
  %2101 = vmatprep.subr.bf16.mxu0 %v1395
  %2102 = vmatpush1.bf16.msra.mxu0 %v1394
  %2103 = vmatprep.subr.bf16.mxu0 %v1403
  %2104 = vmatpush1.bf16.msra.mxu0 %v1402
  %2105 = vmatprep.subr.bf16.mxu0 %v1411
  %2106 = vmatpush1.bf16.msra.mxu0 %v1410
  %2107 = vmatprep.subr.bf16.mxu0 %v1419
  %2108 = vmatpush1.bf16.msra.mxu0 %v1418
  %2109 = vmatprep.subr.bf16.mxu0 %v1427
  %2110 = vmatpush1.bf16.msra.mxu0 %v1426
  %2111 = vmatprep.subr.bf16.mxu0 %v1435
  %2112 = vmatpush1.bf16.msra.mxu0 %v1434
  %2113 = vmatprep.subr.bf16.mxu0 %v1443
  %2114 = vmatpush1.bf16.msra.mxu0 %v1442
  %2115 = vmatprep.subr.bf16.mxu0 %v1451
  %2116 = vmatpush1.bf16.msra.mxu0 %v1450
  %2117 = vmatprep.mubr.bf16.mxu0 %v2043
  %2118 = vmatmul.mubr.bf16.gmra.mrb[0].mxu0 %v2042
  %v2119 = vpop.f32.mrb[0].mxu0
  %v2120 = vadd.f32 0.0, %v2119
  %v2121 = vpop.f32.mrb[0].mxu0
  %v2122 = vadd.f32 0.0, %v2121
  %v2123 = vpop.f32.mrb[0].mxu0
  %v2124 = vpop.f32.mrb[0].mxu0
  %2125 = vdwg.mxu0
  %2126 = vmatprep.subr.bf16.mxu0 %v1333
  %2127 = vmatpush1.bf16.msra.mxu0 %v1332
  %2128 = vmatprep.subr.bf16.mxu0 %v1341
  %2129 = vmatpush1.bf16.msra.mxu0 %v1340
  %2130 = vmatprep.subr.bf16.mxu0 %v1349
  %2131 = vmatpush1.bf16.msra.mxu0 %v1348
  %2132 = vmatprep.subr.bf16.mxu0 %v1357
  %2133 = vmatpush1.bf16.msra.mxu0 %v1356
  %2134 = vmatprep.subr.bf16.mxu0 %v1365
  %2135 = vmatpush1.bf16.msra.mxu0 %v1364
  %2136 = vmatprep.subr.bf16.mxu0 %v1373
  %2137 = vmatpush1.bf16.msra.mxu0 %v1372
  %2138 = vmatprep.subr.bf16.mxu0 %v1381
  %2139 = vmatpush1.bf16.msra.mxu0 %v1380
  %2140 = vmatprep.subr.bf16.mxu0 %v1389
  %2141 = vmatpush1.bf16.msra.mxu0 %v1388
  %2142 = vmatprep.subr.bf16.mxu0 %v1397
  %2143 = vmatpush1.bf16.msra.mxu0 %v1396
  %2144 = vmatprep.subr.bf16.mxu0 %v1405
  %2145 = vmatpush1.bf16.msra.mxu0 %v1404
  %2146 = vmatprep.subr.bf16.mxu0 %v1413
  %2147 = vmatpush1.bf16.msra.mxu0 %v1412
  %2148 = vmatprep.subr.bf16.mxu0 %v1421
  %2149 = vmatpush1.bf16.msra.mxu0 %v1420
  %2150 = vmatprep.subr.bf16.mxu0 %v1429
  %2151 = vmatpush1.bf16.msra.mxu0 %v1428
  %2152 = vmatprep.subr.bf16.mxu0 %v1437
  %2153 = vmatpush1.bf16.msra.mxu0 %v1436
  %2154 = vmatprep.subr.bf16.mxu0 %v1445
  %2155 = vmatpush1.bf16.msra.mxu0 %v1444
  %2156 = vmatprep.subr.bf16.mxu0 %v1453
  %2157 = vmatpush1.bf16.msra.mxu0 %v1452
  %2158 = vmatprep.mubr.bf16.mxu0 %v2043
  %2159 = vmatmul.mubr.bf16.gmra.mrb[0].mxu0 %v2042
  %v2160 = vpop.f32.mrb[0].mxu0
  %v2161 = vadd.f32 0.0, %v2160
  %v2162 = vpop.f32.mrb[0].mxu0
  %v2163 = vadd.f32 0.0, %v2162
  %v2164 = vpop.f32.mrb[0].mxu0
  %v2165 = vpop.f32.mrb[0].mxu0
  %2166 = vdwg.mxu0
  %2167 = vmatprep.subr.bf16.mxu0 %v1335
  %2168 = vmatpush1.bf16.msra.mxu0 %v1334
  %2169 = vmatprep.subr.bf16.mxu0 %v1343
  %2170 = vmatpush1.bf16.msra.mxu0 %v1342
  %2171 = vmatprep.subr.bf16.mxu0 %v1351
  %2172 = vmatpush1.bf16.msra.mxu0 %v1350
  %2173 = vmatprep.subr.bf16.mxu0 %v1359
  %2174 = vmatpush1.bf16.msra.mxu0 %v1358
  %2175 = vmatprep.subr.bf16.mxu0 %v1367
  %2176 = vmatpush1.bf16.msra.mxu0 %v1366
  %2177 = vmatprep.subr.bf16.mxu0 %v1375
  %2178 = vmatpush1.bf16.msra.mxu0 %v1374
  %2179 = vmatprep.subr.bf16.mxu0 %v1383
  %2180 = vmatpush1.bf16.msra.mxu0 %v1382
  %2181 = vmatprep.subr.bf16.mxu0 %v1391
  %2182 = vmatpush1.bf16.msra.mxu0 %v1390
  %2183 = vmatprep.subr.bf16.mxu0 %v1399
  %2184 = vmatpush1.bf16.msra.mxu0 %v1398
  %2185 = vmatprep.subr.bf16.mxu0 %v1407
  %2186 = vmatpush1.bf16.msra.mxu0 %v1406
  %2187 = vmatprep.subr.bf16.mxu0 %v1415
  %2188 = vmatpush1.bf16.msra.mxu0 %v1414
  %2189 = vmatprep.subr.bf16.mxu0 %v1423
  %2190 = vmatpush1.bf16.msra.mxu0 %v1422
  %2191 = vmatprep.subr.bf16.mxu0 %v1431
  %2192 = vmatpush1.bf16.msra.mxu0 %v1430
  %2193 = vmatprep.subr.bf16.mxu0 %v1439
  %2194 = vmatpush1.bf16.msra.mxu0 %v1438
  %2195 = vmatprep.subr.bf16.mxu0 %v1447
  %2196 = vmatpush1.bf16.msra.mxu0 %v1446
  %2197 = vmatprep.subr.bf16.mxu0 %v1455
  %2198 = vmatpush1.bf16.msra.mxu0 %v1454
  %2199 = vmatprep.mubr.bf16.mxu0 %v2043
  %2200 = vmatmul.mubr.bf16.gmra.mrb[0].mxu0 %v2042
  %v2201 = vpop.f32.mrb[0].mxu0
  %v2202 = vadd.f32 0.0, %v2201
  %v2203 = vpop.f32.mrb[0].mxu0
  %v2204 = vadd.f32 0.0, %v2203
  %v2205 = vpop.f32.mrb[0].mxu0
  %v2206 = vpop.f32.mrb[0].mxu0
  %2207 = vdwg.mxu0
  %v2208 = vadd.f32 %v2034, %v2079
  %v2209 = vadd.f32 %v2035, %v2081
  %v2210 = vadd.f32 %v2036, %v2120
  %v2211 = vadd.f32 %v2037, %v2122
  %v2212 = vadd.f32 %v2038, %v2161
  %v2213 = vadd.f32 %v2039, %v2163
  %v2214 = vadd.f32 %v2040, %v2202
  %v2215 = vadd.f32 %v2041, %v2204
  %v2216 = vxor.u32 %v2208, 2147483648
  %v2217 = vxor.u32 %v2209, 2147483648
  %v2218 = vmul.f32 %v2216, 1.442695
  %v2219 = vpow.pop %v2218
  %v2220 = vmul.f32 %v2217, 1.442695
  %v2221 = vpow.pop %v2220
  %v2222 = vadd.f32 %v2219, 1.0
  %v2223 = vadd.f32 %v2221, 1.0
  %v2224 = vrcp.pop %v2222
  %v2225 = vmul.f32 1.0, %v2224
  %v2226 = vrcp.pop %v2223
  %v2227 = vmul.f32 1.0, %v2226
  %v2228 = vxor.u32 %v2210, 2147483648
  %v2229 = vxor.u32 %v2211, 2147483648
  %v2230 = vmul.f32 %v2228, 1.442695
  %v2231 = vpow.pop %v2230
  %v2232 = vmul.f32 %v2229, 1.442695
  %v2233 = vpow.pop %v2232
  %v2234 = vadd.f32 %v2231, 1.0
  %v2235 = vadd.f32 %v2233, 1.0
  %v2236 = vrcp.pop %v2234
  %v2237 = vmul.f32 1.0, %v2236
  %v2238 = vrcp.pop %v2235
  %v2239 = vmul.f32 1.0, %v2238
  %v2240 = vtanh.pop %v2212
  %v2241 = vtanh.pop %v2213
  %v2242 = vxor.u32 %v2214, 2147483648
  %v2243 = vxor.u32 %v2215, 2147483648
  %v2244 = vmul.f32 %v2242, 1.442695
  %v2245 = vpow.pop %v2244
  %v2246 = vmul.f32 %v2243, 1.442695
  %v2247 = vpow.pop %v2246
  %v2248 = vadd.f32 %v2245, 1.0
  %v2249 = vadd.f32 %v2247, 1.0
  %v2250 = vrcp.pop %v2248
  %v2251 = vmul.f32 1.0, %v2250
  %v2252 = vrcp.pop %v2249
  %v2253 = vmul.f32 1.0, %v2252
  %v2254 = vmul.f32 %v2237, %v2028
  %v2255 = vmul.f32 %v2239, %v2029
  %v2256 = vmul.f32 %v2225, %v2240
  %v2257 = vmul.f32 %v2227, %v2241
  %v2258 = vadd.f32 %v2254, %v2256
  %v2259 = vadd.f32 %v2255, %v2257
  %v2260 = vtanh.pop %v2258
  %v2261 = vtanh.pop %v2259
  %v2262 = vmul.f32 %v2251, %v2260
  %v2263 = vmul.f32 %v2253, %v2261
  %v2264 = vld [vmem:[#allocation4 + $0xc0] sm:$0xff]
  %v2265 = vld [vmem:[#allocation4 + $0xc8] sm:$0xff]
  %v2266 = vld [vmem:[#allocation4 + $0xd0] sm:$0xff]
  %v2267 = vld [vmem:[#allocation4 + $0xd8] sm:$0xff]
  %v2268 = vld [vmem:[#allocation4 + $0xe0] sm:$0xff]
  %v2269 = vld [vmem:[#allocation4 + $0xe8] sm:$0xff]
  %v2270 = vld [vmem:[#allocation4 + $0xf0] sm:$0xff]
  %v2271 = vld [vmem:[#allocation4 + $0xf8] sm:$0xff]
  %v2272 = vpack.c.bf16 %v2262, %v2262
  %v2273 = vpack.c.bf16 %v2263, %v2263
  %2274 = vmatprep.subr.bf16.mxu0 %v1329
  %2275 = vmatpush1.bf16.msra.mxu0 %v1328
  %2276 = vmatprep.subr.bf16.mxu0 %v1337
  %2277 = vmatpush1.bf16.msra.mxu0 %v1336
  %2278 = vmatprep.subr.bf16.mxu0 %v1345
  %2279 = vmatpush1.bf16.msra.mxu0 %v1344
  %2280 = vmatprep.subr.bf16.mxu0 %v1353
  %2281 = vmatpush1.bf16.msra.mxu0 %v1352
  %2282 = vmatprep.subr.bf16.mxu0 %v1361
  %2283 = vmatpush1.bf16.msra.mxu0 %v1360
  %2284 = vmatprep.subr.bf16.mxu0 %v1369
  %2285 = vmatpush1.bf16.msra.mxu0 %v1368
  %2286 = vmatprep.subr.bf16.mxu0 %v1377
  %2287 = vmatpush1.bf16.msra.mxu0 %v1376
  %2288 = vmatprep.subr.bf16.mxu0 %v1385
  %2289 = vmatpush1.bf16.msra.mxu0 %v1384
  %2290 = vmatprep.subr.bf16.mxu0 %v1393
  %2291 = vmatpush1.bf16.msra.mxu0 %v1392
  %2292 = vmatprep.subr.bf16.mxu0 %v1401
  %2293 = vmatpush1.bf16.msra.mxu0 %v1400
  %2294 = vmatprep.subr.bf16.mxu0 %v1409
  %2295 = vmatpush1.bf16.msra.mxu0 %v1408
  %2296 = vmatprep.subr.bf16.mxu0 %v1417
  %2297 = vmatpush1.bf16.msra.mxu0 %v1416
  %2298 = vmatprep.subr.bf16.mxu0 %v1425
  %2299 = vmatpush1.bf16.msra.mxu0 %v1424
  %2300 = vmatprep.subr.bf16.mxu0 %v1433
  %2301 = vmatpush1.bf16.msra.mxu0 %v1432
  %2302 = vmatprep.subr.bf16.mxu0 %v1441
  %2303 = vmatpush1.bf16.msra.mxu0 %v1440
  %2304 = vmatprep.subr.bf16.mxu0 %v1449
  %2305 = vmatpush1.bf16.msra.mxu0 %v1448
  %2306 = vmatprep.mubr.bf16.mxu0 %v2273
  %2307 = vmatmul.mubr.bf16.gmra.mrb[0].mxu0 %v2272
  %v2308 = vpop.f32.mrb[0].mxu0
  %v2309 = vadd.f32 0.0, %v2308
  %v2310 = vpop.f32.mrb[0].mxu0
  %v2311 = vadd.f32 0.0, %v2310
  %v2312 = vpop.f32.mrb[0].mxu0
  %v2313 = vpop.f32.mrb[0].mxu0
  %2314 = vdwg.mxu0
  %2315 = vmatprep.subr.bf16.mxu0 %v1331
  %2316 = vmatpush1.bf16.msra.mxu0 %v1330
  %2317 = vmatprep.subr.bf16.mxu0 %v1339
  %2318 = vmatpush1.bf16.msra.mxu0 %v1338
  %2319 = vmatprep.subr.bf16.mxu0 %v1347
  %2320 = vmatpush1.bf16.msra.mxu0 %v1346
  %2321 = vmatprep.subr.bf16.mxu0 %v1355
  %2322 = vmatpush1.bf16.msra.mxu0 %v1354
  %2323 = vmatprep.subr.bf16.mxu0 %v1363
  %2324 = vmatpush1.bf16.msra.mxu0 %v1362
  %2325 = vmatprep.subr.bf16.mxu0 %v1371
  %2326 = vmatpush1.bf16.msra.mxu0 %v1370
  %2327 = vmatprep.subr.bf16.mxu0 %v1379
  %2328 = vmatpush1.bf16.msra.mxu0 %v1378
  %2329 = vmatprep.subr.bf16.mxu0 %v1387
  %2330 = vmatpush1.bf16.msra.mxu0 %v1386
  %2331 = vmatprep.subr.bf16.mxu0 %v1395
  %2332 = vmatpush1.bf16.msra.mxu0 %v1394
  %2333 = vmatprep.subr.bf16.mxu0 %v1403
  %2334 = vmatpush1.bf16.msra.mxu0 %v1402
  %2335 = vmatprep.subr.bf16.mxu0 %v1411
  %2336 = vmatpush1.bf16.msra.mxu0 %v1410
  %2337 = vmatprep.subr.bf16.mxu0 %v1419
  %2338 = vmatpush1.bf16.msra.mxu0 %v1418
  %2339 = vmatprep.subr.bf16.mxu0 %v1427
  %2340 = vmatpush1.bf16.msra.mxu0 %v1426
  %2341 = vmatprep.subr.bf16.mxu0 %v1435
  %2342 = vmatpush1.bf16.msra.mxu0 %v1434
  %2343 = vmatprep.subr.bf16.mxu0 %v1443
  %2344 = vmatpush1.bf16.msra.mxu0 %v1442
  %2345 = vmatprep.subr.bf16.mxu0 %v1451
  %2346 = vmatpush1.bf16.msra.mxu0 %v1450
  %2347 = vmatprep.mubr.bf16.mxu0 %v2273
  %2348 = vmatmul.mubr.bf16.gmra.mrb[0].mxu0 %v2272
  %v2349 = vpop.f32.mrb[0].mxu0
  %v2350 = vadd.f32 0.0, %v2349
  %v2351 = vpop.f32.mrb[0].mxu0
  %v2352 = vadd.f32 0.0, %v2351
  %v2353 = vpop.f32.mrb[0].mxu0
  %v2354 = vpop.f32.mrb[0].mxu0
  %2355 = vdwg.mxu0
  %2356 = vmatprep.subr.bf16.mxu0 %v1333
  %2357 = vmatpush1.bf16.msra.mxu0 %v1332
  %2358 = vmatprep.subr.bf16.mxu0 %v1341
  %2359 = vmatpush1.bf16.msra.mxu0 %v1340
  %2360 = vmatprep.subr.bf16.mxu0 %v1349
  %2361 = vmatpush1.bf16.msra.mxu0 %v1348
  %2362 = vmatprep.subr.bf16.mxu0 %v1357
  %2363 = vmatpush1.bf16.msra.mxu0 %v1356
  %2364 = vmatprep.subr.bf16.mxu0 %v1365
  %2365 = vmatpush1.bf16.msra.mxu0 %v1364
  %2366 = vmatprep.subr.bf16.mxu0 %v1373
  %2367 = vmatpush1.bf16.msra.mxu0 %v1372
  %2368 = vmatprep.subr.bf16.mxu0 %v1381
  %2369 = vmatpush1.bf16.msra.mxu0 %v1380
  %2370 = vmatprep.subr.bf16.mxu0 %v1389
  %2371 = vmatpush1.bf16.msra.mxu0 %v1388
  %2372 = vmatprep.subr.bf16.mxu0 %v1397
  %2373 = vmatpush1.bf16.msra.mxu0 %v1396
  %2374 = vmatprep.subr.bf16.mxu0 %v1405
  %2375 = vmatpush1.bf16.msra.mxu0 %v1404
  %2376 = vmatprep.subr.bf16.mxu0 %v1413
  %2377 = vmatpush1.bf16.msra.mxu0 %v1412
  %2378 = vmatprep.subr.bf16.mxu0 %v1421
  %2379 = vmatpush1.bf16.msra.mxu0 %v1420
  %2380 = vmatprep.subr.bf16.mxu0 %v1429
  %2381 = vmatpush1.bf16.msra.mxu0 %v1428
  %2382 = vmatprep.subr.bf16.mxu0 %v1437
  %2383 = vmatpush1.bf16.msra.mxu0 %v1436
  %2384 = vmatprep.subr.bf16.mxu0 %v1445
  %2385 = vmatpush1.bf16.msra.mxu0 %v1444
  %2386 = vmatprep.subr.bf16.mxu0 %v1453
  %2387 = vmatpush1.bf16.msra.mxu0 %v1452
  %2388 = vmatprep.mubr.bf16.mxu0 %v2273
  %2389 = vmatmul.mubr.bf16.gmra.mrb[0].mxu0 %v2272
  %v2390 = vpop.f32.mrb[0].mxu0
  %v2391 = vadd.f32 0.0, %v2390
  %v2392 = vpop.f32.mrb[0].mxu0
  %v2393 = vadd.f32 0.0, %v2392
  %v2394 = vpop.f32.mrb[0].mxu0
  %v2395 = vpop.f32.mrb[0].mxu0
  %2396 = vdwg.mxu0
  %2397 = vmatprep.subr.bf16.mxu0 %v1335
  %2398 = vmatpush1.bf16.msra.mxu0 %v1334
  %2399 = vmatprep.subr.bf16.mxu0 %v1343
  %2400 = vmatpush1.bf16.msra.mxu0 %v1342
  %2401 = vmatprep.subr.bf16.mxu0 %v1351
  %2402 = vmatpush1.bf16.msra.mxu0 %v1350
  %2403 = vmatprep.subr.bf16.mxu0 %v1359
  %2404 = vmatpush1.bf16.msra.mxu0 %v1358
  %2405 = vmatprep.subr.bf16.mxu0 %v1367
  %2406 = vmatpush1.bf16.msra.mxu0 %v1366
  %2407 = vmatprep.subr.bf16.mxu0 %v1375
  %2408 = vmatpush1.bf16.msra.mxu0 %v1374
  %2409 = vmatprep.subr.bf16.mxu0 %v1383
  %2410 = vmatpush1.bf16.msra.mxu0 %v1382
  %2411 = vmatprep.subr.bf16.mxu0 %v1391
  %2412 = vmatpush1.bf16.msra.mxu0 %v1390
  %2413 = vmatprep.subr.bf16.mxu0 %v1399
  %2414 = vmatpush1.bf16.msra.mxu0 %v1398
  %2415 = vmatprep.subr.bf16.mxu0 %v1407
  %2416 = vmatpush1.bf16.msra.mxu0 %v1406
  %2417 = vmatprep.subr.bf16.mxu0 %v1415
  %2418 = vmatpush1.bf16.msra.mxu0 %v1414
  %2419 = vmatprep.subr.bf16.mxu0 %v1423
  %2420 = vmatpush1.bf16.msra.mxu0 %v1422
  %2421 = vmatprep.subr.bf16.mxu0 %v1431
  %2422 = vmatpush1.bf16.msra.mxu0 %v1430
  %2423 = vmatprep.subr.bf16.mxu0 %v1439
  %2424 = vmatpush1.bf16.msra.mxu0 %v1438
  %2425 = vmatprep.subr.bf16.mxu0 %v1447
  %2426 = vmatpush1.bf16.msra.mxu0 %v1446
  %2427 = vmatprep.subr.bf16.mxu0 %v1455
  %2428 = vmatpush1.bf16.msra.mxu0 %v1454
  %2429 = vmatprep.mubr.bf16.mxu0 %v2273
  %2430 = vmatmul.mubr.bf16.gmra.mrb[0].mxu0 %v2272
  %v2431 = vpop.f32.mrb[0].mxu0
  %v2432 = vadd.f32 0.0, %v2431
  %v2433 = vpop.f32.mrb[0].mxu0
  %v2434 = vadd.f32 0.0, %v2433
  %v2435 = vpop.f32.mrb[0].mxu0
  %v2436 = vpop.f32.mrb[0].mxu0
  %2437 = vdwg.mxu0
  %v2438 = vadd.f32 %v2264, %v2309
  %v2439 = vadd.f32 %v2265, %v2311
  %v2440 = vadd.f32 %v2266, %v2350
  %v2441 = vadd.f32 %v2267, %v2352
  %v2442 = vadd.f32 %v2268, %v2391
  %v2443 = vadd.f32 %v2269, %v2393
  %v2444 = vadd.f32 %v2270, %v2432
  %v2445 = vadd.f32 %v2271, %v2434
  %v2446 = vxor.u32 %v2438, 2147483648
  %v2447 = vxor.u32 %v2439, 2147483648
  %v2448 = vmul.f32 %v2446, 1.442695
  %v2449 = vpow.pop %v2448
  %v2450 = vmul.f32 %v2447, 1.442695
  %v2451 = vpow.pop %v2450
  %v2452 = vadd.f32 %v2449, 1.0
  %v2453 = vadd.f32 %v2451, 1.0
  %v2454 = vrcp.pop %v2452
  %v2455 = vmul.f32 1.0, %v2454
  %v2456 = vrcp.pop %v2453
  %v2457 = vmul.f32 1.0, %v2456
  %v2458 = vxor.u32 %v2440, 2147483648
  %v2459 = vxor.u32 %v2441, 2147483648
  %v2460 = vmul.f32 %v2458, 1.442695
  %v2461 = vpow.pop %v2460
  %v2462 = vmul.f32 %v2459, 1.442695
  %v2463 = vpow.pop %v2462
  %v2464 = vadd.f32 %v2461, 1.0
  %v2465 = vadd.f32 %v2463, 1.0
  %v2466 = vrcp.pop %v2464
  %v2467 = vmul.f32 1.0, %v2466
  %v2468 = vrcp.pop %v2465
  %v2469 = vmul.f32 1.0, %v2468
  %v2470 = vtanh.pop %v2442
  %v2471 = vtanh.pop %v2443
  %v2472 = vxor.u32 %v2444, 2147483648
  %v2473 = vxor.u32 %v2445, 2147483648
  %v2474 = vmul.f32 %v2472, 1.442695
  %v2475 = vpow.pop %v2474
  %v2476 = vmul.f32 %v2473, 1.442695
  %v2477 = vpow.pop %v2476
  %v2478 = vadd.f32 %v2475, 1.0
  %v2479 = vadd.f32 %v2477, 1.0
  %v2480 = vrcp.pop %v2478
  %v2481 = vmul.f32 1.0, %v2480
  %v2482 = vrcp.pop %v2479
  %v2483 = vmul.f32 1.0, %v2482
  %v2484 = vmul.f32 %v2467, %v2258
  %v2485 = vmul.f32 %v2469, %v2259
  %v2486 = vmul.f32 %v2455, %v2470
  %v2487 = vmul.f32 %v2457, %v2471
  %v2488 = vadd.f32 %v2484, %v2486
  %v2489 = vadd.f32 %v2485, %v2487
  %v2490 = vtanh.pop %v2488
  %v2491 = vtanh.pop %v2489
  %v2492 = vmul.f32 %v2481, %v2490
  %v2493 = vmul.f32 %v2483, %v2491
  %v2494 = vld [vmem:[#allocation4 + $0x100] sm:$0xff]
  %v2495 = vld [vmem:[#allocation4 + $0x108] sm:$0xff]
  %v2496 = vld [vmem:[#allocation4 + $0x110] sm:$0xff]
  %v2497 = vld [vmem:[#allocation4 + $0x118] sm:$0xff]
  %v2498 = vld [vmem:[#allocation4 + $0x120] sm:$0xff]
  %v2499 = vld [vmem:[#allocation4 + $0x128] sm:$0xff]
  %v2500 = vld [vmem:[#allocation4 + $0x130] sm:$0xff]
  %v2501 = vld [vmem:[#allocation4 + $0x138] sm:$0xff]
  %v2502 = vpack.c.bf16 %v2492, %v2492
  %v2503 = vpack.c.bf16 %v2493, %v2493
  %2504 = vmatprep.subr.bf16.mxu0 %v1329
  %2505 = vmatpush1.bf16.msra.mxu0 %v1328
  %2506 = vmatprep.subr.bf16.mxu0 %v1337
  %2507 = vmatpush1.bf16.msra.mxu0 %v1336
  %2508 = vmatprep.subr.bf16.mxu0 %v1345
  %2509 = vmatpush1.bf16.msra.mxu0 %v1344
  %2510 = vmatprep.subr.bf16.mxu0 %v1353
  %2511 = vmatpush1.bf16.msra.mxu0 %v1352
  %2512 = vmatprep.subr.bf16.mxu0 %v1361
  %2513 = vmatpush1.bf16.msra.mxu0 %v1360
  %2514 = vmatprep.subr.bf16.mxu0 %v1369
  %2515 = vmatpush1.bf16.msra.mxu0 %v1368
  %2516 = vmatprep.subr.bf16.mxu0 %v1377
  %2517 = vmatpush1.bf16.msra.mxu0 %v1376
  %2518 = vmatprep.subr.bf16.mxu0 %v1385
  %2519 = vmatpush1.bf16.msra.mxu0 %v1384
  %2520 = vmatprep.subr.bf16.mxu0 %v1393
  %2521 = vmatpush1.bf16.msra.mxu0 %v1392
  %2522 = vmatprep.subr.bf16.mxu0 %v1401
  %2523 = vmatpush1.bf16.msra.mxu0 %v1400
  %2524 = vmatprep.subr.bf16.mxu0 %v1409
  %2525 = vmatpush1.bf16.msra.mxu0 %v1408
  %2526 = vmatprep.subr.bf16.mxu0 %v1417
  %2527 = vmatpush1.bf16.msra.mxu0 %v1416
  %2528 = vmatprep.subr.bf16.mxu0 %v1425
  %2529 = vmatpush1.bf16.msra.mxu0 %v1424
  %2530 = vmatprep.subr.bf16.mxu0 %v1433
  %2531 = vmatpush1.bf16.msra.mxu0 %v1432
  %2532 = vmatprep.subr.bf16.mxu0 %v1441
  %2533 = vmatpush1.bf16.msra.mxu0 %v1440
  %2534 = vmatprep.subr.bf16.mxu0 %v1449
  %2535 = vmatpush1.bf16.msra.mxu0 %v1448
  %2536 = vmatprep.mubr.bf16.mxu0 %v2503
  %2537 = vmatmul.mubr.bf16.gmra.mrb[0].mxu0 %v2502
  %v2538 = vpop.f32.mrb[0].mxu0
  %v2539 = vadd.f32 0.0, %v2538
  %v2540 = vpop.f32.mrb[0].mxu0
  %v2541 = vadd.f32 0.0, %v2540
  %v2542 = vpop.f32.mrb[0].mxu0
  %v2543 = vpop.f32.mrb[0].mxu0
  %2544 = vdwg.mxu0
  %2545 = vmatprep.subr.bf16.mxu0 %v1331
  %2546 = vmatpush1.bf16.msra.mxu0 %v1330
  %2547 = vmatprep.subr.bf16.mxu0 %v1339
  %2548 = vmatpush1.bf16.msra.mxu0 %v1338
  %2549 = vmatprep.subr.bf16.mxu0 %v1347
  %2550 = vmatpush1.bf16.msra.mxu0 %v1346
  %2551 = vmatprep.subr.bf16.mxu0 %v1355
  %2552 = vmatpush1.bf16.msra.mxu0 %v1354
  %2553 = vmatprep.subr.bf16.mxu0 %v1363
  %2554 = vmatpush1.bf16.msra.mxu0 %v1362
  %2555 = vmatprep.subr.bf16.mxu0 %v1371
  %2556 = vmatpush1.bf16.msra.mxu0 %v1370
  %2557 = vmatprep.subr.bf16.mxu0 %v1379
  %2558 = vmatpush1.bf16.msra.mxu0 %v1378
  %2559 = vmatprep.subr.bf16.mxu0 %v1387
  %2560 = vmatpush1.bf16.msra.mxu0 %v1386
  %2561 = vmatprep.subr.bf16.mxu0 %v1395
  %2562 = vmatpush1.bf16.msra.mxu0 %v1394
  %2563 = vmatprep.subr.bf16.mxu0 %v1403
  %2564 = vmatpush1.bf16.msra.mxu0 %v1402
  %2565 = vmatprep.subr.bf16.mxu0 %v1411
  %2566 = vmatpush1.bf16.msra.mxu0 %v1410
  %2567 = vmatprep.subr.bf16.mxu0 %v1419
  %2568 = vmatpush1.bf16.msra.mxu0 %v1418
  %2569 = vmatprep.subr.bf16.mxu0 %v1427
  %2570 = vmatpush1.bf16.msra.mxu0 %v1426
  %2571 = vmatprep.subr.bf16.mxu0 %v1435
  %2572 = vmatpush1.bf16.msra.mxu0 %v1434
  %2573 = vmatprep.subr.bf16.mxu0 %v1443
  %2574 = vmatpush1.bf16.msra.mxu0 %v1442
  %2575 = vmatprep.subr.bf16.mxu0 %v1451
  %2576 = vmatpush1.bf16.msra.mxu0 %v1450
  %2577 = vmatprep.mubr.bf16.mxu0 %v2503
  %2578 = vmatmul.mubr.bf16.gmra.mrb[0].mxu0 %v2502
  %v2579 = vpop.f32.mrb[0].mxu0
  %v2580 = vadd.f32 0.0, %v2579
  %v2581 = vpop.f32.mrb[0].mxu0
  %v2582 = vadd.f32 0.0, %v2581
  %v2583 = vpop.f32.mrb[0].mxu0
  %v2584 = vpop.f32.mrb[0].mxu0
  %2585 = vdwg.mxu0
  %2586 = vmatprep.subr.bf16.mxu0 %v1333
  %2587 = vmatpush1.bf16.msra.mxu0 %v1332
  %2588 = vmatprep.subr.bf16.mxu0 %v1341
  %2589 = vmatpush1.bf16.msra.mxu0 %v1340
  %2590 = vmatprep.subr.bf16.mxu0 %v1349
  %2591 = vmatpush1.bf16.msra.mxu0 %v1348
  %2592 = vmatprep.subr.bf16.mxu0 %v1357
  %2593 = vmatpush1.bf16.msra.mxu0 %v1356
  %2594 = vmatprep.subr.bf16.mxu0 %v1365
  %2595 = vmatpush1.bf16.msra.mxu0 %v1364
  %2596 = vmatprep.subr.bf16.mxu0 %v1373
  %2597 = vmatpush1.bf16.msra.mxu0 %v1372
  %2598 = vmatprep.subr.bf16.mxu0 %v1381
  %2599 = vmatpush1.bf16.msra.mxu0 %v1380
  %2600 = vmatprep.subr.bf16.mxu0 %v1389
  %2601 = vmatpush1.bf16.msra.mxu0 %v1388
  %2602 = vmatprep.subr.bf16.mxu0 %v1397
  %2603 = vmatpush1.bf16.msra.mxu0 %v1396
  %2604 = vmatprep.subr.bf16.mxu0 %v1405
  %2605 = vmatpush1.bf16.msra.mxu0 %v1404
  %2606 = vmatprep.subr.bf16.mxu0 %v1413
  %2607 = vmatpush1.bf16.msra.mxu0 %v1412
  %2608 = vmatprep.subr.bf16.mxu0 %v1421
  %2609 = vmatpush1.bf16.msra.mxu0 %v1420
  %2610 = vmatprep.subr.bf16.mxu0 %v1429
  %2611 = vmatpush1.bf16.msra.mxu0 %v1428
  %2612 = vmatprep.subr.bf16.mxu0 %v1437
  %2613 = vmatpush1.bf16.msra.mxu0 %v1436
  %2614 = vmatprep.subr.bf16.mxu0 %v1445
  %2615 = vmatpush1.bf16.msra.mxu0 %v1444
  %2616 = vmatprep.subr.bf16.mxu0 %v1453
  %2617 = vmatpush1.bf16.msra.mxu0 %v1452
  %2618 = vmatprep.mubr.bf16.mxu0 %v2503
  %2619 = vmatmul.mubr.bf16.gmra.mrb[0].mxu0 %v2502
  %v2620 = vpop.f32.mrb[0].mxu0
  %v2621 = vadd.f32 0.0, %v2620
  %v2622 = vpop.f32.mrb[0].mxu0
  %v2623 = vadd.f32 0.0, %v2622
  %v2624 = vpop.f32.mrb[0].mxu0
  %v2625 = vpop.f32.mrb[0].mxu0
  %2626 = vdwg.mxu0
  %2627 = vmatprep.subr.bf16.mxu0 %v1335
  %2628 = vmatpush1.bf16.msra.mxu0 %v1334
  %2629 = vmatprep.subr.bf16.mxu0 %v1343
  %2630 = vmatpush1.bf16.msra.mxu0 %v1342
  %2631 = vmatprep.subr.bf16.mxu0 %v1351
  %2632 = vmatpush1.bf16.msra.mxu0 %v1350
  %2633 = vmatprep.subr.bf16.mxu0 %v1359
  %2634 = vmatpush1.bf16.msra.mxu0 %v1358
  %2635 = vmatprep.subr.bf16.mxu0 %v1367
  %2636 = vmatpush1.bf16.msra.mxu0 %v1366
  %2637 = vmatprep.subr.bf16.mxu0 %v1375
  %2638 = vmatpush1.bf16.msra.mxu0 %v1374
  %2639 = vmatprep.subr.bf16.mxu0 %v1383
  %2640 = vmatpush1.bf16.msra.mxu0 %v1382
  %2641 = vmatprep.subr.bf16.mxu0 %v1391
  %2642 = vmatpush1.bf16.msra.mxu0 %v1390
  %2643 = vmatprep.subr.bf16.mxu0 %v1399
  %2644 = vmatpush1.bf16.msra.mxu0 %v1398
  %2645 = vmatprep.subr.bf16.mxu0 %v1407
  %2646 = vmatpush1.bf16.msra.mxu0 %v1406
  %2647 = vmatprep.subr.bf16.mxu0 %v1415
  %2648 = vmatpush1.bf16.msra.mxu0 %v1414
  %2649 = vmatprep.subr.bf16.mxu0 %v1423
  %2650 = vmatpush1.bf16.msra.mxu0 %v1422
  %2651 = vmatprep.subr.bf16.mxu0 %v1431
  %2652 = vmatpush1.bf16.msra.mxu0 %v1430
  %2653 = vmatprep.subr.bf16.mxu0 %v1439
  %2654 = vmatpush1.bf16.msra.mxu0 %v1438
  %2655 = vmatprep.subr.bf16.mxu0 %v1447
  %2656 = vmatpush1.bf16.msra.mxu0 %v1446
  %2657 = vmatprep.subr.bf16.mxu0 %v1455
  %2658 = vmatpush1.bf16.msra.mxu0 %v1454
  %2659 = vmatprep.mubr.bf16.mxu0 %v2503
  %2660 = vmatmul.mubr.bf16.gmra.mrb[0].mxu0 %v2502
  %v2661 = vpop.f32.mrb[0].mxu0
  %v2662 = vadd.f32 0.0, %v2661
  %v2663 = vpop.f32.mrb[0].mxu0
  %v2664 = vadd.f32 0.0, %v2663
  %v2665 = vpop.f32.mrb[0].mxu0
  %v2666 = vpop.f32.mrb[0].mxu0
  %2667 = vdwg.mxu0
  %v2668 = vadd.f32 %v2494, %v2539
  %v2669 = vadd.f32 %v2495, %v2541
  %v2670 = vadd.f32 %v2496, %v2580
  %v2671 = vadd.f32 %v2497, %v2582
  %v2672 = vadd.f32 %v2498, %v2621
  %v2673 = vadd.f32 %v2499, %v2623
  %v2674 = vadd.f32 %v2500, %v2662
  %v2675 = vadd.f32 %v2501, %v2664
  %v2676 = vxor.u32 %v2668, 2147483648
  %v2677 = vxor.u32 %v2669, 2147483648
  %v2678 = vmul.f32 %v2676, 1.442695
  %v2679 = vpow.pop %v2678
  %v2680 = vmul.f32 %v2677, 1.442695
  %v2681 = vpow.pop %v2680
  %v2682 = vadd.f32 %v2679, 1.0
  %v2683 = vadd.f32 %v2681, 1.0
  %v2684 = vrcp.pop %v2682
  %v2685 = vmul.f32 1.0, %v2684
  %v2686 = vrcp.pop %v2683
  %v2687 = vmul.f32 1.0, %v2686
  %v2688 = vxor.u32 %v2670, 2147483648
  %v2689 = vxor.u32 %v2671, 2147483648
  %v2690 = vmul.f32 %v2688, 1.442695
  %v2691 = vpow.pop %v2690
  %v2692 = vmul.f32 %v2689, 1.442695
  %v2693 = vpow.pop %v2692
  %v2694 = vadd.f32 %v2691, 1.0
  %v2695 = vadd.f32 %v2693, 1.0
  %v2696 = vrcp.pop %v2694
  %v2697 = vmul.f32 1.0, %v2696
  %v2698 = vrcp.pop %v2695
  %v2699 = vmul.f32 1.0, %v2698
  %v2700 = vtanh.pop %v2672
  %v2701 = vtanh.pop %v2673
  %v2702 = vxor.u32 %v2674, 2147483648
  %v2703 = vxor.u32 %v2675, 2147483648
  %v2704 = vmul.f32 %v2702, 1.442695
  %v2705 = vpow.pop %v2704
  %v2706 = vmul.f32 %v2703, 1.442695
  %v2707 = vpow.pop %v2706
  %v2708 = vadd.f32 %v2705, 1.0
  %v2709 = vadd.f32 %v2707, 1.0
  %v2710 = vrcp.pop %v2708
  %v2711 = vmul.f32 1.0, %v2710
  %v2712 = vrcp.pop %v2709
  %v2713 = vmul.f32 1.0, %v2712
  %v2714 = vmul.f32 %v2697, %v2488
  %v2715 = vmul.f32 %v2699, %v2489
  %v2716 = vmul.f32 %v2685, %v2700
  %v2717 = vmul.f32 %v2687, %v2701
  %v2718 = vadd.f32 %v2714, %v2716
  %v2719 = vadd.f32 %v2715, %v2717
  %v2720 = vtanh.pop %v2718
  %v2721 = vtanh.pop %v2719
  %v2722 = vmul.f32 %v2711, %v2720
  %v2723 = vmul.f32 %v2713, %v2721
  %v2724 = vld [vmem:[#allocation4 + $0x140] sm:$0xff]
  %v2725 = vld [vmem:[#allocation4 + $0x148] sm:$0xff]
  %v2726 = vld [vmem:[#allocation4 + $0x150] sm:$0xff]
  %v2727 = vld [vmem:[#allocation4 + $0x158] sm:$0xff]
  %v2728 = vld [vmem:[#allocation4 + $0x160] sm:$0xff]
  %v2729 = vld [vmem:[#allocation4 + $0x168] sm:$0xff]
  %v2730 = vld [vmem:[#allocation4 + $0x170] sm:$0xff]
  %v2731 = vld [vmem:[#allocation4 + $0x178] sm:$0xff]
  %v2732 = vpack.c.bf16 %v2722, %v2722
  %v2733 = vpack.c.bf16 %v2723, %v2723
  %2734 = vmatprep.subr.bf16.mxu0 %v1329
  %2735 = vmatpush1.bf16.msra.mxu0 %v1328
  %2736 = vmatprep.subr.bf16.mxu0 %v1337
  %2737 = vmatpush1.bf16.msra.mxu0 %v1336
  %2738 = vmatprep.subr.bf16.mxu0 %v1345
  %2739 = vmatpush1.bf16.msra.mxu0 %v1344
  %2740 = vmatprep.subr.bf16.mxu0 %v1353
  %2741 = vmatpush1.bf16.msra.mxu0 %v1352
  %2742 = vmatprep.subr.bf16.mxu0 %v1361
  %2743 = vmatpush1.bf16.msra.mxu0 %v1360
  %2744 = vmatprep.subr.bf16.mxu0 %v1369
  %2745 = vmatpush1.bf16.msra.mxu0 %v1368
  %2746 = vmatprep.subr.bf16.mxu0 %v1377
  %2747 = vmatpush1.bf16.msra.mxu0 %v1376
  %2748 = vmatprep.subr.bf16.mxu0 %v1385
  %2749 = vmatpush1.bf16.msra.mxu0 %v1384
  %2750 = vmatprep.subr.bf16.mxu0 %v1393
  %2751 = vmatpush1.bf16.msra.mxu0 %v1392
  %2752 = vmatprep.subr.bf16.mxu0 %v1401
  %2753 = vmatpush1.bf16.msra.mxu0 %v1400
  %2754 = vmatprep.subr.bf16.mxu0 %v1409
  %2755 = vmatpush1.bf16.msra.mxu0 %v1408
  %2756 = vmatprep.subr.bf16.mxu0 %v1417
  %2757 = vmatpush1.bf16.msra.mxu0 %v1416
  %2758 = vmatprep.subr.bf16.mxu0 %v1425
  %2759 = vmatpush1.bf16.msra.mxu0 %v1424
  %2760 = vmatprep.subr.bf16.mxu0 %v1433
  %2761 = vmatpush1.bf16.msra.mxu0 %v1432
  %2762 = vmatprep.subr.bf16.mxu0 %v1441
  %2763 = vmatpush1.bf16.msra.mxu0 %v1440
  %2764 = vmatprep.subr.bf16.mxu0 %v1449
  %2765 = vmatpush1.bf16.msra.mxu0 %v1448
  %2766 = vmatprep.mubr.bf16.mxu0 %v2733
  %2767 = vmatmul.mubr.bf16.gmra.mrb[0].mxu0 %v2732
  %v2768 = vpop.f32.mrb[0].mxu0
  %v2769 = vadd.f32 0.0, %v2768
  %v2770 = vpop.f32.mrb[0].mxu0
  %v2771 = vadd.f32 0.0, %v2770
  %v2772 = vpop.f32.mrb[0].mxu0
  %v2773 = vpop.f32.mrb[0].mxu0
  %2774 = vdwg.mxu0
  %2775 = vmatprep.subr.bf16.mxu0 %v1331
  %2776 = vmatpush1.bf16.msra.mxu0 %v1330
  %2777 = vmatprep.subr.bf16.mxu0 %v1339
  %2778 = vmatpush1.bf16.msra.mxu0 %v1338
  %2779 = vmatprep.subr.bf16.mxu0 %v1347
  %2780 = vmatpush1.bf16.msra.mxu0 %v1346
  %2781 = vmatprep.subr.bf16.mxu0 %v1355
  %2782 = vmatpush1.bf16.msra.mxu0 %v1354
  %2783 = vmatprep.subr.bf16.mxu0 %v1363
  %2784 = vmatpush1.bf16.msra.mxu0 %v1362
  %2785 = vmatprep.subr.bf16.mxu0 %v1371
  %2786 = vmatpush1.bf16.msra.mxu0 %v1370
  %2787 = vmatprep.subr.bf16.mxu0 %v1379
  %2788 = vmatpush1.bf16.msra.mxu0 %v1378
  %2789 = vmatprep.subr.bf16.mxu0 %v1387
  %2790 = vmatpush1.bf16.msra.mxu0 %v1386
  %2791 = vmatprep.subr.bf16.mxu0 %v1395
  %2792 = vmatpush1.bf16.msra.mxu0 %v1394
  %2793 = vmatprep.subr.bf16.mxu0 %v1403
  %2794 = vmatpush1.bf16.msra.mxu0 %v1402
  %2795 = vmatprep.subr.bf16.mxu0 %v1411
  %2796 = vmatpush1.bf16.msra.mxu0 %v1410
  %2797 = vmatprep.subr.bf16.mxu0 %v1419
  %2798 = vmatpush1.bf16.msra.mxu0 %v1418
  %2799 = vmatprep.subr.bf16.mxu0 %v1427
  %2800 = vmatpush1.bf16.msra.mxu0 %v1426
  %2801 = vmatprep.subr.bf16.mxu0 %v1435
  %2802 = vmatpush1.bf16.msra.mxu0 %v1434
  %2803 = vmatprep.subr.bf16.mxu0 %v1443
  %2804 = vmatpush1.bf16.msra.mxu0 %v1442
  %2805 = vmatprep.subr.bf16.mxu0 %v1451
  %2806 = vmatpush1.bf16.msra.mxu0 %v1450
  %2807 = vmatprep.mubr.bf16.mxu0 %v2733
  %2808 = vmatmul.mubr.bf16.gmra.mrb[0].mxu0 %v2732
  %v2809 = vpop.f32.mrb[0].mxu0
  %v2810 = vadd.f32 0.0, %v2809
  %v2811 = vpop.f32.mrb[0].mxu0
  %v2812 = vadd.f32 0.0, %v2811
  %v2813 = vpop.f32.mrb[0].mxu0
  %v2814 = vpop.f32.mrb[0].mxu0
  %2815 = vdwg.mxu0
  %2816 = vmatprep.subr.bf16.mxu0 %v1333
  %2817 = vmatpush1.bf16.msra.mxu0 %v1332
  %2818 = vmatprep.subr.bf16.mxu0 %v1341
  %2819 = vmatpush1.bf16.msra.mxu0 %v1340
  %2820 = vmatprep.subr.bf16.mxu0 %v1349
  %2821 = vmatpush1.bf16.msra.mxu0 %v1348
  %2822 = vmatprep.subr.bf16.mxu0 %v1357
  %2823 = vmatpush1.bf16.msra.mxu0 %v1356
  %2824 = vmatprep.subr.bf16.mxu0 %v1365
  %2825 = vmatpush1.bf16.msra.mxu0 %v1364
  %2826 = vmatprep.subr.bf16.mxu0 %v1373
  %2827 = vmatpush1.bf16.msra.mxu0 %v1372
  %2828 = vmatprep.subr.bf16.mxu0 %v1381
  %2829 = vmatpush1.bf16.msra.mxu0 %v1380
  %2830 = vmatprep.subr.bf16.mxu0 %v1389
  %2831 = vmatpush1.bf16.msra.mxu0 %v1388
  %2832 = vmatprep.subr.bf16.mxu0 %v1397
  %2833 = vmatpush1.bf16.msra.mxu0 %v1396
  %2834 = vmatprep.subr.bf16.mxu0 %v1405
  %2835 = vmatpush1.bf16.msra.mxu0 %v1404
  %2836 = vmatprep.subr.bf16.mxu0 %v1413
  %2837 = vmatpush1.bf16.msra.mxu0 %v1412
  %2838 = vmatprep.subr.bf16.mxu0 %v1421
  %2839 = vmatpush1.bf16.msra.mxu0 %v1420
  %2840 = vmatprep.subr.bf16.mxu0 %v1429
  %2841 = vmatpush1.bf16.msra.mxu0 %v1428
  %2842 = vmatprep.subr.bf16.mxu0 %v1437
  %2843 = vmatpush1.bf16.msra.mxu0 %v1436
  %2844 = vmatprep.subr.bf16.mxu0 %v1445
  %2845 = vmatpush1.bf16.msra.mxu0 %v1444
  %2846 = vmatprep.subr.bf16.mxu0 %v1453
  %2847 = vmatpush1.bf16.msra.mxu0 %v1452
  %2848 = vmatprep.mubr.bf16.mxu0 %v2733
  %2849 = vmatmul.mubr.bf16.gmra.mrb[0].mxu0 %v2732
  %v2850 = vpop.f32.mrb[0].mxu0
  %v2851 = vadd.f32 0.0, %v2850
  %v2852 = vpop.f32.mrb[0].mxu0
  %v2853 = vadd.f32 0.0, %v2852
  %v2854 = vpop.f32.mrb[0].mxu0
  %v2855 = vpop.f32.mrb[0].mxu0
  %2856 = vdwg.mxu0
  %2857 = vmatprep.subr.bf16.mxu0 %v1335
  %2858 = vmatpush1.bf16.msra.mxu0 %v1334
  %2859 = vmatprep.subr.bf16.mxu0 %v1343
  %2860 = vmatpush1.bf16.msra.mxu0 %v1342
  %2861 = vmatprep.subr.bf16.mxu0 %v1351
  %2862 = vmatpush1.bf16.msra.mxu0 %v1350
  %2863 = vmatprep.subr.bf16.mxu0 %v1359
  %2864 = vmatpush1.bf16.msra.mxu0 %v1358
  %2865 = vmatprep.subr.bf16.mxu0 %v1367
  %2866 = vmatpush1.bf16.msra.mxu0 %v1366
  %2867 = vmatprep.subr.bf16.mxu0 %v1375
  %2868 = vmatpush1.bf16.msra.mxu0 %v1374
  %2869 = vmatprep.subr.bf16.mxu0 %v1383
  %2870 = vmatpush1.bf16.msra.mxu0 %v1382
  %2871 = vmatprep.subr.bf16.mxu0 %v1391
  %2872 = vmatpush1.bf16.msra.mxu0 %v1390
  %2873 = vmatprep.subr.bf16.mxu0 %v1399
  %2874 = vmatpush1.bf16.msra.mxu0 %v1398
  %2875 = vmatprep.subr.bf16.mxu0 %v1407
  %2876 = vmatpush1.bf16.msra.mxu0 %v1406
  %2877 = vmatprep.subr.bf16.mxu0 %v1415
  %2878 = vmatpush1.bf16.msra.mxu0 %v1414
  %2879 = vmatprep.subr.bf16.mxu0 %v1423
  %2880 = vmatpush1.bf16.msra.mxu0 %v1422
  %2881 = vmatprep.subr.bf16.mxu0 %v1431
  %2882 = vmatpush1.bf16.msra.mxu0 %v1430
  %2883 = vmatprep.subr.bf16.mxu0 %v1439
  %2884 = vmatpush1.bf16.msra.mxu0 %v1438
  %2885 = vmatprep.subr.bf16.mxu0 %v1447
  %2886 = vmatpush1.bf16.msra.mxu0 %v1446
  %2887 = vmatprep.subr.bf16.mxu0 %v1455
  %2888 = vmatpush1.bf16.msra.mxu0 %v1454
  %2889 = vmatprep.mubr.bf16.mxu0 %v2733
  %2890 = vmatmul.mubr.bf16.gmra.mrb[0].mxu0 %v2732
  %v2891 = vpop.f32.mrb[0].mxu0
  %v2892 = vadd.f32 0.0, %v2891
  %v2893 = vpop.f32.mrb[0].mxu0
  %v2894 = vadd.f32 0.0, %v2893
  %v2895 = vpop.f32.mrb[0].mxu0
  %v2896 = vpop.f32.mrb[0].mxu0
  %2897 = vdwg.mxu0
  %v2898 = vadd.f32 %v2724, %v2769
  %v2899 = vadd.f32 %v2725, %v2771
  %v2900 = vadd.f32 %v2726, %v2810
  %v2901 = vadd.f32 %v2727, %v2812
  %v2902 = vadd.f32 %v2728, %v2851
  %v2903 = vadd.f32 %v2729, %v2853
  %v2904 = vadd.f32 %v2730, %v2892
  %v2905 = vadd.f32 %v2731, %v2894
  %v2906 = vxor.u32 %v2898, 2147483648
  %v2907 = vxor.u32 %v2899, 2147483648
  %v2908 = vmul.f32 %v2906, 1.442695
  %v2909 = vpow.pop %v2908
  %v2910 = vmul.f32 %v2907, 1.442695
  %v2911 = vpow.pop %v2910
  %v2912 = vadd.f32 %v2909, 1.0
  %v2913 = vadd.f32 %v2911, 1.0
  %v2914 = vrcp.pop %v2912
  %v2915 = vmul.f32 1.0, %v2914
  %v2916 = vrcp.pop %v2913
  %v2917 = vmul.f32 1.0, %v2916
  %v2918 = vxor.u32 %v2900, 2147483648
  %v2919 = vxor.u32 %v2901, 2147483648
  %v2920 = vmul.f32 %v2918, 1.442695
  %v2921 = vpow.pop %v2920
  %v2922 = vmul.f32 %v2919, 1.442695
  %v2923 = vpow.pop %v2922
  %v2924 = vadd.f32 %v2921, 1.0
  %v2925 = vadd.f32 %v2923, 1.0
  %v2926 = vrcp.pop %v2924
  %v2927 = vmul.f32 1.0, %v2926
  %v2928 = vrcp.pop %v2925
  %v2929 = vmul.f32 1.0, %v2928
  %v2930 = vtanh.pop %v2902
  %v2931 = vtanh.pop %v2903
  %v2932 = vxor.u32 %v2904, 2147483648
  %v2933 = vxor.u32 %v2905, 2147483648
  %v2934 = vmul.f32 %v2932, 1.442695
  %v2935 = vpow.pop %v2934
  %v2936 = vmul.f32 %v2933, 1.442695
  %v2937 = vpow.pop %v2936
  %v2938 = vadd.f32 %v2935, 1.0
  %v2939 = vadd.f32 %v2937, 1.0
  %v2940 = vrcp.pop %v2938
  %v2941 = vmul.f32 1.0, %v2940
  %v2942 = vrcp.pop %v2939
  %v2943 = vmul.f32 1.0, %v2942
  %v2944 = vmul.f32 %v2927, %v2718
  %v2945 = vmul.f32 %v2929, %v2719
  %v2946 = vmul.f32 %v2915, %v2930
  %v2947 = vmul.f32 %v2917, %v2931
  %v2948 = vadd.f32 %v2944, %v2946
  %v2949 = vadd.f32 %v2945, %v2947
  %v2950 = vtanh.pop %v2948
  %v2951 = vtanh.pop %v2949
  %v2952 = vmul.f32 %v2941, %v2950
  %v2953 = vmul.f32 %v2943, %v2951
  %v2954 = vld [vmem:[#allocation4 + $0x180] sm:$0xff]
  %v2955 = vld [vmem:[#allocation4 + $0x188] sm:$0xff]
  %v2956 = vld [vmem:[#allocation4 + $0x190] sm:$0xff]
  %v2957 = vld [vmem:[#allocation4 + $0x198] sm:$0xff]
  %v2958 = vld [vmem:[#allocation4 + $0x1a0] sm:$0xff]
  %v2959 = vld [vmem:[#allocation4 + $0x1a8] sm:$0xff]
  %v2960 = vld [vmem:[#allocation4 + $0x1b0] sm:$0xff]
  %v2961 = vld [vmem:[#allocation4 + $0x1b8] sm:$0xff]
  %v2962 = vpack.c.bf16 %v2952, %v2952
  %v2963 = vpack.c.bf16 %v2953, %v2953
  %2964 = vmatprep.subr.bf16.mxu0 %v1329
  %2965 = vmatpush1.bf16.msra.mxu0 %v1328
  %2966 = vmatprep.subr.bf16.mxu0 %v1337
  %2967 = vmatpush1.bf16.msra.mxu0 %v1336
  %2968 = vmatprep.subr.bf16.mxu0 %v1345
  %2969 = vmatpush1.bf16.msra.mxu0 %v1344
  %2970 = vmatprep.subr.bf16.mxu0 %v1353
  %2971 = vmatpush1.bf16.msra.mxu0 %v1352
  %2972 = vmatprep.subr.bf16.mxu0 %v1361
  %2973 = vmatpush1.bf16.msra.mxu0 %v1360
  %2974 = vmatprep.subr.bf16.mxu0 %v1369
  %2975 = vmatpush1.bf16.msra.mxu0 %v1368
  %2976 = vmatprep.subr.bf16.mxu0 %v1377
  %2977 = vmatpush1.bf16.msra.mxu0 %v1376
  %2978 = vmatprep.subr.bf16.mxu0 %v1385
  %2979 = vmatpush1.bf16.msra.mxu0 %v1384
  %2980 = vmatprep.subr.bf16.mxu0 %v1393
  %2981 = vmatpush1.bf16.msra.mxu0 %v1392
  %2982 = vmatprep.subr.bf16.mxu0 %v1401
  %2983 = vmatpush1.bf16.msra.mxu0 %v1400
  %2984 = vmatprep.subr.bf16.mxu0 %v1409
  %2985 = vmatpush1.bf16.msra.mxu0 %v1408
  %2986 = vmatprep.subr.bf16.mxu0 %v1417
  %2987 = vmatpush1.bf16.msra.mxu0 %v1416
  %2988 = vmatprep.subr.bf16.mxu0 %v1425
  %2989 = vmatpush1.bf16.msra.mxu0 %v1424
  %2990 = vmatprep.subr.bf16.mxu0 %v1433
  %2991 = vmatpush1.bf16.msra.mxu0 %v1432
  %2992 = vmatprep.subr.bf16.mxu0 %v1441
  %2993 = vmatpush1.bf16.msra.mxu0 %v1440
  %2994 = vmatprep.subr.bf16.mxu0 %v1449
  %2995 = vmatpush1.bf16.msra.mxu0 %v1448
  %2996 = vmatprep.mubr.bf16.mxu0 %v2963
  %2997 = vmatmul.mubr.bf16.gmra.mrb[0].mxu0 %v2962
  %v2998 = vpop.f32.mrb[0].mxu0
  %v2999 = vadd.f32 0.0, %v2998
  %v3000 = vpop.f32.mrb[0].mxu0
  %v3001 = vadd.f32 0.0, %v3000
  %v3002 = vpop.f32.mrb[0].mxu0
  %v3003 = vpop.f32.mrb[0].mxu0
  %3004 = vdwg.mxu0
  %3005 = vmatprep.subr.bf16.mxu0 %v1331
  %3006 = vmatpush1.bf16.msra.mxu0 %v1330
  %3007 = vmatprep.subr.bf16.mxu0 %v1339
  %3008 = vmatpush1.bf16.msra.mxu0 %v1338
  %3009 = vmatprep.subr.bf16.mxu0 %v1347
  %3010 = vmatpush1.bf16.msra.mxu0 %v1346
  %3011 = vmatprep.subr.bf16.mxu0 %v1355
  %3012 = vmatpush1.bf16.msra.mxu0 %v1354
  %3013 = vmatprep.subr.bf16.mxu0 %v1363
  %3014 = vmatpush1.bf16.msra.mxu0 %v1362
  %3015 = vmatprep.subr.bf16.mxu0 %v1371
  %3016 = vmatpush1.bf16.msra.mxu0 %v1370
  %3017 = vmatprep.subr.bf16.mxu0 %v1379
  %3018 = vmatpush1.bf16.msra.mxu0 %v1378
  %3019 = vmatprep.subr.bf16.mxu0 %v1387
  %3020 = vmatpush1.bf16.msra.mxu0 %v1386
  %3021 = vmatprep.subr.bf16.mxu0 %v1395
  %3022 = vmatpush1.bf16.msra.mxu0 %v1394
  %3023 = vmatprep.subr.bf16.mxu0 %v1403
  %3024 = vmatpush1.bf16.msra.mxu0 %v1402
  %3025 = vmatprep.subr.bf16.mxu0 %v1411
  %3026 = vmatpush1.bf16.msra.mxu0 %v1410
  %3027 = vmatprep.subr.bf16.mxu0 %v1419
  %3028 = vmatpush1.bf16.msra.mxu0 %v1418
  %3029 = vmatprep.subr.bf16.mxu0 %v1427
  %3030 = vmatpush1.bf16.msra.mxu0 %v1426
  %3031 = vmatprep.subr.bf16.mxu0 %v1435
  %3032 = vmatpush1.bf16.msra.mxu0 %v1434
  %3033 = vmatprep.subr.bf16.mxu0 %v1443
  %3034 = vmatpush1.bf16.msra.mxu0 %v1442
  %3035 = vmatprep.subr.bf16.mxu0 %v1451
  %3036 = vmatpush1.bf16.msra.mxu0 %v1450
  %3037 = vmatprep.mubr.bf16.mxu0 %v2963
  %3038 = vmatmul.mubr.bf16.gmra.mrb[0].mxu0 %v2962
  %v3039 = vpop.f32.mrb[0].mxu0
  %v3040 = vadd.f32 0.0, %v3039
  %v3041 = vpop.f32.mrb[0].mxu0
  %v3042 = vadd.f32 0.0, %v3041
  %v3043 = vpop.f32.mrb[0].mxu0
  %v3044 = vpop.f32.mrb[0].mxu0
  %3045 = vdwg.mxu0
  %3046 = vmatprep.subr.bf16.mxu0 %v1333
  %3047 = vmatpush1.bf16.msra.mxu0 %v1332
  %3048 = vmatprep.subr.bf16.mxu0 %v1341
  %3049 = vmatpush1.bf16.msra.mxu0 %v1340
  %3050 = vmatprep.subr.bf16.mxu0 %v1349
  %3051 = vmatpush1.bf16.msra.mxu0 %v1348
  %3052 = vmatprep.subr.bf16.mxu0 %v1357
  %3053 = vmatpush1.bf16.msra.mxu0 %v1356
  %3054 = vmatprep.subr.bf16.mxu0 %v1365
  %3055 = vmatpush1.bf16.msra.mxu0 %v1364
  %3056 = vmatprep.subr.bf16.mxu0 %v1373
  %3057 = vmatpush1.bf16.msra.mxu0 %v1372
  %3058 = vmatprep.subr.bf16.mxu0 %v1381
  %3059 = vmatpush1.bf16.msra.mxu0 %v1380
  %3060 = vmatprep.subr.bf16.mxu0 %v1389
  %3061 = vmatpush1.bf16.msra.mxu0 %v1388
  %3062 = vmatprep.subr.bf16.mxu0 %v1397
  %3063 = vmatpush1.bf16.msra.mxu0 %v1396
  %3064 = vmatprep.subr.bf16.mxu0 %v1405
  %3065 = vmatpush1.bf16.msra.mxu0 %v1404
  %3066 = vmatprep.subr.bf16.mxu0 %v1413
  %3067 = vmatpush1.bf16.msra.mxu0 %v1412
  %3068 = vmatprep.subr.bf16.mxu0 %v1421
  %3069 = vmatpush1.bf16.msra.mxu0 %v1420
  %3070 = vmatprep.subr.bf16.mxu0 %v1429
  %3071 = vmatpush1.bf16.msra.mxu0 %v1428
  %3072 = vmatprep.subr.bf16.mxu0 %v1437
  %3073 = vmatpush1.bf16.msra.mxu0 %v1436
  %3074 = vmatprep.subr.bf16.mxu0 %v1445
  %3075 = vmatpush1.bf16.msra.mxu0 %v1444
  %3076 = vmatprep.subr.bf16.mxu0 %v1453
  %3077 = vmatpush1.bf16.msra.mxu0 %v1452
  %3078 = vmatprep.mubr.bf16.mxu0 %v2963
  %3079 = vmatmul.mubr.bf16.gmra.mrb[0].mxu0 %v2962
  %v3080 = vpop.f32.mrb[0].mxu0
  %v3081 = vadd.f32 0.0, %v3080
  %v3082 = vpop.f32.mrb[0].mxu0
  %v3083 = vadd.f32 0.0, %v3082
  %v3084 = vpop.f32.mrb[0].mxu0
  %v3085 = vpop.f32.mrb[0].mxu0
  %3086 = vdwg.mxu0
  %3087 = vmatprep.subr.bf16.mxu0 %v1335
  %3088 = vmatpush1.bf16.msra.mxu0 %v1334
  %3089 = vmatprep.subr.bf16.mxu0 %v1343
  %3090 = vmatpush1.bf16.msra.mxu0 %v1342
  %3091 = vmatprep.subr.bf16.mxu0 %v1351
  %3092 = vmatpush1.bf16.msra.mxu0 %v1350
  %3093 = vmatprep.subr.bf16.mxu0 %v1359
  %3094 = vmatpush1.bf16.msra.mxu0 %v1358
  %3095 = vmatprep.subr.bf16.mxu0 %v1367
  %3096 = vmatpush1.bf16.msra.mxu0 %v1366
  %3097 = vmatprep.subr.bf16.mxu0 %v1375
  %3098 = vmatpush1.bf16.msra.mxu0 %v1374
  %3099 = vmatprep.subr.bf16.mxu0 %v1383
  %3100 = vmatpush1.bf16.msra.mxu0 %v1382
  %3101 = vmatprep.subr.bf16.mxu0 %v1391
  %3102 = vmatpush1.bf16.msra.mxu0 %v1390
  %3103 = vmatprep.subr.bf16.mxu0 %v1399
  %3104 = vmatpush1.bf16.msra.mxu0 %v1398
  %3105 = vmatprep.subr.bf16.mxu0 %v1407
  %3106 = vmatpush1.bf16.msra.mxu0 %v1406
  %3107 = vmatprep.subr.bf16.mxu0 %v1415
  %3108 = vmatpush1.bf16.msra.mxu0 %v1414
  %3109 = vmatprep.subr.bf16.mxu0 %v1423
  %3110 = vmatpush1.bf16.msra.mxu0 %v1422
  %3111 = vmatprep.subr.bf16.mxu0 %v1431
  %3112 = vmatpush1.bf16.msra.mxu0 %v1430
  %3113 = vmatprep.subr.bf16.mxu0 %v1439
  %3114 = vmatpush1.bf16.msra.mxu0 %v1438
  %3115 = vmatprep.subr.bf16.mxu0 %v1447
  %3116 = vmatpush1.bf16.msra.mxu0 %v1446
  %3117 = vmatprep.subr.bf16.mxu0 %v1455
  %3118 = vmatpush1.bf16.msra.mxu0 %v1454
  %3119 = vmatprep.mubr.bf16.mxu0 %v2963
  %3120 = vmatmul.mubr.bf16.gmra.mrb[0].mxu0 %v2962
  %v3121 = vpop.f32.mrb[0].mxu0
  %v3122 = vadd.f32 0.0, %v3121
  %v3123 = vpop.f32.mrb[0].mxu0
  %v3124 = vadd.f32 0.0, %v3123
  %v3125 = vpop.f32.mrb[0].mxu0
  %v3126 = vpop.f32.mrb[0].mxu0
  %3127 = vdwg.mxu0
  %v3128 = vadd.f32 %v2954, %v2999
  %v3129 = vadd.f32 %v2955, %v3001
  %v3130 = vadd.f32 %v2956, %v3040
  %v3131 = vadd.f32 %v2957, %v3042
  %v3132 = vadd.f32 %v2958, %v3081
  %v3133 = vadd.f32 %v2959, %v3083
  %v3134 = vadd.f32 %v2960, %v3122
  %v3135 = vadd.f32 %v2961, %v3124
  %v3136 = vxor.u32 %v3128, 2147483648
  %v3137 = vxor.u32 %v3129, 2147483648
  %v3138 = vmul.f32 %v3136, 1.442695
  %v3139 = vpow.pop %v3138
  %v3140 = vmul.f32 %v3137, 1.442695
  %v3141 = vpow.pop %v3140
  %v3142 = vadd.f32 %v3139, 1.0
  %v3143 = vadd.f32 %v3141, 1.0
  %v3144 = vrcp.pop %v3142
  %v3145 = vmul.f32 1.0, %v3144
  %v3146 = vrcp.pop %v3143
  %v3147 = vmul.f32 1.0, %v3146
  %v3148 = vxor.u32 %v3130, 2147483648
  %v3149 = vxor.u32 %v3131, 2147483648
  %v3150 = vmul.f32 %v3148, 1.442695
  %v3151 = vpow.pop %v3150
  %v3152 = vmul.f32 %v3149, 1.442695
  %v3153 = vpow.pop %v3152
  %v3154 = vadd.f32 %v3151, 1.0
  %v3155 = vadd.f32 %v3153, 1.0
  %v3156 = vrcp.pop %v3154
  %v3157 = vmul.f32 1.0, %v3156
  %v3158 = vrcp.pop %v3155
  %v3159 = vmul.f32 1.0, %v3158
  %v3160 = vtanh.pop %v3132
  %v3161 = vtanh.pop %v3133
  %v3162 = vxor.u32 %v3134, 2147483648
  %v3163 = vxor.u32 %v3135, 2147483648
  %v3164 = vmul.f32 %v3162, 1.442695
  %v3165 = vpow.pop %v3164
  %v3166 = vmul.f32 %v3163, 1.442695
  %v3167 = vpow.pop %v3166
  %v3168 = vadd.f32 %v3165, 1.0
  %v3169 = vadd.f32 %v3167, 1.0
  %v3170 = vrcp.pop %v3168
  %v3171 = vmul.f32 1.0, %v3170
  %v3172 = vrcp.pop %v3169
  %v3173 = vmul.f32 1.0, %v3172
  %v3174 = vmul.f32 %v3157, %v2948
  %v3175 = vmul.f32 %v3159, %v2949
  %v3176 = vmul.f32 %v3145, %v3160
  %v3177 = vmul.f32 %v3147, %v3161
  %v3178 = vadd.f32 %v3174, %v3176
  %v3179 = vadd.f32 %v3175, %v3177
  %v3180 = vtanh.pop %v3178
  %v3181 = vtanh.pop %v3179
  %v3182 = vmul.f32 %v3171, %v3180
  %v3183 = vmul.f32 %v3173, %v3181
  %v3184 = vld [vmem:[#allocation4 + $0x1c0] sm:$0xff]
  %v3185 = vld [vmem:[#allocation4 + $0x1c8] sm:$0xff]
  %v3186 = vld [vmem:[#allocation4 + $0x1d0] sm:$0xff]
  %v3187 = vld [vmem:[#allocation4 + $0x1d8] sm:$0xff]
  %v3188 = vld [vmem:[#allocation4 + $0x1e0] sm:$0xff]
  %v3189 = vld [vmem:[#allocation4 + $0x1e8] sm:$0xff]
  %v3190 = vld [vmem:[#allocation4 + $0x1f0] sm:$0xff]
  %v3191 = vld [vmem:[#allocation4 + $0x1f8] sm:$0xff]
  %v3192 = vpack.c.bf16 %v3182, %v3182
  %v3193 = vpack.c.bf16 %v3183, %v3183
  %3194 = vmatprep.subr.bf16.mxu0 %v1329
  %3195 = vmatpush1.bf16.msra.mxu0 %v1328
  %3196 = vmatprep.subr.bf16.mxu0 %v1337
  %3197 = vmatpush1.bf16.msra.mxu0 %v1336
  %3198 = vmatprep.subr.bf16.mxu0 %v1345
  %3199 = vmatpush1.bf16.msra.mxu0 %v1344
  %3200 = vmatprep.subr.bf16.mxu0 %v1353
  %3201 = vmatpush1.bf16.msra.mxu0 %v1352
  %3202 = vmatprep.subr.bf16.mxu0 %v1361
  %3203 = vmatpush1.bf16.msra.mxu0 %v1360
  %3204 = vmatprep.subr.bf16.mxu0 %v1369
  %3205 = vmatpush1.bf16.msra.mxu0 %v1368
  %3206 = vmatprep.subr.bf16.mxu0 %v1377
  %3207 = vmatpush1.bf16.msra.mxu0 %v1376
  %3208 = vmatprep.subr.bf16.mxu0 %v1385
  %3209 = vmatpush1.bf16.msra.mxu0 %v1384
  %3210 = vmatprep.subr.bf16.mxu0 %v1393
  %3211 = vmatpush1.bf16.msra.mxu0 %v1392
  %3212 = vmatprep.subr.bf16.mxu0 %v1401
  %3213 = vmatpush1.bf16.msra.mxu0 %v1400
  %3214 = vmatprep.subr.bf16.mxu0 %v1409
  %3215 = vmatpush1.bf16.msra.mxu0 %v1408
  %3216 = vmatprep.subr.bf16.mxu0 %v1417
  %3217 = vmatpush1.bf16.msra.mxu0 %v1416
  %3218 = vmatprep.subr.bf16.mxu0 %v1425
  %3219 = vmatpush1.bf16.msra.mxu0 %v1424
  %3220 = vmatprep.subr.bf16.mxu0 %v1433
  %3221 = vmatpush1.bf16.msra.mxu0 %v1432
  %3222 = vmatprep.subr.bf16.mxu0 %v1441
  %3223 = vmatpush1.bf16.msra.mxu0 %v1440
  %3224 = vmatprep.subr.bf16.mxu0 %v1449
  %3225 = vmatpush1.bf16.msra.mxu0 %v1448
  %3226 = vmatprep.mubr.bf16.mxu0 %v3193
  %3227 = vmatmul.mubr.bf16.gmra.mrb[0].mxu0 %v3192
  %v3228 = vpop.f32.mrb[0].mxu0
  %v3229 = vadd.f32 0.0, %v3228
  %v3230 = vpop.f32.mrb[0].mxu0
  %v3231 = vadd.f32 0.0, %v3230
  %v3232 = vpop.f32.mrb[0].mxu0
  %v3233 = vpop.f32.mrb[0].mxu0
  %3234 = vdwg.mxu0
  %3235 = vmatprep.subr.bf16.mxu0 %v1331
  %3236 = vmatpush1.bf16.msra.mxu0 %v1330
  %3237 = vmatprep.subr.bf16.mxu0 %v1339
  %3238 = vmatpush1.bf16.msra.mxu0 %v1338
  %3239 = vmatprep.subr.bf16.mxu0 %v1347
  %3240 = vmatpush1.bf16.msra.mxu0 %v1346
  %3241 = vmatprep.subr.bf16.mxu0 %v1355
  %3242 = vmatpush1.bf16.msra.mxu0 %v1354
  %3243 = vmatprep.subr.bf16.mxu0 %v1363
  %3244 = vmatpush1.bf16.msra.mxu0 %v1362
  %3245 = vmatprep.subr.bf16.mxu0 %v1371
  %3246 = vmatpush1.bf16.msra.mxu0 %v1370
  %3247 = vmatprep.subr.bf16.mxu0 %v1379
  %3248 = vmatpush1.bf16.msra.mxu0 %v1378
  %3249 = vmatprep.subr.bf16.mxu0 %v1387
  %3250 = vmatpush1.bf16.msra.mxu0 %v1386
  %3251 = vmatprep.subr.bf16.mxu0 %v1395
  %3252 = vmatpush1.bf16.msra.mxu0 %v1394
  %3253 = vmatprep.subr.bf16.mxu0 %v1403
  %3254 = vmatpush1.bf16.msra.mxu0 %v1402
  %3255 = vmatprep.subr.bf16.mxu0 %v1411
  %3256 = vmatpush1.bf16.msra.mxu0 %v1410
  %3257 = vmatprep.subr.bf16.mxu0 %v1419
  %3258 = vmatpush1.bf16.msra.mxu0 %v1418
  %3259 = vmatprep.subr.bf16.mxu0 %v1427
  %3260 = vmatpush1.bf16.msra.mxu0 %v1426
  %3261 = vmatprep.subr.bf16.mxu0 %v1435
  %3262 = vmatpush1.bf16.msra.mxu0 %v1434
  %3263 = vmatprep.subr.bf16.mxu0 %v1443
  %3264 = vmatpush1.bf16.msra.mxu0 %v1442
  %3265 = vmatprep.subr.bf16.mxu0 %v1451
  %3266 = vmatpush1.bf16.msra.mxu0 %v1450
  %3267 = vmatprep.mubr.bf16.mxu0 %v3193
  %3268 = vmatmul.mubr.bf16.gmra.mrb[0].mxu0 %v3192
  %v3269 = vpop.f32.mrb[0].mxu0
  %v3270 = vadd.f32 0.0, %v3269
  %v3271 = vpop.f32.mrb[0].mxu0
  %v3272 = vadd.f32 0.0, %v3271
  %v3273 = vpop.f32.mrb[0].mxu0
  %v3274 = vpop.f32.mrb[0].mxu0
  %3275 = vdwg.mxu0
  %3276 = vmatprep.subr.bf16.mxu0 %v1333
  %3277 = vmatpush1.bf16.msra.mxu0 %v1332
  %3278 = vmatprep.subr.bf16.mxu0 %v1341
  %3279 = vmatpush1.bf16.msra.mxu0 %v1340
  %3280 = vmatprep.subr.bf16.mxu0 %v1349
  %3281 = vmatpush1.bf16.msra.mxu0 %v1348
  %3282 = vmatprep.subr.bf16.mxu0 %v1357
  %3283 = vmatpush1.bf16.msra.mxu0 %v1356
  %3284 = vmatprep.subr.bf16.mxu0 %v1365
  %3285 = vmatpush1.bf16.msra.mxu0 %v1364
  %3286 = vmatprep.subr.bf16.mxu0 %v1373
  %3287 = vmatpush1.bf16.msra.mxu0 %v1372
  %3288 = vmatprep.subr.bf16.mxu0 %v1381
  %3289 = vmatpush1.bf16.msra.mxu0 %v1380
  %3290 = vmatprep.subr.bf16.mxu0 %v1389
  %3291 = vmatpush1.bf16.msra.mxu0 %v1388
  %3292 = vmatprep.subr.bf16.mxu0 %v1397
  %3293 = vmatpush1.bf16.msra.mxu0 %v1396
  %3294 = vmatprep.subr.bf16.mxu0 %v1405
  %3295 = vmatpush1.bf16.msra.mxu0 %v1404
  %3296 = vmatprep.subr.bf16.mxu0 %v1413
  %3297 = vmatpush1.bf16.msra.mxu0 %v1412
  %3298 = vmatprep.subr.bf16.mxu0 %v1421
  %3299 = vmatpush1.bf16.msra.mxu0 %v1420
  %3300 = vmatprep.subr.bf16.mxu0 %v1429
  %3301 = vmatpush1.bf16.msra.mxu0 %v1428
  %3302 = vmatprep.subr.bf16.mxu0 %v1437
  %3303 = vmatpush1.bf16.msra.mxu0 %v1436
  %3304 = vmatprep.subr.bf16.mxu0 %v1445
  %3305 = vmatpush1.bf16.msra.mxu0 %v1444
  %3306 = vmatprep.subr.bf16.mxu0 %v1453
  %3307 = vmatpush1.bf16.msra.mxu0 %v1452
  %3308 = vmatprep.mubr.bf16.mxu0 %v3193
  %3309 = vmatmul.mubr.bf16.gmra.mrb[0].mxu0 %v3192
  %v3310 = vpop.f32.mrb[0].mxu0
  %v3311 = vadd.f32 0.0, %v3310
  %v3312 = vpop.f32.mrb[0].mxu0
  %v3313 = vadd.f32 0.0, %v3312
  %v3314 = vpop.f32.mrb[0].mxu0
  %v3315 = vpop.f32.mrb[0].mxu0
  %3316 = vdwg.mxu0
  %3317 = vmatprep.subr.bf16.mxu0 %v1335
  %3318 = vmatpush1.bf16.msra.mxu0 %v1334
  %3319 = vmatprep.subr.bf16.mxu0 %v1343
  %3320 = vmatpush1.bf16.msra.mxu0 %v1342
  %3321 = vmatprep.subr.bf16.mxu0 %v1351
  %3322 = vmatpush1.bf16.msra.mxu0 %v1350
  %3323 = vmatprep.subr.bf16.mxu0 %v1359
  %3324 = vmatpush1.bf16.msra.mxu0 %v1358
  %3325 = vmatprep.subr.bf16.mxu0 %v1367
  %3326 = vmatpush1.bf16.msra.mxu0 %v1366
  %3327 = vmatprep.subr.bf16.mxu0 %v1375
  %3328 = vmatpush1.bf16.msra.mxu0 %v1374
  %3329 = vmatprep.subr.bf16.mxu0 %v1383
  %3330 = vmatpush1.bf16.msra.mxu0 %v1382
  %3331 = vmatprep.subr.bf16.mxu0 %v1391
  %3332 = vmatpush1.bf16.msra.mxu0 %v1390
  %3333 = vmatprep.subr.bf16.mxu0 %v1399
  %3334 = vmatpush1.bf16.msra.mxu0 %v1398
  %3335 = vmatprep.subr.bf16.mxu0 %v1407
  %3336 = vmatpush1.bf16.msra.mxu0 %v1406
  %3337 = vmatprep.subr.bf16.mxu0 %v1415
  %3338 = vmatpush1.bf16.msra.mxu0 %v1414
  %3339 = vmatprep.subr.bf16.mxu0 %v1423
  %3340 = vmatpush1.bf16.msra.mxu0 %v1422
  %3341 = vmatprep.subr.bf16.mxu0 %v1431
  %3342 = vmatpush1.bf16.msra.mxu0 %v1430
  %3343 = vmatprep.subr.bf16.mxu0 %v1439
  %3344 = vmatpush1.bf16.msra.mxu0 %v1438
  %3345 = vmatprep.subr.bf16.mxu0 %v1447
  %3346 = vmatpush1.bf16.msra.mxu0 %v1446
  %3347 = vmatprep.subr.bf16.mxu0 %v1455
  %3348 = vmatpush1.bf16.msra.mxu0 %v1454
  %3349 = vmatprep.mubr.bf16.mxu0 %v3193
  %3350 = vmatmul.mubr.bf16.gmra.mrb[0].mxu0 %v3192
  %v3351 = vpop.f32.mrb[0].mxu0
  %v3352 = vadd.f32 0.0, %v3351
  %v3353 = vpop.f32.mrb[0].mxu0
  %v3354 = vadd.f32 0.0, %v3353
  %v3355 = vpop.f32.mrb[0].mxu0
  %v3356 = vpop.f32.mrb[0].mxu0
  %3357 = vdwg.mxu0
  %v3358 = vadd.f32 %v3184, %v3229
  %v3359 = vadd.f32 %v3185, %v3231
  %v3360 = vadd.f32 %v3186, %v3270
  %v3361 = vadd.f32 %v3187, %v3272
  %v3362 = vadd.f32 %v3188, %v3311
  %v3363 = vadd.f32 %v3189, %v3313
  %v3364 = vadd.f32 %v3190, %v3352
  %v3365 = vadd.f32 %v3191, %v3354
  %v3366 = vxor.u32 %v3358, 2147483648
  %v3367 = vxor.u32 %v3359, 2147483648
  %v3368 = vmul.f32 %v3366, 1.442695
  %v3369 = vpow.pop %v3368
  %v3370 = vmul.f32 %v3367, 1.442695
  %v3371 = vpow.pop %v3370
  %v3372 = vadd.f32 %v3369, 1.0
  %v3373 = vadd.f32 %v3371, 1.0
  %v3374 = vrcp.pop %v3372
  %v3375 = vmul.f32 1.0, %v3374
  %v3376 = vrcp.pop %v3373
  %v3377 = vmul.f32 1.0, %v3376
  %v3378 = vxor.u32 %v3360, 2147483648
  %v3379 = vxor.u32 %v3361, 2147483648
  %v3380 = vmul.f32 %v3378, 1.442695
  %v3381 = vpow.pop %v3380
  %v3382 = vmul.f32 %v3379, 1.442695
  %v3383 = vpow.pop %v3382
  %v3384 = vadd.f32 %v3381, 1.0
  %v3385 = vadd.f32 %v3383, 1.0
  %v3386 = vrcp.pop %v3384
  %v3387 = vmul.f32 1.0, %v3386
  %v3388 = vrcp.pop %v3385
  %v3389 = vmul.f32 1.0, %v3388
  %v3390 = vtanh.pop %v3362
  %v3391 = vtanh.pop %v3363
  %v3392 = vxor.u32 %v3364, 2147483648
  %v3393 = vxor.u32 %v3365, 2147483648
  %v3394 = vmul.f32 %v3392, 1.442695
  %v3395 = vpow.pop %v3394
  %v3396 = vmul.f32 %v3393, 1.442695
  %v3397 = vpow.pop %v3396
  %v3398 = vadd.f32 %v3395, 1.0
  %v3399 = vadd.f32 %v3397, 1.0
  %v3400 = vrcp.pop %v3398
  %v3401 = vmul.f32 1.0, %v3400
  %v3402 = vrcp.pop %v3399
  %v3403 = vmul.f32 1.0, %v3402
  %v3404 = vmul.f32 %v3387, %v3178
  %v3405 = vmul.f32 %v3389, %v3179
  %v3406 = vmul.f32 %v3375, %v3390
  %v3407 = vmul.f32 %v3377, %v3391
  %v3408 = vadd.f32 %v3404, %v3406
  %v3409 = vadd.f32 %v3405, %v3407
  %v3410 = vtanh.pop %v3408
  %v3411 = vtanh.pop %v3409
  %v3412 = vmul.f32 %v3401, %v3410
  %v3413 = vmul.f32 %v3403, %v3411
  %3414 = vst [vmem:[#allocation2] sm:$0xff] %v3412
  %3415 = vst [vmem:[#allocation2 + $0x8] sm:$0xff] %v3413
  %3416 = vst [vmem:[#allocation3] sm:$0xff] %v3408
  %3417 = vst [vmem:[#allocation3 + $0x8] sm:$0xff] %v3409
  // Predicated region
  $region22: #{text_encoder_forward.1} parent=0 // pred_check
    %p3418 = pneg %p18
  $region23: #{text_encoder_forward.1} parent=0 // pred_check_branch
    %3420 = sbr.rel (%p3418) target = $region25
  $region24: #{text_encoder_forward.1} parent=0 // pred_region
    %3421 = vst [vmem:[%s4] sm:$0xff] %v3412
    %3422 = vst [vmem:[%s4 + $0x8] sm:$0xff] %v3413
  $region25: #{text_encoder_forward.1} parent=0 // pred_fallthru
    _
  // Predicated region
  $region26: #{text_encoder_forward.1} parent=0 // pred_check
    _
  $region27: #{text_encoder_forward.1} parent=0 // pred_check_branch
    %3424 = sbr.rel (0) target = $region29
  $region28: #{text_encoder_forward.1} parent=0 // pred_region
    _
  $region29: #{text_encoder_forward.1} parent=0 // pred_fallthru
    _
  // Predicated region
  $region30: #{text_encoder_forward.1} parent=0 // pred_check
    _
  $region31: #{text_encoder_forward.1} parent=0 // pred_check_branch
    %3426 = sbr.rel (0) target = $region33
  $region32: #{text_encoder_forward.1} parent=0 // pred_region
    _
  $region33: #{text_encoder_forward.1} parent=0 // pred_fallthru
    _

</llo_original>
